<compile_context>
chip_gen: v6e
topology: v6e:2x2x1
jax: 0.10.0
libtpu: 0.0.40
codegen_flags: <defaults>
</compile_context>

<pallas_src>
import functools
import math

import jax
import jax.numpy as jnp
from jax.experimental import pallas as pl
from jax.experimental.pallas import tpu as pltpu

# MXU-native matmul operand dtype on v5e/v6e/v7x. Accumulation is always f32.
COMPUTE_DTYPE = jnp.bfloat16

_LN_EPS = 1e-5
_NEG_INF = -1e9


# ----------------------------------------------------------------------------
# Pallas kernels
# ----------------------------------------------------------------------------

def _fused_mha_ln_kernel(x_ref, kv_ref, wq_ref, bq_ref, wkv_ref, bkv_ref,
                         wo_ref, bo_ref, g_ref, beta_ref, *rest,
                         num_heads, scale, eps, mask_mode, return_weights):
    """Fused attention sub-layer for one batch element.

    Computes  LayerNorm(x + Wo @ MHA(Wq x, Wk kv, Wv kv) + bo)  and
    (optionally) the per-head attention probabilities.
    """
    rest = list(rest)
    mask_ref = rest.pop(0) if mask_mode == "explicit" else None
    y_ref = rest.pop(0)
    w_ref = rest.pop(0) if return_weights else None
    ctx_ref = rest.pop(0)                       # VMEM scratch (Sq, D) f32

    x = x_ref[0]          # (Sq, D)  query source AND residual (f32)
    kv_src = kv_ref[0]    # (Sk, D)
    Sq, D = x.shape
    Sk = kv_src.shape[0]
    dk = D // num_heads
    cd = COMPUTE_DTYPE

    # --- projections (scale folded into q before the QK^T matmul) ----------
    q = jnp.dot(x.astype(cd), wq_ref[...].astype(cd),
                preferred_element_type=jnp.float32) + bq_ref[...]
    q = q * scale
    kv = jnp.dot(kv_src.astype(cd), wkv_ref[...].astype(cd),
                 preferred_element_type=jnp.float32) + bkv_ref[...]
    k = kv[:, :D]
    v = kv[:, D:]

    # --- mask (causal mask generated in-kernel: zero HBM mask traffic) -----
    if mask_mode == "causal":
        row = jax.lax.broadcasted_iota(jnp.int32, (Sq, Sk), 0)
        col = jax.lax.broadcasted_iota(jnp.int32, (Sq, Sk), 1)
        keep = row >= col
    elif mask_mode == "explicit":
        keep = mask_ref[...] != 0               # int8 mask, 1 = attend
    else:
        keep = None

    # --- attention: all heads of this batch element in one grid step -------
    for h in range(num_heads):                  # static unroll, stays in VMEM
        qh = q[:, h * dk:(h + 1) * dk].astype(cd)
        kh = k[:, h * dk:(h + 1) * dk].astype(cd)
        vh = v[:, h * dk:(h + 1) * dk].astype(cd)
        # QK^T without an explicit transpose: contract last dims of q and k.
        s = jax.lax.dot_general(qh, kh, (((1,), (1,)), ((), ())),
                                preferred_element_type=jnp.float32)
        if keep is not None:
            s = jnp.where(keep, s, _NEG_INF)
        s = s - jnp.max(s, axis=-1, keepdims=True)
        p = jnp.exp(s)
        p = p * pl.reciprocal(jnp.sum(p, axis=-1, keepdims=True), approx=True)
        if w_ref is not None:
            w_ref[0, h] = p
        # Write this head's context into its column slice of the scratch
        # accumulator (no list-of-heads + concatenate).
        ctx_ref[:, h * dk:(h + 1) * dk] = jnp.dot(
            p.astype(cd), vh, preferred_element_type=jnp.float32)

    # --- output projection + residual + LayerNorm ---------------------------
    out = jnp.dot(ctx_ref[...].astype(cd), wo_ref[...].astype(cd),
                  preferred_element_type=jnp.float32) + bo_ref[...]
    z = x + out
    mu = jnp.mean(z, axis=-1, keepdims=True)
    var = jnp.mean((z - mu) ** 2, axis=-1, keepdims=True)
    y_ref[0] = ((z - mu) * jax.lax.rsqrt(var + eps)
                * g_ref[...] + beta_ref[...]).astype(y_ref.dtype)


def _fused_ffn_ln_kernel(x_ref, w1_ref, b1_ref, w2_ref, b2_ref, g_ref,
                         beta_ref, y_ref, *, eps):
    """LayerNorm(x + W2 @ relu(W1 @ x + b1) + b2) for one batch element."""
    x = x_ref[0]                                         # (S, D) f32
    cd = COMPUTE_DTYPE
    h = jnp.dot(x.astype(cd), w1_ref[...].astype(cd),
                preferred_element_type=jnp.float32) + b1_ref[...]
    h = jnp.maximum(h, 0.0)
    f = jnp.dot(h.astype(cd), w2_ref[...].astype(cd),
                preferred_element_type=jnp.float32) + b2_ref[...]
    z = x + f
    mu = jnp.mean(z, axis=-1, keepdims=True)
    var = jnp.mean((z - mu) ** 2, axis=-1, keepdims=True)
    y_ref[0] = ((z - mu) * jax.lax.rsqrt(var + eps)
                * g_ref[...] + beta_ref[...]).astype(y_ref.dtype)


def _layernorm_kernel(x_ref, g_ref, b_ref, y_ref, *, eps):
    """Plain LayerNorm (no residual, no zeros operand)."""
    z = x_ref[0]
    mu = jnp.mean(z, axis=-1, keepdims=True)
    var = jnp.mean((z - mu) ** 2, axis=-1, keepdims=True)
    y_ref[0] = ((z - mu) * jax.lax.rsqrt(var + eps)
                * g_ref[...] + b_ref[...]).astype(y_ref.dtype)


# ----------------------------------------------------------------------------
# pallas_call wrappers
# ----------------------------------------------------------------------------

def _const_spec(shape):
    # Weight / bias block: same block for every grid step -> stays resident.
    # TODO(synk): on v7x add pipeline_mode=pl.Buffered(1) to avoid
    # double-buffering constant weight blocks (halves weight VMEM).
    return pl.BlockSpec(shape, lambda b: (0,) * len(shape))


def _vmem_limit(per_step_block_bytes, scratch_bytes=0):
    """Explicit scoped-VMEM limit: double-buffered blocks + scratch + slack."""
    need = 2 * per_step_block_bytes + scratch_bytes + (2 << 20)
    return int(min(max(need, 32 << 20), 64 << 20))


def fused_mha_sublayer(x, kv, p, mask, num_heads, *, eps=_LN_EPS,
                       return_weights=True):
    """One fused attention sub-layer: projections + MHA + Wo + residual + LN."""
    B, Sq, D = x.shape
    Sk = kv.shape[1]
    dk = D // num_heads
    scale = 1.0 / math.sqrt(dk)
    cd = COMPUTE_DTYPE

    if mask is None:
        mask_mode = "none"
    elif isinstance(mask, str):
        assert mask == "causal"
        mask_mode = "causal"
    else:
        mask_mode = "explicit"

    in_specs = [
        pl.BlockSpec((1, Sq, D), lambda b: (b, 0, 0)),   # x (query + residual)
        pl.BlockSpec((1, Sk, D), lambda b: (b, 0, 0)),   # k/v source
        _const_spec((D, D)),        # wq       (bf16)
        _const_spec((1, D)),        # bq       (f32)
        _const_spec((D, 2 * D)),    # wkv      (bf16, wk | wv concatenated)
        _const_spec((1, 2 * D)),    # bkv      (f32)
        _const_spec((D, D)),        # wo       (bf16)
        _const_spec((1, D)),        # bo       (f32)
        _const_spec((1, D)),        # ln gamma (f32)
        _const_spec((1, D)),        # ln beta  (f32)
    ]
    args = [x, kv,
            jnp.asarray(p["wq"], cd), p["bq"].reshape(1, D),
            jnp.asarray(p["wkv"], cd), p["bkv"].reshape(1, 2 * D),
            jnp.asarray(p["wo"], cd), p["bo"].reshape(1, D),
            p["ln_g"].reshape(1, D), p["ln_b"].reshape(1, D)]
    if mask_mode == "explicit":
        in_specs.append(_const_spec((Sq, Sk)))
        args.append(jnp.asarray(mask, jnp.int8))         # 1 = attend

    if return_weights:
        out_shape = (jax.ShapeDtypeStruct((B, Sq, D), jnp.float32),
                     jax.ShapeDtypeStruct((B, num_heads, Sq, Sk), jnp.float32))
        out_specs = (pl.BlockSpec((1, Sq, D), lambda b: (b, 0, 0)),
                     pl.BlockSpec((1, num_heads, Sq, Sk),
                                  lambda b: (b, 0, 0, 0)))
    else:
        out_shape = jax.ShapeDtypeStruct((B, Sq, D), jnp.float32)
        out_specs = pl.BlockSpec((1, Sq, D), lambda b: (b, 0, 0))

    # --- VMEM budget + cost estimate ----------------------------------------
    const_bytes = sum(int(a.size) * a.dtype.itemsize for a in args[2:])
    x_blk = Sq * D * 4
    kv_blk = Sk * D * 4
    out_blk = Sq * D * 4 + (num_heads * Sq * Sk * 4 if return_weights else 0)
    scratch_bytes = Sq * D * 4
    vmem_limit = _vmem_limit(x_blk + kv_blk + const_bytes + out_blk,
                             scratch_bytes)
    flops = 2 * B * (Sq * D * D            # q projection
                     + Sk * D * (2 * D)    # fused k/v projection
                     + 2 * Sq * Sk * D     # QK^T + PV over all heads
                     + Sq * D * D)         # output projection
    cost = pl.CostEstimate(
        flops=int(flops),
        transcendentals=int(B * num_heads * Sq * Sk),
        bytes_accessed=int(B * (x_blk + kv_blk + out_blk) + const_bytes))

    kernel = functools.partial(
        _fused_mha_ln_kernel, num_heads=num_heads, scale=scale, eps=eps,
        mask_mode=mask_mode, return_weights=return_weights)

    result = pl.pallas_call(
        kernel,
        grid=(B,),
        in_specs=in_specs,
        out_specs=out_specs,
        out_shape=out_shape,
        scratch_shapes=[pltpu.VMEM((Sq, D), jnp.float32)],   # ctx accumulator
        compiler_params=pltpu.CompilerParams(
            dimension_semantics=("parallel",),
            vmem_limit_bytes=vmem_limit),
        cost_estimate=cost,
    )(*args)

    if return_weights:
        y, w = result
        return y, w
    return result, None


def fused_ffn_sublayer(x, p, *, eps=_LN_EPS):
    """Fused position-wise FFN + residual + LayerNorm."""
    B, S, D = x.shape
    d_ff = p["w1"].shape[1]
    cd = COMPUTE_DTYPE

    args = [x, jnp.asarray(p["w1"], cd), p["b1"].reshape(1, d_ff),
            jnp.asarray(p["w2"], cd), p["b2"].reshape(1, D),
            p["ln_g"].reshape(1, D), p["ln_b"].reshape(1, D)]

    const_bytes = sum(int(a.size) * a.dtype.itemsize for a in args[1:])
    x_blk = S * D * 4
    out_blk = S * D * 4
    vmem_limit = _vmem_limit(x_blk + const_bytes + out_blk)
    cost = pl.CostEstimate(
        flops=int(4 * B * S * D * d_ff),
        transcendentals=0,
        bytes_accessed=int(B * (x_blk + out_blk) + const_bytes))

    return pl.pallas_call(
        functools.partial(_fused_ffn_ln_kernel, eps=eps),
        grid=(B,),
        in_specs=[
            pl.BlockSpec((1, S, D), lambda b: (b, 0, 0)),
            _const_spec((D, d_ff)),     # w1 (bf16)
            _const_spec((1, d_ff)),     # b1
            _const_spec((d_ff, D)),     # w2 (bf16)
            _const_spec((1, D)),        # b2
            _const_spec((1, D)),        # ln gamma
            _const_spec((1, D)),        # ln beta
        ],
        out_specs=pl.BlockSpec((1, S, D), lambda b: (b, 0, 0)),
        out_shape=jax.ShapeDtypeStruct((B, S, D), jnp.float32),
        compiler_params=pltpu.CompilerParams(
            dimension_semantics=("parallel",),
            vmem_limit_bytes=vmem_limit),
        cost_estimate=cost,
    )(*args)


def layernorm(x, gamma, beta, *, eps=_LN_EPS):
    """Final LayerNorm (no residual / no zeros operand)."""
    B, S, D = x.shape
    x_blk = S * D * 4
    vmem_limit = _vmem_limit(2 * x_blk + 2 * D * 4)
    cost = pl.CostEstimate(flops=int(8 * B * S * D), transcendentals=int(B * S),
                           bytes_accessed=int(2 * B * x_blk + 2 * D * 4))
    return pl.pallas_call(
        functools.partial(_layernorm_kernel, eps=eps),
        grid=(B,),
        in_specs=[
            pl.BlockSpec((1, S, D), lambda b: (b, 0, 0)),
            _const_spec((1, D)),
            _const_spec((1, D)),
        ],
        out_specs=pl.BlockSpec((1, S, D), lambda b: (b, 0, 0)),
        out_shape=jax.ShapeDtypeStruct((B, S, D), jnp.float32),
        compiler_params=pltpu.CompilerParams(
            dimension_semantics=("parallel",),
            vmem_limit_bytes=vmem_limit),
        cost_estimate=cost,
    )(x, gamma.reshape(1, D), beta.reshape(1, D))


# ----------------------------------------------------------------------------
# Model (plain-JAX glue around the fused Pallas kernels)
# ----------------------------------------------------------------------------

def decoder_layer(lp, x, enc_out, src_mask, tgt_mask, num_heads,
                  return_weights=True):
    # masked multi-head self-attention + add&norm (dropout = identity)
    x, sa_w = fused_mha_sublayer(x, x, lp["self_attn"], tgt_mask, num_heads,
                                 return_weights=return_weights)
    # encoder-decoder attention + add&norm
    x, ed_w = fused_mha_sublayer(x, enc_out, lp["cross_attn"], src_mask,
                                 num_heads, return_weights=return_weights)
    # position-wise feed-forward + add&norm
    x = fused_ffn_sublayer(x, lp["ffn"])
    return x, (sa_w, ed_w)


def transformer_decoder(params, x, enc_out, src_mask, tgt_mask, num_heads,
                        return_weights=True):
    self_ws, cross_ws = [], []
    for lp in params["layers"]:
        x, (sw, cw) = decoder_layer(lp, x, enc_out, src_mask, tgt_mask,
                                    num_heads, return_weights=return_weights)
        self_ws.append(sw)
        cross_ws.append(cw)
    x = layernorm(x, params["ln_g"], params["ln_b"])
    return x, (self_ws, cross_ws)


# ----------------------------------------------------------------------------
# Deterministic parameter construction
# ----------------------------------------------------------------------------

def init_params(key, d_model, num_layers, d_ff):
    def dense(k, fan_in, fan_out):
        kw, kb = jax.random.split(k)
        lim = 1.0 / math.sqrt(fan_in)
        w = jax.random.uniform(kw, (fan_in, fan_out), jnp.float32, -lim, lim)
        b = jax.random.uniform(kb, (fan_out,), jnp.float32, -lim, lim)
        # Matmul weights live in the MXU compute dtype; biases stay f32
        # (added post f32 accumulation).
        return w.astype(COMPUTE_DTYPE), b

    def mha_params(k):
        ks = jax.random.split(k, 4)
        wq, bq = dense(ks[0], d_model, d_model)
        wk, bk = dense(ks[1], d_model, d_model)
        wv, bv = dense(ks[2], d_model, d_model)
        wo, bo = dense(ks[3], d_model, d_model)
        return dict(
            wq=wq, bq=bq,
            wkv=jnp.concatenate([wk, wv], axis=1),   # (D, 2D) fused K|V weight
            bkv=jnp.concatenate([bk, bv], axis=0),   # (2D,)
            wo=wo, bo=bo,
            ln_g=jnp.ones((d_model,), jnp.float32),
            ln_b=jnp.zeros((d_model,), jnp.float32),
        )

    layers = []
    for i in range(num_layers):
        k = jax.random.fold_in(key, i)
        ks = jax.random.split(k, 4)
        w1, b1 = dense(ks[2], d_model, d_ff)
        w2, b2 = dense(ks[3], d_ff, d_model)
        layers.append(dict(
            self_attn=mha_params(ks[0]),
            cross_attn=mha_params(ks[1]),
            ffn=dict(w1=w1, b1=b1, w2=w2, b2=b2,
                     ln_g=jnp.ones((d_model,), jnp.float32),
                     ln_b=jnp.zeros((d_model,), jnp.float32)),
        ))
    return dict(
        layers=layers,
        ln_g=jnp.ones((d_model,), jnp.float32),
        ln_b=jnp.zeros((d_model,), jnp.float32),
    )


# ----------------------------------------------------------------------------
# Demo
# ----------------------------------------------------------------------------

if __name__ == "__main__":
    d_model, num_layers, num_heads, d_ff = 32, 2, 4, 64
    B, S_dec, S_enc = 2, 8, 8

    root = jax.random.PRNGKey(0)
    kx, ke, kp = jax.random.split(root, 3)

    x = jax.random.normal(kx, (B, S_dec, d_model), jnp.float32)
    enc_out = jax.random.normal(ke, (B, S_enc, d_model), jnp.float32)
    params = init_params(kp, d_model, num_layers, d_ff)

    # tgt_mask: causal (generated in-kernel, no HBM mask tensor);
    # src_mask: None -> no masking (equivalent to an all-ones mask).
    @jax.jit
    def fwd(params, x, enc_out):
        return transformer_decoder(params, x, enc_out,
                                   src_mask=None, tgt_mask="causal",
                                   num_heads=num_heads)

    out, (self_ws, cross_ws) = fwd(params, x, enc_out)
    jax.block_until_ready(out)
    jax.block_until_ready(self_ws)
    jax.block_until_ready(cross_ws)

    assert out.shape == (B, S_dec, d_model)
    assert len(self_ws) == num_layers
    assert self_ws[0].shape == (B, num_heads, S_dec, S_dec)
    assert len(cross_ws) == num_layers
    assert cross_ws[0].shape == (B, num_heads, S_dec, S_enc)
    assert bool(jnp.all(jnp.isfinite(out)))
    print("KERNEL_OK")
</pallas_src>

<mosaic_0001>
module attributes {stable_mosaic.version = 11 : i64} {
  func.func @_fused_ffn_ln_kernel(%arg0: i32, %arg1: memref<1x8x32xf32, #tpu.memory_space<vmem>>, %arg2: memref<32x64xbf16, #tpu.memory_space<vmem>>, %arg3: memref<1x64xf32, #tpu.memory_space<vmem>>, %arg4: memref<64x32xbf16, #tpu.memory_space<vmem>>, %arg5: memref<1x32xf32, #tpu.memory_space<vmem>>, %arg6: memref<1x32xf32, #tpu.memory_space<vmem>>, %arg7: memref<1x32xf32, #tpu.memory_space<vmem>>, %arg8: memref<1x8x32xf32, #tpu.memory_space<vmem>>) attributes {dimension_semantics = [#tpu.dimension_semantics<parallel>], iteration_bounds = array<i64: 2>, scalar_prefetch = 0 : i64, scratch_operands = 0 : i64, tpu.core_type = #tpu.core_type<tc>, window_params = [{transform_indices = @transform_0, window_bounds = array<i64: 1, 8, 32>}, {pipeline_mode = #tpu.pipeline_mode<synchronous>, transform_indices = @transform_1, window_bounds = array<i64: 32, 64>}, {pipeline_mode = #tpu.pipeline_mode<synchronous>, transform_indices = @transform_2, window_bounds = array<i64: 1, 64>}, {pipeline_mode = #tpu.pipeline_mode<synchronous>, transform_indices = @transform_3, window_bounds = array<i64: 64, 32>}, {pipeline_mode = #tpu.pipeline_mode<synchronous>, transform_indices = @transform_4, window_bounds = array<i64: 1, 32>}, {pipeline_mode = #tpu.pipeline_mode<synchronous>, transform_indices = @transform_5, window_bounds = array<i64: 1, 32>}, {pipeline_mode = #tpu.pipeline_mode<synchronous>, transform_indices = @transform_6, window_bounds = array<i64: 1, 32>}, {transform_indices = @transform_7, window_bounds = array<i64: 1, 8, 32>}]} {
    %c0 = arith.constant 0 : index
    %c0_0 = arith.constant 0 : index
    %c0_1 = arith.constant 0 : index
    %0 = vector.load %arg1[%c0, %c0_0, %c0_1] : memref<1x8x32xf32, #tpu.memory_space<vmem>>, vector<1x8x32xf32>
    %1 = vector.shape_cast %0 : vector<1x8x32xf32> to vector<8x32xf32>
    %2 = arith.truncf %1 : vector<8x32xf32> to vector<8x32xbf16>
    %c0_2 = arith.constant 0 : index
    %c0_3 = arith.constant 0 : index
    %3 = vector.load %arg2[%c0_2, %c0_3] : memref<32x64xbf16, #tpu.memory_space<vmem>>, vector<32x64xbf16>
    %cst = arith.constant dense<0.000000e+00> : vector<8x64xf32>
    %4 = tpu.matmul %2, %3, %cst {dimension_numbers = #tpu.dot_dimension_numbers<[1], [0], [0], [1], [0, 0, 1, 1], [], []>} : vector<8x32xbf16>, vector<32x64xbf16>, vector<8x64xf32> -> vector<8x64xf32>
    %c0_4 = arith.constant 0 : index
    %c0_5 = arith.constant 0 : index
    %5 = vector.load %arg3[%c0_4, %c0_5] : memref<1x64xf32, #tpu.memory_space<vmem>>, vector<1x64xf32>
    %6 = vector.broadcast %5 : vector<1x64xf32> to vector<8x64xf32>
    %7 = arith.addf %4, %6 : vector<8x64xf32>
    %cst_6 = arith.constant 0.000000e+00 : f32
    %8 = vector.broadcast %cst_6 : f32 to vector<8x64xf32>
    %9 = arith.maximumf %7, %8 : vector<8x64xf32>
    %10 = arith.truncf %9 : vector<8x64xf32> to vector<8x64xbf16>
    %c0_7 = arith.constant 0 : index
    %c0_8 = arith.constant 0 : index
    %11 = vector.load %arg4[%c0_7, %c0_8] : memref<64x32xbf16, #tpu.memory_space<vmem>>, vector<64x32xbf16>
    %cst_9 = arith.constant dense<0.000000e+00> : vector<8x32xf32>
    %12 = tpu.matmul %10, %11, %cst_9 {dimension_numbers = #tpu.dot_dimension_numbers<[1], [0], [0], [1], [0, 0, 1, 1], [], []>} : vector<8x64xbf16>, vector<64x32xbf16>, vector<8x32xf32> -> vector<8x32xf32>
    %c0_10 = arith.constant 0 : index
    %c0_11 = arith.constant 0 : index
    %13 = vector.load %arg5[%c0_10, %c0_11] : memref<1x32xf32, #tpu.memory_space<vmem>>, vector<1x32xf32>
    %14 = vector.broadcast %13 : vector<1x32xf32> to vector<8x32xf32>
    %15 = arith.addf %12, %14 : vector<8x32xf32>
    %16 = arith.addf %1, %15 : vector<8x32xf32>
    %cst_12 = arith.constant dense<0.000000e+00> : vector<8xf32>
    %17 = vector.multi_reduction <add>, %16, %cst_12 [1] : vector<8x32xf32> to vector<8xf32>
    %18 = vector.shape_cast %17 : vector<8xf32> to vector<8x1xf32>
    %cst_13 = arith.constant 3.200000e+01 : f32
    %19 = vector.broadcast %cst_13 : f32 to vector<8x1xf32>
    %20 = arith.divf %18, %19 : vector<8x1xf32>
    %21 = vector.broadcast %20 : vector<8x1xf32> to vector<8x32xf32>
    %22 = arith.subf %16, %21 : vector<8x32xf32>
    %23 = arith.mulf %22, %22 : vector<8x32xf32>
    %cst_14 = arith.constant dense<0.000000e+00> : vector<8xf32>
    %24 = vector.multi_reduction <add>, %23, %cst_14 [1] : vector<8x32xf32> to vector<8xf32>
    %25 = vector.shape_cast %24 : vector<8xf32> to vector<8x1xf32>
    %cst_15 = arith.constant 3.200000e+01 : f32
    %26 = vector.broadcast %cst_15 : f32 to vector<8x1xf32>
    %27 = arith.divf %25, %26 : vector<8x1xf32>
    %28 = vector.broadcast %20 : vector<8x1xf32> to vector<8x32xf32>
    %29 = arith.subf %16, %28 : vector<8x32xf32>
    %cst_16 = arith.constant 9.99999974E-6 : f32
    %30 = vector.broadcast %cst_16 : f32 to vector<8x1xf32>
    %31 = arith.addf %27, %30 : vector<8x1xf32>
    %32 = math.rsqrt %31 : vector<8x1xf32>
    %33 = vector.broadcast %32 : vector<8x1xf32> to vector<8x32xf32>
    %34 = arith.mulf %29, %33 : vector<8x32xf32>
    %c0_17 = arith.constant 0 : index
    %c0_18 = arith.constant 0 : index
    %35 = vector.load %arg6[%c0_17, %c0_18] : memref<1x32xf32, #tpu.memory_space<vmem>>, vector<1x32xf32>
    %36 = vector.broadcast %35 : vector<1x32xf32> to vector<8x32xf32>
    %37 = arith.mulf %34, %36 : vector<8x32xf32>
    %c0_19 = arith.constant 0 : index
    %c0_20 = arith.constant 0 : index
    %38 = vector.load %arg7[%c0_19, %c0_20] : memref<1x32xf32, #tpu.memory_space<vmem>>, vector<1x32xf32>
    %39 = vector.broadcast %38 : vector<1x32xf32> to vector<8x32xf32>
    %40 = arith.addf %37, %39 : vector<8x32xf32>
    %c0_21 = arith.constant 0 : index
    %c0_22 = arith.constant 0 : index
    %c0_23 = arith.constant 0 : index
    %41 = vector.load %arg8[%c0_21, %c0_22, %c0_23] : memref<1x8x32xf32, #tpu.memory_space<vmem>>, vector<1x8x32xf32>
    %42 = vector.shape_cast %41 : vector<1x8x32xf32> to vector<8x32xf32>
    %43 = vector.shape_cast %40 : vector<8x32xf32> to vector<1x8x32xf32>
    tpu.vector_store %arg8[%c0_21, %c0_22, %c0_23], %43 {strides = array<i32>} : memref<1x8x32xf32, #tpu.memory_space<vmem>>, vector<1x8x32xf32>,
    return
  }
  func.func @transform_0(%arg0: i32) -> (i32, i32, i32) {
    %c0_i32 = arith.constant 0 : i32
    %c0_i32_0 = arith.constant 0 : i32
    %c0_i32_1 = arith.constant 0 : i32
    return %arg0, %c0_i32, %c0_i32_0 : i32, i32, i32
  }
  func.func @transform_1(%arg0: i32) -> (i32, i32) {
    %c0_i32 = arith.constant 0 : i32
    %c0_i32_0 = arith.constant 0 : i32
    %c0_i32_1 = arith.constant 0 : i32
    return %c0_i32, %c0_i32_0 : i32, i32
  }
  func.func @transform_2(%arg0: i32) -> (i32, i32) {
    %c0_i32 = arith.constant 0 : i32
    %c0_i32_0 = arith.constant 0 : i32
    %c0_i32_1 = arith.constant 0 : i32
    return %c0_i32, %c0_i32_0 : i32, i32
  }
  func.func @transform_3(%arg0: i32) -> (i32, i32) {
    %c0_i32 = arith.constant 0 : i32
    %c0_i32_0 = arith.constant 0 : i32
    %c0_i32_1 = arith.constant 0 : i32
    return %c0_i32, %c0_i32_0 : i32, i32
  }
  func.func @transform_4(%arg0: i32) -> (i32, i32) {
    %c0_i32 = arith.constant 0 : i32
    %c0_i32_0 = arith.constant 0 : i32
    %c0_i32_1 = arith.constant 0 : i32
    return %c0_i32, %c0_i32_0 : i32, i32
  }
  func.func @transform_5(%arg0: i32) -> (i32, i32) {
    %c0_i32 = arith.constant 0 : i32
    %c0_i32_0 = arith.constant 0 : i32
    %c0_i32_1 = arith.constant 0 : i32
    return %c0_i32, %c0_i32_0 : i32, i32
  }
  func.func @transform_6(%arg0: i32) -> (i32, i32) {
    %c0_i32 = arith.constant 0 : i32
    %c0_i32_0 = arith.constant 0 : i32
    %c0_i32_1 = arith.constant 0 : i32
    return %c0_i32, %c0_i32_0 : i32, i32
  }
  func.func @transform_7(%arg0: i32) -> (i32, i32, i32) {
    %c0_i32 = arith.constant 0 : i32
    %c0_i32_0 = arith.constant 0 : i32
    %c0_i32_1 = arith.constant 0 : i32
    return %arg0, %c0_i32, %c0_i32_0 : i32, i32, i32
  }
}

module attributes {stable_mosaic.version = 11 : i64} {
  func.func @_fused_mha_ln_kernel(%arg0: i32, %arg1: memref<1x8x32xf32, #tpu.memory_space<vmem>>, %arg2: memref<1x8x32xf32, #tpu.memory_space<vmem>>, %arg3: memref<32x32xbf16, #tpu.memory_space<vmem>>, %arg4: memref<1x32xf32, #tpu.memory_space<vmem>>, %arg5: memref<32x64xbf16, #tpu.memory_space<vmem>>, %arg6: memref<1x64xf32, #tpu.memory_space<vmem>>, %arg7: memref<32x32xbf16, #tpu.memory_space<vmem>>, %arg8: memref<1x32xf32, #tpu.memory_space<vmem>>, %arg9: memref<1x32xf32, #tpu.memory_space<vmem>>, %arg10: memref<1x32xf32, #tpu.memory_space<vmem>>, %arg11: memref<1x8x32xf32, #tpu.memory_space<vmem>>, %arg12: memref<1x4x8x8xf32, #tpu.memory_space<vmem>>, %arg13: memref<8x32xf32, #tpu.memory_space<vmem>>) attributes {dimension_semantics = [#tpu.dimension_semantics<parallel>], iteration_bounds = array<i64: 2>, scalar_prefetch = 0 : i64, scratch_operands = 1 : i64, tpu.core_type = #tpu.core_type<tc>, window_params = [{transform_indices = @transform_0, window_bounds = array<i64: 1, 8, 32>}, {transform_indices = @transform_1, window_bounds = array<i64: 1, 8, 32>}, {pipeline_mode = #tpu.pipeline_mode<synchronous>, transform_indices = @transform_2, window_bounds = array<i64: 32, 32>}, {pipeline_mode = #tpu.pipeline_mode<synchronous>, transform_indices = @transform_3, window_bounds = array<i64: 1, 32>}, {pipeline_mode = #tpu.pipeline_mode<synchronous>, transform_indices = @transform_4, window_bounds = array<i64: 32, 64>}, {pipeline_mode = #tpu.pipeline_mode<synchronous>, transform_indices = @transform_5, window_bounds = array<i64: 1, 64>}, {pipeline_mode = #tpu.pipeline_mode<synchronous>, transform_indices = @transform_6, window_bounds = array<i64: 32, 32>}, {pipeline_mode = #tpu.pipeline_mode<synchronous>, transform_indices = @transform_7, window_bounds = array<i64: 1, 32>}, {pipeline_mode = #tpu.pipeline_mode<synchronous>, transform_indices = @transform_8, window_bounds = array<i64: 1, 32>}, {pipeline_mode = #tpu.pipeline_mode<synchronous>, transform_indices = @transform_9, window_bounds = array<i64: 1, 32>}, {transform_indices = @transform_10, window_bounds = array<i64: 1, 8, 32>}, {transform_indices = @transform_11, window_bounds = array<i64: 1, 4, 8, 8>}]} {
    %c0 = arith.constant 0 : index
    %c0_0 = arith.constant 0 : index
    %c0_1 = arith.constant 0 : index
    %0 = vector.load %arg1[%c0, %c0_0, %c0_1] : memref<1x8x32xf32, #tpu.memory_space<vmem>>, vector<1x8x32xf32>
    %1 = vector.shape_cast %0 : vector<1x8x32xf32> to vector<8x32xf32>
    %c0_2 = arith.constant 0 : index
    %c0_3 = arith.constant 0 : index
    %c0_4 = arith.constant 0 : index
    %2 = vector.load %arg2[%c0_2, %c0_3, %c0_4] : memref<1x8x32xf32, #tpu.memory_space<vmem>>, vector<1x8x32xf32>
    %3 = vector.shape_cast %2 : vector<1x8x32xf32> to vector<8x32xf32>
    %4 = arith.truncf %1 : vector<8x32xf32> to vector<8x32xbf16>
    %c0_5 = arith.constant 0 : index
    %c0_6 = arith.constant 0 : index
    %5 = vector.load %arg3[%c0_5, %c0_6] : memref<32x32xbf16, #tpu.memory_space<vmem>>, vector<32x32xbf16>
    %cst = arith.constant dense<0.000000e+00> : vector<8x32xf32>
    %6 = tpu.matmul %4, %5, %cst {dimension_numbers = #tpu.dot_dimension_numbers<[1], [0], [0], [1], [0, 0, 1, 1], [], []>} : vector<8x32xbf16>, vector<32x32xbf16>, vector<8x32xf32> -> vector<8x32xf32>
    %c0_7 = arith.constant 0 : index
    %c0_8 = arith.constant 0 : index
    %7 = vector.load %arg4[%c0_7, %c0_8] : memref<1x32xf32, #tpu.memory_space<vmem>>, vector<1x32xf32>
    %8 = vector.broadcast %7 : vector<1x32xf32> to vector<8x32xf32>
    %9 = arith.addf %6, %8 : vector<8x32xf32>
    %cst_9 = arith.constant 0.353553385 : f32
    %10 = vector.broadcast %cst_9 : f32 to vector<8x32xf32>
    %11 = arith.mulf %9, %10 : vector<8x32xf32>
    %12 = arith.truncf %3 : vector<8x32xf32> to vector<8x32xbf16>
    %c0_10 = arith.constant 0 : index
    %c0_11 = arith.constant 0 : index
    %13 = vector.load %arg5[%c0_10, %c0_11] : memref<32x64xbf16, #tpu.memory_space<vmem>>, vector<32x64xbf16>
    %cst_12 = arith.constant dense<0.000000e+00> : vector<8x64xf32>
    %14 = tpu.matmul %12, %13, %cst_12 {dimension_numbers = #tpu.dot_dimension_numbers<[1], [0], [0], [1], [0, 0, 1, 1], [], []>} : vector<8x32xbf16>, vector<32x64xbf16>, vector<8x64xf32> -> vector<8x64xf32>
    %c0_13 = arith.constant 0 : index
    %c0_14 = arith.constant 0 : index
    %15 = vector.load %arg6[%c0_13, %c0_14] : memref<1x64xf32, #tpu.memory_space<vmem>>, vector<1x64xf32>
    %16 = vector.broadcast %15 : vector<1x64xf32> to vector<8x64xf32>
    %17 = arith.addf %14, %16 : vector<8x64xf32>
    %18 = vector.extract_strided_slice %17 {offsets = [0, 0], sizes = [8, 32], strides = [1, 1]} : vector<8x64xf32> to vector<8x32xf32>
    %19 = vector.extract_strided_slice %17 {offsets = [0, 32], sizes = [8, 32], strides = [1, 1]} : vector<8x64xf32> to vector<8x32xf32>
    %20 = tpu.iota {dimensions = array<i32: 0>} : vector<8x8xi32>
    %21 = tpu.iota {dimensions = array<i32: 1>} : vector<8x8xi32>
    %22 = arith.cmpi sge, %20, %21 : vector<8x8xi32>
    %23 = vector.extract_strided_slice %11 {offsets = [0, 0], sizes = [8, 8], strides = [1, 1]} : vector<8x32xf32> to vector<8x8xf32>
    %24 = arith.truncf %23 : vector<8x8xf32> to vector<8x8xbf16>
    %25 = vector.extract_strided_slice %18 {offsets = [0, 0], sizes = [8, 8], strides = [1, 1]} : vector<8x32xf32> to vector<8x8xf32>
    %26 = arith.truncf %25 : vector<8x8xf32> to vector<8x8xbf16>
    %27 = vector.extract_strided_slice %19 {offsets = [0, 0], sizes = [8, 8], strides = [1, 1]} : vector<8x32xf32> to vector<8x8xf32>
    %28 = arith.truncf %27 : vector<8x8xf32> to vector<8x8xbf16>
    %cst_15 = arith.constant dense<0.000000e+00> : vector<8x8xf32>
    %29 = tpu.matmul %24, %26, %cst_15 {dimension_numbers = #tpu.dot_dimension_numbers<[1], [1], [0], [0], [0, 0, 1, 0], [], []>} : vector<8x8xbf16>, vector<8x8xbf16>, vector<8x8xf32> -> vector<8x8xf32>
    %cst_16 = arith.constant -1.000000e+09 : f32
    %30 = vector.broadcast %cst_16 : f32 to vector<8x8xf32>
    %31 = arith.select %22, %29, %30 : vector<8x8xi1>, vector<8x8xf32>
    %cst_17 = arith.constant dense<0xFF800000> : vector<8xf32>
    %32 = vector.multi_reduction <maximumf>, %31, %cst_17 [1] : vector<8x8xf32> to vector<8xf32>
    %33 = vector.shape_cast %32 : vector<8xf32> to vector<8x1xf32>
    %34 = vector.broadcast %33 : vector<8x1xf32> to vector<8x8xf32>
    %35 = arith.subf %31, %34 : vector<8x8xf32>
    %36 = math.exp %35 : vector<8x8xf32>
    %cst_18 = arith.constant dense<0.000000e+00> : vector<8xf32>
    %37 = vector.multi_reduction <add>, %36, %cst_18 [1] : vector<8x8xf32> to vector<8xf32>
    %38 = vector.shape_cast %37 : vector<8xf32> to vector<8x1xf32>
    %39 = tpu.reciprocal %38 {approx = true} : vector<8x1xf32> -> vector<8x1xf32>
    %40 = vector.broadcast %39 : vector<8x1xf32> to vector<8x8xf32>
    %41 = arith.mulf %36, %40 : vector<8x8xf32>
    %c0_19 = arith.constant 0 : index
    %c0_20 = arith.constant 0 : index
    %c0_21 = arith.constant 0 : index
    %c0_22 = arith.constant 0 : index
    %42 = vector.load %arg12[%c0_19, %c0_20, %c0_21, %c0_22] : memref<1x4x8x8xf32, #tpu.memory_space<vmem>>, vector<1x1x8x8xf32>
    %43 = vector.shape_cast %42 : vector<1x1x8x8xf32> to vector<8x8xf32>
    %44 = vector.shape_cast %41 : vector<8x8xf32> to vector<1x1x8x8xf32>
    tpu.vector_store %arg12[%c0_19, %c0_20, %c0_21, %c0_22], %44 {strides = array<i32>} : memref<1x4x8x8xf32, #tpu.memory_space<vmem>>, vector<1x1x8x8xf32>,
    %45 = arith.truncf %41 : vector<8x8xf32> to vector<8x8xbf16>
    %cst_23 = arith.constant dense<0.000000e+00> : vector<8x8xf32>
    %46 = tpu.matmul %45, %28, %cst_23 {dimension_numbers = #tpu.dot_dimension_numbers<[1], [0], [0], [1], [0, 0, 1, 1], [], []>} : vector<8x8xbf16>, vector<8x8xbf16>, vector<8x8xf32> -> vector<8x8xf32>
    %c0_24 = arith.constant 0 : index
    %c0_25 = arith.constant 0 : index
    %47 = vector.load %arg13[%c0_24, %c0_25] : memref<8x32xf32, #tpu.memory_space<vmem>>, vector<8x8xf32>
    tpu.vector_store %arg13[%c0_24, %c0_25], %46 {strides = array<i32>} : memref<8x32xf32, #tpu.memory_space<vmem>>, vector<8x8xf32>,
    %48 = vector.extract_strided_slice %11 {offsets = [0, 8], sizes = [8, 8], strides = [1, 1]} : vector<8x32xf32> to vector<8x8xf32>
    %49 = arith.truncf %48 : vector<8x8xf32> to vector<8x8xbf16>
    %50 = vector.extract_strided_slice %18 {offsets = [0, 8], sizes = [8, 8], strides = [1, 1]} : vector<8x32xf32> to vector<8x8xf32>
    %51 = arith.truncf %50 : vector<8x8xf32> to vector<8x8xbf16>
    %52 = vector.extract_strided_slice %19 {offsets = [0, 8], sizes = [8, 8], strides = [1, 1]} : vector<8x32xf32> to vector<8x8xf32>
    %53 = arith.truncf %52 : vector<8x8xf32> to vector<8x8xbf16>
    %cst_26 = arith.constant dense<0.000000e+00> : vector<8x8xf32>
    %54 = tpu.matmul %49, %51, %cst_26 {dimension_numbers = #tpu.dot_dimension_numbers<[1], [1], [0], [0], [0, 0, 1, 0], [], []>} : vector<8x8xbf16>, vector<8x8xbf16>, vector<8x8xf32> -> vector<8x8xf32>
    %cst_27 = arith.constant -1.000000e+09 : f32
    %55 = vector.broadcast %cst_27 : f32 to vector<8x8xf32>
    %56 = arith.select %22, %54, %55 : vector<8x8xi1>, vector<8x8xf32>
    %cst_28 = arith.constant dense<0xFF800000> : vector<8xf32>
    %57 = vector.multi_reduction <maximumf>, %56, %cst_28 [1] : vector<8x8xf32> to vector<8xf32>
    %58 = vector.shape_cast %57 : vector<8xf32> to vector<8x1xf32>
    %59 = vector.broadcast %58 : vector<8x1xf32> to vector<8x8xf32>
    %60 = arith.subf %56, %59 : vector<8x8xf32>
    %61 = math.exp %60 : vector<8x8xf32>
    %cst_29 = arith.constant dense<0.000000e+00> : vector<8xf32>
    %62 = vector.multi_reduction <add>, %61, %cst_29 [1] : vector<8x8xf32> to vector<8xf32>
    %63 = vector.shape_cast %62 : vector<8xf32> to vector<8x1xf32>
    %64 = tpu.reciprocal %63 {approx = true} : vector<8x1xf32> -> vector<8x1xf32>
    %65 = vector.broadcast %64 : vector<8x1xf32> to vector<8x8xf32>
    %66 = arith.mulf %61, %65 : vector<8x8xf32>
    %c0_30 = arith.constant 0 : index
    %c1 = arith.constant 1 : index
    %c0_31 = arith.constant 0 : index
    %c0_32 = arith.constant 0 : index
    %67 = vector.load %arg12[%c0_30, %c1, %c0_31, %c0_32] : memref<1x4x8x8xf32, #tpu.memory_space<vmem>>, vector<1x1x8x8xf32>
    %68 = vector.shape_cast %67 : vector<1x1x8x8xf32> to vector<8x8xf32>
    %69 = vector.shape_cast %66 : vector<8x8xf32> to vector<1x1x8x8xf32>
    tpu.vector_store %arg12[%c0_30, %c1, %c0_31, %c0_32], %69 {strides = array<i32>} : memref<1x4x8x8xf32, #tpu.memory_space<vmem>>, vector<1x1x8x8xf32>,
    %70 = arith.truncf %66 : vector<8x8xf32> to vector<8x8xbf16>
    %cst_33 = arith.constant dense<0.000000e+00> : vector<8x8xf32>
    %71 = tpu.matmul %70, %53, %cst_33 {dimension_numbers = #tpu.dot_dimension_numbers<[1], [0], [0], [1], [0, 0, 1, 1], [], []>} : vector<8x8xbf16>, vector<8x8xbf16>, vector<8x8xf32> -> vector<8x8xf32>
    %c0_34 = arith.constant 0 : index
    %c8 = arith.constant 8 : index
    %72 = vector.load %arg13[%c0_34, %c8] : memref<8x32xf32, #tpu.memory_space<vmem>>, vector<8x8xf32>
    tpu.vector_store %arg13[%c0_34, %c8], %71 {strides = array<i32>} : memref<8x32xf32, #tpu.memory_space<vmem>>, vector<8x8xf32>,
    %73 = vector.extract_strided_slice %11 {offsets = [0, 16], sizes = [8, 8], strides = [1, 1]} : vector<8x32xf32> to vector<8x8xf32>
    %74 = arith.truncf %73 : vector<8x8xf32> to vector<8x8xbf16>
    %75 = vector.extract_strided_slice %18 {offsets = [0, 16], sizes = [8, 8], strides = [1, 1]} : vector<8x32xf32> to vector<8x8xf32>
    %76 = arith.truncf %75 : vector<8x8xf32> to vector<8x8xbf16>
    %77 = vector.extract_strided_slice %19 {offsets = [0, 16], sizes = [8, 8], strides = [1, 1]} : vector<8x32xf32> to vector<8x8xf32>
    %78 = arith.truncf %77 : vector<8x8xf32> to vector<8x8xbf16>
    %cst_35 = arith.constant dense<0.000000e+00> : vector<8x8xf32>
    %79 = tpu.matmul %74, %76, %cst_35 {dimension_numbers = #tpu.dot_dimension_numbers<[1], [1], [0], [0], [0, 0, 1, 0], [], []>} : vector<8x8xbf16>, vector<8x8xbf16>, vector<8x8xf32> -> vector<8x8xf32>
    %cst_36 = arith.constant -1.000000e+09 : f32
    %80 = vector.broadcast %cst_36 : f32 to vector<8x8xf32>
    %81 = arith.select %22, %79, %80 : vector<8x8xi1>, vector<8x8xf32>
    %cst_37 = arith.constant dense<0xFF800000> : vector<8xf32>
    %82 = vector.multi_reduction <maximumf>, %81, %cst_37 [1] : vector<8x8xf32> to vector<8xf32>
    %83 = vector.shape_cast %82 : vector<8xf32> to vector<8x1xf32>
    %84 = vector.broadcast %83 : vector<8x1xf32> to vector<8x8xf32>
    %85 = arith.subf %81, %84 : vector<8x8xf32>
    %86 = math.exp %85 : vector<8x8xf32>
    %cst_38 = arith.constant dense<0.000000e+00> : vector<8xf32>
    %87 = vector.multi_reduction <add>, %86, %cst_38 [1] : vector<8x8xf32> to vector<8xf32>
    %88 = vector.shape_cast %87 : vector<8xf32> to vector<8x1xf32>
    %89 = tpu.reciprocal %88 {approx = true} : vector<8x1xf32> -> vector<8x1xf32>
    %90 = vector.broadcast %89 : vector<8x1xf32> to vector<8x8xf32>
    %91 = arith.mulf %86, %90 : vector<8x8xf32>
    %c0_39 = arith.constant 0 : index
    %c2 = arith.constant 2 : index
    %c0_40 = arith.constant 0 : index
    %c0_41 = arith.constant 0 : index
    %92 = vector.load %arg12[%c0_39, %c2, %c0_40, %c0_41] : memref<1x4x8x8xf32, #tpu.memory_space<vmem>>, vector<1x1x8x8xf32>
    %93 = vector.shape_cast %92 : vector<1x1x8x8xf32> to vector<8x8xf32>
    %94 = vector.shape_cast %91 : vector<8x8xf32> to vector<1x1x8x8xf32>
    tpu.vector_store %arg12[%c0_39, %c2, %c0_40, %c0_41], %94 {strides = array<i32>} : memref<1x4x8x8xf32, #tpu.memory_space<vmem>>, vector<1x1x8x8xf32>,
    %95 = arith.truncf %91 : vector<8x8xf32> to vector<8x8xbf16>
    %cst_42 = arith.constant dense<0.000000e+00> : vector<8x8xf32>
    %96 = tpu.matmul %95, %78, %cst_42 {dimension_numbers = #tpu.dot_dimension_numbers<[1], [0], [0], [1], [0, 0, 1, 1], [], []>} : vector<8x8xbf16>, vector<8x8xbf16>, vector<8x8xf32> -> vector<8x8xf32>
    %c0_43 = arith.constant 0 : index
    %c16 = arith.constant 16 : index
    %97 = vector.load %arg13[%c0_43, %c16] : memref<8x32xf32, #tpu.memory_space<vmem>>, vector<8x8xf32>
    tpu.vector_store %arg13[%c0_43, %c16], %96 {strides = array<i32>} : memref<8x32xf32, #tpu.memory_space<vmem>>, vector<8x8xf32>,
    %98 = vector.extract_strided_slice %11 {offsets = [0, 24], sizes = [8, 8], strides = [1, 1]} : vector<8x32xf32> to vector<8x8xf32>
    %99 = arith.truncf %98 : vector<8x8xf32> to vector<8x8xbf16>
    %100 = vector.extract_strided_slice %18 {offsets = [0, 24], sizes = [8, 8], strides = [1, 1]} : vector<8x32xf32> to vector<8x8xf32>
    %101 = arith.truncf %100 : vector<8x8xf32> to vector<8x8xbf16>
    %102 = vector.extract_strided_slice %19 {offsets = [0, 24], sizes = [8, 8], strides = [1, 1]} : vector<8x32xf32> to vector<8x8xf32>
    %103 = arith.truncf %102 : vector<8x8xf32> to vector<8x8xbf16>
    %cst_44 = arith.constant dense<0.000000e+00> : vector<8x8xf32>
    %104 = tpu.matmul %99, %101, %cst_44 {dimension_numbers = #tpu.dot_dimension_numbers<[1], [1], [0], [0], [0, 0, 1, 0], [], []>} : vector<8x8xbf16>, vector<8x8xbf16>, vector<8x8xf32> -> vector<8x8xf32>
    %cst_45 = arith.constant -1.000000e+09 : f32
    %105 = vector.broadcast %cst_45 : f32 to vector<8x8xf32>
    %106 = arith.select %22, %104, %105 : vector<8x8xi1>, vector<8x8xf32>
    %cst_46 = arith.constant dense<0xFF800000> : vector<8xf32>
    %107 = vector.multi_reduction <maximumf>, %106, %cst_46 [1] : vector<8x8xf32> to vector<8xf32>
    %108 = vector.shape_cast %107 : vector<8xf32> to vector<8x1xf32>
    %109 = vector.broadcast %108 : vector<8x1xf32> to vector<8x8xf32>
    %110 = arith.subf %106, %109 : vector<8x8xf32>
    %111 = math.exp %110 : vector<8x8xf32>
    %cst_47 = arith.constant dense<0.000000e+00> : vector<8xf32>
    %112 = vector.multi_reduction <add>, %111, %cst_47 [1] : vector<8x8xf32> to vector<8xf32>
    %113 = vector.shape_cast %112 : vector<8xf32> to vector<8x1xf32>
    %114 = tpu.reciprocal %113 {approx = true} : vector<8x1xf32> -> vector<8x1xf32>
    %115 = vector.broadcast %114 : vector<8x1xf32> to vector<8x8xf32>
    %116 = arith.mulf %111, %115 : vector<8x8xf32>
    %c0_48 = arith.constant 0 : index
    %c3 = arith.constant 3 : index
    %c0_49 = arith.constant 0 : index
    %c0_50 = arith.constant 0 : index
    %117 = vector.load %arg12[%c0_48, %c3, %c0_49, %c0_50] : memref<1x4x8x8xf32, #tpu.memory_space<vmem>>, vector<1x1x8x8xf32>
    %118 = vector.shape_cast %117 : vector<1x1x8x8xf32> to vector<8x8xf32>
    %119 = vector.shape_cast %116 : vector<8x8xf32> to vector<1x1x8x8xf32>
    tpu.vector_store %arg12[%c0_48, %c3, %c0_49, %c0_50], %119 {strides = array<i32>} : memref<1x4x8x8xf32, #tpu.memory_space<vmem>>, vector<1x1x8x8xf32>,
    %120 = arith.truncf %116 : vector<8x8xf32> to vector<8x8xbf16>
    %cst_51 = arith.constant dense<0.000000e+00> : vector<8x8xf32>
    %121 = tpu.matmul %120, %103, %cst_51 {dimension_numbers = #tpu.dot_dimension_numbers<[1], [0], [0], [1], [0, 0, 1, 1], [], []>} : vector<8x8xbf16>, vector<8x8xbf16>, vector<8x8xf32> -> vector<8x8xf32>
    %c0_52 = arith.constant 0 : index
    %c24 = arith.constant 24 : index
    %122 = vector.load %arg13[%c0_52, %c24] : memref<8x32xf32, #tpu.memory_space<vmem>>, vector<8x8xf32>
    tpu.vector_store %arg13[%c0_52, %c24], %121 {strides = array<i32>} : memref<8x32xf32, #tpu.memory_space<vmem>>, vector<8x8xf32>,
    %c0_53 = arith.constant 0 : index
    %c0_54 = arith.constant 0 : index
    %123 = vector.load %arg13[%c0_53, %c0_54] : memref<8x32xf32, #tpu.memory_space<vmem>>, vector<8x32xf32>
    %124 = arith.truncf %123 : vector<8x32xf32> to vector<8x32xbf16>
    %c0_55 = arith.constant 0 : index
    %c0_56 = arith.constant 0 : index
    %125 = vector.load %arg7[%c0_55, %c0_56] : memref<32x32xbf16, #tpu.memory_space<vmem>>, vector<32x32xbf16>
    %cst_57 = arith.constant dense<0.000000e+00> : vector<8x32xf32>
    %126 = tpu.matmul %124, %125, %cst_57 {dimension_numbers = #tpu.dot_dimension_numbers<[1], [0], [0], [1], [0, 0, 1, 1], [], []>} : vector<8x32xbf16>, vector<32x32xbf16>, vector<8x32xf32> -> vector<8x32xf32>
    %c0_58 = arith.constant 0 : index
    %c0_59 = arith.constant 0 : index
    %127 = vector.load %arg8[%c0_58, %c0_59] : memref<1x32xf32, #tpu.memory_space<vmem>>, vector<1x32xf32>
    %128 = vector.broadcast %127 : vector<1x32xf32> to vector<8x32xf32>
    %129 = arith.addf %126, %128 : vector<8x32xf32>
    %130 = arith.addf %1, %129 : vector<8x32xf32>
    %cst_60 = arith.constant dense<0.000000e+00> : vector<8xf32>
    %131 = vector.multi_reduction <add>, %130, %cst_60 [1] : vector<8x32xf32> to vector<8xf32>
    %132 = vector.shape_cast %131 : vector<8xf32> to vector<8x1xf32>
    %cst_61 = arith.constant 3.200000e+01 : f32
    %133 = vector.broadcast %cst_61 : f32 to vector<8x1xf32>
    %134 = arith.divf %132, %133 : vector<8x1xf32>
    %135 = vector.broadcast %134 : vector<8x1xf32> to vector<8x32xf32>
    %136 = arith.subf %130, %135 : vector<8x32xf32>
    %137 = arith.mulf %136, %136 : vector<8x32xf32>
    %cst_62 = arith.constant dense<0.000000e+00> : vector<8xf32>
    %138 = vector.multi_reduction <add>, %137, %cst_62 [1] : vector<8x32xf32> to vector<8xf32>
    %139 = vector.shape_cast %138 : vector<8xf32> to vector<8x1xf32>
    %cst_63 = arith.constant 3.200000e+01 : f32
    %140 = vector.broadcast %cst_63 : f32 to vector<8x1xf32>
    %141 = arith.divf %139, %140 : vector<8x1xf32>
    %142 = vector.broadcast %134 : vector<8x1xf32> to vector<8x32xf32>
    %143 = arith.subf %130, %142 : vector<8x32xf32>
    %cst_64 = arith.constant 9.99999974E-6 : f32
    %144 = vector.broadcast %cst_64 : f32 to vector<8x1xf32>
    %145 = arith.addf %141, %144 : vector<8x1xf32>
    %146 = math.rsqrt %145 : vector<8x1xf32>
    %147 = vector.broadcast %146 : vector<8x1xf32> to vector<8x32xf32>
    %148 = arith.mulf %143, %147 : vector<8x32xf32>
    %c0_65 = arith.constant 0 : index
    %c0_66 = arith.constant 0 : index
    %149 = vector.load %arg9[%c0_65, %c0_66] : memref<1x32xf32, #tpu.memory_space<vmem>>, vector<1x32xf32>
    %150 = vector.broadcast %149 : vector<1x32xf32> to vector<8x32xf32>
    %151 = arith.mulf %148, %150 : vector<8x32xf32>
    %c0_67 = arith.constant 0 : index
    %c0_68 = arith.constant 0 : index
    %152 = vector.load %arg10[%c0_67, %c0_68] : memref<1x32xf32, #tpu.memory_space<vmem>>, vector<1x32xf32>
    %153 = vector.broadcast %152 : vector<1x32xf32> to vector<8x32xf32>
    %154 = arith.addf %151, %153 : vector<8x32xf32>
    %c0_69 = arith.constant 0 : index
    %c0_70 = arith.constant 0 : index
    %c0_71 = arith.constant 0 : index
    %155 = vector.load %arg11[%c0_69, %c0_70, %c0_71] : memref<1x8x32xf32, #tpu.memory_space<vmem>>, vector<1x8x32xf32>
    %156 = vector.shape_cast %155 : vector<1x8x32xf32> to vector<8x32xf32>
    %157 = vector.shape_cast %154 : vector<8x32xf32> to vector<1x8x32xf32>
    tpu.vector_store %arg11[%c0_69, %c0_70, %c0_71], %157 {strides = array<i32>} : memref<1x8x32xf32, #tpu.memory_space<vmem>>, vector<1x8x32xf32>,
    return
  }
  func.func @transform_0(%arg0: i32) -> (i32, i32, i32) {
    %c0_i32 = arith.constant 0 : i32
    %c0_i32_0 = arith.constant 0 : i32
    %c0_i32_1 = arith.constant 0 : i32
    return %arg0, %c0_i32, %c0_i32_0 : i32, i32, i32
  }
  func.func @transform_1(%arg0: i32) -> (i32, i32, i32) {
    %c0_i32 = arith.constant 0 : i32
    %c0_i32_0 = arith.constant 0 : i32
    %c0_i32_1 = arith.constant 0 : i32
    return %arg0, %c0_i32, %c0_i32_0 : i32, i32, i32
  }
  func.func @transform_2(%arg0: i32) -> (i32, i32) {
    %c0_i32 = arith.constant 0 : i32
    %c0_i32_0 = arith.constant 0 : i32
    %c0_i32_1 = arith.constant 0 : i32
    return %c0_i32, %c0_i32_0 : i32, i32
  }
  func.func @transform_3(%arg0: i32) -> (i32, i32) {
    %c0_i32 = arith.constant 0 : i32
    %c0_i32_0 = arith.constant 0 : i32
    %c0_i32_1 = arith.constant 0 : i32
    return %c0_i32, %c0_i32_0 : i32, i32
  }
  func.func @transform_4(%arg0: i32) -> (i32, i32) {
    %c0_i32 = arith.constant 0 : i32
    %c0_i32_0 = arith.constant 0 : i32
    %c0_i32_1 = arith.constant 0 : i32
    return %c0_i32, %c0_i32_0 : i32, i32
  }
  func.func @transform_5(%arg0: i32) -> (i32, i32) {
    %c0_i32 = arith.constant 0 : i32
    %c0_i32_0 = arith.constant 0 : i32
    %c0_i32_1 = arith.constant 0 : i32
    return %c0_i32, %c0_i32_0 : i32, i32
  }
  func.func @transform_6(%arg0: i32) -> (i32, i32) {
    %c0_i32 = arith.constant 0 : i32
    %c0_i32_0 = arith.constant 0 : i32
    %c0_i32_1 = arith.constant 0 : i32
    return %c0_i32, %c0_i32_0 : i32, i32
  }
  func.func @transform_7(%arg0: i32) -> (i32, i32) {
    %c0_i32 = arith.constant 0 : i32
    %c0_i32_0 = arith.constant 0 : i32
    %c0_i32_1 = arith.constant 0 : i32
    return %c0_i32, %c0_i32_0 : i32, i32
  }
  func.func @transform_8(%arg0: i32) -> (i32, i32) {
    %c0_i32 = arith.constant 0 : i32
    %c0_i32_0 = arith.constant 0 : i32
    %c0_i32_1 = arith.constant 0 : i32
    return %c0_i32, %c0_i32_0 : i32, i32
  }
  func.func @transform_9(%arg0: i32) -> (i32, i32) {
    %c0_i32 = arith.constant 0 : i32
    %c0_i32_0 = arith.constant 0 : i32
    %c0_i32_1 = arith.constant 0 : i32
    return %c0_i32, %c0_i32_0 : i32, i32
  }
  func.func @transform_10(%arg0: i32) -> (i32, i32, i32) {
    %c0_i32 = arith.constant 0 : i32
    %c0_i32_0 = arith.constant 0 : i32
    %c0_i32_1 = arith.constant 0 : i32
    return %arg0, %c0_i32, %c0_i32_0 : i32, i32, i32
  }
  func.func @transform_11(%arg0: i32) -> (i32, i32, i32, i32) {
    %c0_i32 = arith.constant 0 : i32
    %c0_i32_0 = arith.constant 0 : i32
    %c0_i32_1 = arith.constant 0 : i32
    %c0_i32_2 = arith.constant 0 : i32
    return %arg0, %c0_i32, %c0_i32_0, %c0_i32_1 : i32, i32, i32, i32
  }
}

module attributes {stable_mosaic.version = 11 : i64} {
  func.func @_fused_mha_ln_kernel(%arg0: i32, %arg1: memref<1x8x32xf32, #tpu.memory_space<vmem>>, %arg2: memref<1x8x32xf32, #tpu.memory_space<vmem>>, %arg3: memref<32x32xbf16, #tpu.memory_space<vmem>>, %arg4: memref<1x32xf32, #tpu.memory_space<vmem>>, %arg5: memref<32x64xbf16, #tpu.memory_space<vmem>>, %arg6: memref<1x64xf32, #tpu.memory_space<vmem>>, %arg7: memref<32x32xbf16, #tpu.memory_space<vmem>>, %arg8: memref<1x32xf32, #tpu.memory_space<vmem>>, %arg9: memref<1x32xf32, #tpu.memory_space<vmem>>, %arg10: memref<1x32xf32, #tpu.memory_space<vmem>>, %arg11: memref<1x8x32xf32, #tpu.memory_space<vmem>>, %arg12: memref<1x4x8x8xf32, #tpu.memory_space<vmem>>, %arg13: memref<8x32xf32, #tpu.memory_space<vmem>>) attributes {dimension_semantics = [#tpu.dimension_semantics<parallel>], iteration_bounds = array<i64: 2>, scalar_prefetch = 0 : i64, scratch_operands = 1 : i64, tpu.core_type = #tpu.core_type<tc>, window_params = [{transform_indices = @transform_0, window_bounds = array<i64: 1, 8, 32>}, {transform_indices = @transform_1, window_bounds = array<i64: 1, 8, 32>}, {pipeline_mode = #tpu.pipeline_mode<synchronous>, transform_indices = @transform_2, window_bounds = array<i64: 32, 32>}, {pipeline_mode = #tpu.pipeline_mode<synchronous>, transform_indices = @transform_3, window_bounds = array<i64: 1, 32>}, {pipeline_mode = #tpu.pipeline_mode<synchronous>, transform_indices = @transform_4, window_bounds = array<i64: 32, 64>}, {pipeline_mode = #tpu.pipeline_mode<synchronous>, transform_indices = @transform_5, window_bounds = array<i64: 1, 64>}, {pipeline_mode = #tpu.pipeline_mode<synchronous>, transform_indices = @transform_6, window_bounds = array<i64: 32, 32>}, {pipeline_mode = #tpu.pipeline_mode<synchronous>, transform_indices = @transform_7, window_bounds = array<i64: 1, 32>}, {pipeline_mode = #tpu.pipeline_mode<synchronous>, transform_indices = @transform_8, window_bounds = array<i64: 1, 32>}, {pipeline_mode = #tpu.pipeline_mode<synchronous>, transform_indices = @transform_9, window_bounds = array<i64: 1, 32>}, {transform_indices = @transform_10, window_bounds = array<i64: 1, 8, 32>}, {transform_indices = @transform_11, window_bounds = array<i64: 1, 4, 8, 8>}]} {
    %c0 = arith.constant 0 : index
    %c0_0 = arith.constant 0 : index
    %c0_1 = arith.constant 0 : index
    %0 = vector.load %arg1[%c0, %c0_0, %c0_1] : memref<1x8x32xf32, #tpu.memory_space<vmem>>, vector<1x8x32xf32>
    %1 = vector.shape_cast %0 : vector<1x8x32xf32> to vector<8x32xf32>
    %c0_2 = arith.constant 0 : index
    %c0_3 = arith.constant 0 : index
    %c0_4 = arith.constant 0 : index
    %2 = vector.load %arg2[%c0_2, %c0_3, %c0_4] : memref<1x8x32xf32, #tpu.memory_space<vmem>>, vector<1x8x32xf32>
    %3 = vector.shape_cast %2 : vector<1x8x32xf32> to vector<8x32xf32>
    %4 = arith.truncf %1 : vector<8x32xf32> to vector<8x32xbf16>
    %c0_5 = arith.constant 0 : index
    %c0_6 = arith.constant 0 : index
    %5 = vector.load %arg3[%c0_5, %c0_6] : memref<32x32xbf16, #tpu.memory_space<vmem>>, vector<32x32xbf16>
    %cst = arith.constant dense<0.000000e+00> : vector<8x32xf32>
    %6 = tpu.matmul %4, %5, %cst {dimension_numbers = #tpu.dot_dimension_numbers<[1], [0], [0], [1], [0, 0, 1, 1], [], []>} : vector<8x32xbf16>, vector<32x32xbf16>, vector<8x32xf32> -> vector<8x32xf32>
    %c0_7 = arith.constant 0 : index
    %c0_8 = arith.constant 0 : index
    %7 = vector.load %arg4[%c0_7, %c0_8] : memref<1x32xf32, #tpu.memory_space<vmem>>, vector<1x32xf32>
    %8 = vector.broadcast %7 : vector<1x32xf32> to vector<8x32xf32>
    %9 = arith.addf %6, %8 : vector<8x32xf32>
    %cst_9 = arith.constant 0.353553385 : f32
    %10 = vector.broadcast %cst_9 : f32 to vector<8x32xf32>
    %11 = arith.mulf %9, %10 : vector<8x32xf32>
    %12 = arith.truncf %3 : vector<8x32xf32> to vector<8x32xbf16>
    %c0_10 = arith.constant 0 : index
    %c0_11 = arith.constant 0 : index
    %13 = vector.load %arg5[%c0_10, %c0_11] : memref<32x64xbf16, #tpu.memory_space<vmem>>, vector<32x64xbf16>
    %cst_12 = arith.constant dense<0.000000e+00> : vector<8x64xf32>
    %14 = tpu.matmul %12, %13, %cst_12 {dimension_numbers = #tpu.dot_dimension_numbers<[1], [0], [0], [1], [0, 0, 1, 1], [], []>} : vector<8x32xbf16>, vector<32x64xbf16>, vector<8x64xf32> -> vector<8x64xf32>
    %c0_13 = arith.constant 0 : index
    %c0_14 = arith.constant 0 : index
    %15 = vector.load %arg6[%c0_13, %c0_14] : memref<1x64xf32, #tpu.memory_space<vmem>>, vector<1x64xf32>
    %16 = vector.broadcast %15 : vector<1x64xf32> to vector<8x64xf32>
    %17 = arith.addf %14, %16 : vector<8x64xf32>
    %18 = vector.extract_strided_slice %17 {offsets = [0, 0], sizes = [8, 32], strides = [1, 1]} : vector<8x64xf32> to vector<8x32xf32>
    %19 = vector.extract_strided_slice %17 {offsets = [0, 32], sizes = [8, 32], strides = [1, 1]} : vector<8x64xf32> to vector<8x32xf32>
    %20 = vector.extract_strided_slice %11 {offsets = [0, 0], sizes = [8, 8], strides = [1, 1]} : vector<8x32xf32> to vector<8x8xf32>
    %21 = arith.truncf %20 : vector<8x8xf32> to vector<8x8xbf16>
    %22 = vector.extract_strided_slice %18 {offsets = [0, 0], sizes = [8, 8], strides = [1, 1]} : vector<8x32xf32> to vector<8x8xf32>
    %23 = arith.truncf %22 : vector<8x8xf32> to vector<8x8xbf16>
    %24 = vector.extract_strided_slice %19 {offsets = [0, 0], sizes = [8, 8], strides = [1, 1]} : vector<8x32xf32> to vector<8x8xf32>
    %25 = arith.truncf %24 : vector<8x8xf32> to vector<8x8xbf16>
    %cst_15 = arith.constant dense<0.000000e+00> : vector<8x8xf32>
    %26 = tpu.matmul %21, %23, %cst_15 {dimension_numbers = #tpu.dot_dimension_numbers<[1], [1], [0], [0], [0, 0, 1, 0], [], []>} : vector<8x8xbf16>, vector<8x8xbf16>, vector<8x8xf32> -> vector<8x8xf32>
    %cst_16 = arith.constant dense<0xFF800000> : vector<8xf32>
    %27 = vector.multi_reduction <maximumf>, %26, %cst_16 [1] : vector<8x8xf32> to vector<8xf32>
    %28 = vector.shape_cast %27 : vector<8xf32> to vector<8x1xf32>
    %29 = vector.broadcast %28 : vector<8x1xf32> to vector<8x8xf32>
    %30 = arith.subf %26, %29 : vector<8x8xf32>
    %31 = math.exp %30 : vector<8x8xf32>
    %cst_17 = arith.constant dense<0.000000e+00> : vector<8xf32>
    %32 = vector.multi_reduction <add>, %31, %cst_17 [1] : vector<8x8xf32> to vector<8xf32>
    %33 = vector.shape_cast %32 : vector<8xf32> to vector<8x1xf32>
    %34 = tpu.reciprocal %33 {approx = true} : vector<8x1xf32> -> vector<8x1xf32>
    %35 = vector.broadcast %34 : vector<8x1xf32> to vector<8x8xf32>
    %36 = arith.mulf %31, %35 : vector<8x8xf32>
    %c0_18 = arith.constant 0 : index
    %c0_19 = arith.constant 0 : index
    %c0_20 = arith.constant 0 : index
    %c0_21 = arith.constant 0 : index
    %37 = vector.load %arg12[%c0_18, %c0_19, %c0_20, %c0_21] : memref<1x4x8x8xf32, #tpu.memory_space<vmem>>, vector<1x1x8x8xf32>
    %38 = vector.shape_cast %37 : vector<1x1x8x8xf32> to vector<8x8xf32>
    %39 = vector.shape_cast %36 : vector<8x8xf32> to vector<1x1x8x8xf32>
    tpu.vector_store %arg12[%c0_18, %c0_19, %c0_20, %c0_21], %39 {strides = array<i32>} : memref<1x4x8x8xf32, #tpu.memory_space<vmem>>, vector<1x1x8x8xf32>,
    %40 = arith.truncf %36 : vector<8x8xf32> to vector<8x8xbf16>
    %cst_22 = arith.constant dense<0.000000e+00> : vector<8x8xf32>
    %41 = tpu.matmul %40, %25, %cst_22 {dimension_numbers = #tpu.dot_dimension_numbers<[1], [0], [0], [1], [0, 0, 1, 1], [], []>} : vector<8x8xbf16>, vector<8x8xbf16>, vector<8x8xf32> -> vector<8x8xf32>
    %c0_23 = arith.constant 0 : index
    %c0_24 = arith.constant 0 : index
    %42 = vector.load %arg13[%c0_23, %c0_24] : memref<8x32xf32, #tpu.memory_space<vmem>>, vector<8x8xf32>
    tpu.vector_store %arg13[%c0_23, %c0_24], %41 {strides = array<i32>} : memref<8x32xf32, #tpu.memory_space<vmem>>, vector<8x8xf32>,
    %43 = vector.extract_strided_slice %11 {offsets = [0, 8], sizes = [8, 8], strides = [1, 1]} : vector<8x32xf32> to vector<8x8xf32>
    %44 = arith.truncf %43 : vector<8x8xf32> to vector<8x8xbf16>
    %45 = vector.extract_strided_slice %18 {offsets = [0, 8], sizes = [8, 8], strides = [1, 1]} : vector<8x32xf32> to vector<8x8xf32>
    %46 = arith.truncf %45 : vector<8x8xf32> to vector<8x8xbf16>
    %47 = vector.extract_strided_slice %19 {offsets = [0, 8], sizes = [8, 8], strides = [1, 1]} : vector<8x32xf32> to vector<8x8xf32>
    %48 = arith.truncf %47 : vector<8x8xf32> to vector<8x8xbf16>
    %cst_25 = arith.constant dense<0.000000e+00> : vector<8x8xf32>
    %49 = tpu.matmul %44, %46, %cst_25 {dimension_numbers = #tpu.dot_dimension_numbers<[1], [1], [0], [0], [0, 0, 1, 0], [], []>} : vector<8x8xbf16>, vector<8x8xbf16>, vector<8x8xf32> -> vector<8x8xf32>
    %cst_26 = arith.constant dense<0xFF800000> : vector<8xf32>
    %50 = vector.multi_reduction <maximumf>, %49, %cst_26 [1] : vector<8x8xf32> to vector<8xf32>
    %51 = vector.shape_cast %50 : vector<8xf32> to vector<8x1xf32>
    %52 = vector.broadcast %51 : vector<8x1xf32> to vector<8x8xf32>
    %53 = arith.subf %49, %52 : vector<8x8xf32>
    %54 = math.exp %53 : vector<8x8xf32>
    %cst_27 = arith.constant dense<0.000000e+00> : vector<8xf32>
    %55 = vector.multi_reduction <add>, %54, %cst_27 [1] : vector<8x8xf32> to vector<8xf32>
    %56 = vector.shape_cast %55 : vector<8xf32> to vector<8x1xf32>
    %57 = tpu.reciprocal %56 {approx = true} : vector<8x1xf32> -> vector<8x1xf32>
    %58 = vector.broadcast %57 : vector<8x1xf32> to vector<8x8xf32>
    %59 = arith.mulf %54, %58 : vector<8x8xf32>
    %c0_28 = arith.constant 0 : index
    %c1 = arith.constant 1 : index
    %c0_29 = arith.constant 0 : index
    %c0_30 = arith.constant 0 : index
    %60 = vector.load %arg12[%c0_28, %c1, %c0_29, %c0_30] : memref<1x4x8x8xf32, #tpu.memory_space<vmem>>, vector<1x1x8x8xf32>
    %61 = vector.shape_cast %60 : vector<1x1x8x8xf32> to vector<8x8xf32>
    %62 = vector.shape_cast %59 : vector<8x8xf32> to vector<1x1x8x8xf32>
    tpu.vector_store %arg12[%c0_28, %c1, %c0_29, %c0_30], %62 {strides = array<i32>} : memref<1x4x8x8xf32, #tpu.memory_space<vmem>>, vector<1x1x8x8xf32>,
    %63 = arith.truncf %59 : vector<8x8xf32> to vector<8x8xbf16>
    %cst_31 = arith.constant dense<0.000000e+00> : vector<8x8xf32>
    %64 = tpu.matmul %63, %48, %cst_31 {dimension_numbers = #tpu.dot_dimension_numbers<[1], [0], [0], [1], [0, 0, 1, 1], [], []>} : vector<8x8xbf16>, vector<8x8xbf16>, vector<8x8xf32> -> vector<8x8xf32>
    %c0_32 = arith.constant 0 : index
    %c8 = arith.constant 8 : index
    %65 = vector.load %arg13[%c0_32, %c8] : memref<8x32xf32, #tpu.memory_space<vmem>>, vector<8x8xf32>
    tpu.vector_store %arg13[%c0_32, %c8], %64 {strides = array<i32>} : memref<8x32xf32, #tpu.memory_space<vmem>>, vector<8x8xf32>,
    %66 = vector.extract_strided_slice %11 {offsets = [0, 16], sizes = [8, 8], strides = [1, 1]} : vector<8x32xf32> to vector<8x8xf32>
    %67 = arith.truncf %66 : vector<8x8xf32> to vector<8x8xbf16>
    %68 = vector.extract_strided_slice %18 {offsets = [0, 16], sizes = [8, 8], strides = [1, 1]} : vector<8x32xf32> to vector<8x8xf32>
    %69 = arith.truncf %68 : vector<8x8xf32> to vector<8x8xbf16>
    %70 = vector.extract_strided_slice %19 {offsets = [0, 16], sizes = [8, 8], strides = [1, 1]} : vector<8x32xf32> to vector<8x8xf32>
    %71 = arith.truncf %70 : vector<8x8xf32> to vector<8x8xbf16>
    %cst_33 = arith.constant dense<0.000000e+00> : vector<8x8xf32>
    %72 = tpu.matmul %67, %69, %cst_33 {dimension_numbers = #tpu.dot_dimension_numbers<[1], [1], [0], [0], [0, 0, 1, 0], [], []>} : vector<8x8xbf16>, vector<8x8xbf16>, vector<8x8xf32> -> vector<8x8xf32>
    %cst_34 = arith.constant dense<0xFF800000> : vector<8xf32>
    %73 = vector.multi_reduction <maximumf>, %72, %cst_34 [1] : vector<8x8xf32> to vector<8xf32>
    %74 = vector.shape_cast %73 : vector<8xf32> to vector<8x1xf32>
    %75 = vector.broadcast %74 : vector<8x1xf32> to vector<8x8xf32>
    %76 = arith.subf %72, %75 : vector<8x8xf32>
    %77 = math.exp %76 : vector<8x8xf32>
    %cst_35 = arith.constant dense<0.000000e+00> : vector<8xf32>
    %78 = vector.multi_reduction <add>, %77, %cst_35 [1] : vector<8x8xf32> to vector<8xf32>
    %79 = vector.shape_cast %78 : vector<8xf32> to vector<8x1xf32>
    %80 = tpu.reciprocal %79 {approx = true} : vector<8x1xf32> -> vector<8x1xf32>
    %81 = vector.broadcast %80 : vector<8x1xf32> to vector<8x8xf32>
    %82 = arith.mulf %77, %81 : vector<8x8xf32>
    %c0_36 = arith.constant 0 : index
    %c2 = arith.constant 2 : index
    %c0_37 = arith.constant 0 : index
    %c0_38 = arith.constant 0 : index
    %83 = vector.load %arg12[%c0_36, %c2, %c0_37, %c0_38] : memref<1x4x8x8xf32, #tpu.memory_space<vmem>>, vector<1x1x8x8xf32>
    %84 = vector.shape_cast %83 : vector<1x1x8x8xf32> to vector<8x8xf32>
    %85 = vector.shape_cast %82 : vector<8x8xf32> to vector<1x1x8x8xf32>
    tpu.vector_store %arg12[%c0_36, %c2, %c0_37, %c0_38], %85 {strides = array<i32>} : memref<1x4x8x8xf32, #tpu.memory_space<vmem>>, vector<1x1x8x8xf32>,
    %86 = arith.truncf %82 : vector<8x8xf32> to vector<8x8xbf16>
    %cst_39 = arith.constant dense<0.000000e+00> : vector<8x8xf32>
    %87 = tpu.matmul %86, %71, %cst_39 {dimension_numbers = #tpu.dot_dimension_numbers<[1], [0], [0], [1], [0, 0, 1, 1], [], []>} : vector<8x8xbf16>, vector<8x8xbf16>, vector<8x8xf32> -> vector<8x8xf32>
    %c0_40 = arith.constant 0 : index
    %c16 = arith.constant 16 : index
    %88 = vector.load %arg13[%c0_40, %c16] : memref<8x32xf32, #tpu.memory_space<vmem>>, vector<8x8xf32>
    tpu.vector_store %arg13[%c0_40, %c16], %87 {strides = array<i32>} : memref<8x32xf32, #tpu.memory_space<vmem>>, vector<8x8xf32>,
    %89 = vector.extract_strided_slice %11 {offsets = [0, 24], sizes = [8, 8], strides = [1, 1]} : vector<8x32xf32> to vector<8x8xf32>
    %90 = arith.truncf %89 : vector<8x8xf32> to vector<8x8xbf16>
    %91 = vector.extract_strided_slice %18 {offsets = [0, 24], sizes = [8, 8], strides = [1, 1]} : vector<8x32xf32> to vector<8x8xf32>
    %92 = arith.truncf %91 : vector<8x8xf32> to vector<8x8xbf16>
    %93 = vector.extract_strided_slice %19 {offsets = [0, 24], sizes = [8, 8], strides = [1, 1]} : vector<8x32xf32> to vector<8x8xf32>
    %94 = arith.truncf %93 : vector<8x8xf32> to vector<8x8xbf16>
    %cst_41 = arith.constant dense<0.000000e+00> : vector<8x8xf32>
    %95 = tpu.matmul %90, %92, %cst_41 {dimension_numbers = #tpu.dot_dimension_numbers<[1], [1], [0], [0], [0, 0, 1, 0], [], []>} : vector<8x8xbf16>, vector<8x8xbf16>, vector<8x8xf32> -> vector<8x8xf32>
    %cst_42 = arith.constant dense<0xFF800000> : vector<8xf32>
    %96 = vector.multi_reduction <maximumf>, %95, %cst_42 [1] : vector<8x8xf32> to vector<8xf32>
    %97 = vector.shape_cast %96 : vector<8xf32> to vector<8x1xf32>
    %98 = vector.broadcast %97 : vector<8x1xf32> to vector<8x8xf32>
    %99 = arith.subf %95, %98 : vector<8x8xf32>
    %100 = math.exp %99 : vector<8x8xf32>
    %cst_43 = arith.constant dense<0.000000e+00> : vector<8xf32>
    %101 = vector.multi_reduction <add>, %100, %cst_43 [1] : vector<8x8xf32> to vector<8xf32>
    %102 = vector.shape_cast %101 : vector<8xf32> to vector<8x1xf32>
    %103 = tpu.reciprocal %102 {approx = true} : vector<8x1xf32> -> vector<8x1xf32>
    %104 = vector.broadcast %103 : vector<8x1xf32> to vector<8x8xf32>
    %105 = arith.mulf %100, %104 : vector<8x8xf32>
    %c0_44 = arith.constant 0 : index
    %c3 = arith.constant 3 : index
    %c0_45 = arith.constant 0 : index
    %c0_46 = arith.constant 0 : index
    %106 = vector.load %arg12[%c0_44, %c3, %c0_45, %c0_46] : memref<1x4x8x8xf32, #tpu.memory_space<vmem>>, vector<1x1x8x8xf32>
    %107 = vector.shape_cast %106 : vector<1x1x8x8xf32> to vector<8x8xf32>
    %108 = vector.shape_cast %105 : vector<8x8xf32> to vector<1x1x8x8xf32>
    tpu.vector_store %arg12[%c0_44, %c3, %c0_45, %c0_46], %108 {strides = array<i32>} : memref<1x4x8x8xf32, #tpu.memory_space<vmem>>, vector<1x1x8x8xf32>,
    %109 = arith.truncf %105 : vector<8x8xf32> to vector<8x8xbf16>
    %cst_47 = arith.constant dense<0.000000e+00> : vector<8x8xf32>
    %110 = tpu.matmul %109, %94, %cst_47 {dimension_numbers = #tpu.dot_dimension_numbers<[1], [0], [0], [1], [0, 0, 1, 1], [], []>} : vector<8x8xbf16>, vector<8x8xbf16>, vector<8x8xf32> -> vector<8x8xf32>
    %c0_48 = arith.constant 0 : index
    %c24 = arith.constant 24 : index
    %111 = vector.load %arg13[%c0_48, %c24] : memref<8x32xf32, #tpu.memory_space<vmem>>, vector<8x8xf32>
    tpu.vector_store %arg13[%c0_48, %c24], %110 {strides = array<i32>} : memref<8x32xf32, #tpu.memory_space<vmem>>, vector<8x8xf32>,
    %c0_49 = arith.constant 0 : index
    %c0_50 = arith.constant 0 : index
    %112 = vector.load %arg13[%c0_49, %c0_50] : memref<8x32xf32, #tpu.memory_space<vmem>>, vector<8x32xf32>
    %113 = arith.truncf %112 : vector<8x32xf32> to vector<8x32xbf16>
    %c0_51 = arith.constant 0 : index
    %c0_52 = arith.constant 0 : index
    %114 = vector.load %arg7[%c0_51, %c0_52] : memref<32x32xbf16, #tpu.memory_space<vmem>>, vector<32x32xbf16>
    %cst_53 = arith.constant dense<0.000000e+00> : vector<8x32xf32>
    %115 = tpu.matmul %113, %114, %cst_53 {dimension_numbers = #tpu.dot_dimension_numbers<[1], [0], [0], [1], [0, 0, 1, 1], [], []>} : vector<8x32xbf16>, vector<32x32xbf16>, vector<8x32xf32> -> vector<8x32xf32>
    %c0_54 = arith.constant 0 : index
    %c0_55 = arith.constant 0 : index
    %116 = vector.load %arg8[%c0_54, %c0_55] : memref<1x32xf32, #tpu.memory_space<vmem>>, vector<1x32xf32>
    %117 = vector.broadcast %116 : vector<1x32xf32> to vector<8x32xf32>
    %118 = arith.addf %115, %117 : vector<8x32xf32>
    %119 = arith.addf %1, %118 : vector<8x32xf32>
    %cst_56 = arith.constant dense<0.000000e+00> : vector<8xf32>
    %120 = vector.multi_reduction <add>, %119, %cst_56 [1] : vector<8x32xf32> to vector<8xf32>
    %121 = vector.shape_cast %120 : vector<8xf32> to vector<8x1xf32>
    %cst_57 = arith.constant 3.200000e+01 : f32
    %122 = vector.broadcast %cst_57 : f32 to vector<8x1xf32>
    %123 = arith.divf %121, %122 : vector<8x1xf32>
    %124 = vector.broadcast %123 : vector<8x1xf32> to vector<8x32xf32>
    %125 = arith.subf %119, %124 : vector<8x32xf32>
    %126 = arith.mulf %125, %125 : vector<8x32xf32>
    %cst_58 = arith.constant dense<0.000000e+00> : vector<8xf32>
    %127 = vector.multi_reduction <add>, %126, %cst_58 [1] : vector<8x32xf32> to vector<8xf32>
    %128 = vector.shape_cast %127 : vector<8xf32> to vector<8x1xf32>
    %cst_59 = arith.constant 3.200000e+01 : f32
    %129 = vector.broadcast %cst_59 : f32 to vector<8x1xf32>
    %130 = arith.divf %128, %129 : vector<8x1xf32>
    %131 = vector.broadcast %123 : vector<8x1xf32> to vector<8x32xf32>
    %132 = arith.subf %119, %131 : vector<8x32xf32>
    %cst_60 = arith.constant 9.99999974E-6 : f32
    %133 = vector.broadcast %cst_60 : f32 to vector<8x1xf32>
    %134 = arith.addf %130, %133 : vector<8x1xf32>
    %135 = math.rsqrt %134 : vector<8x1xf32>
    %136 = vector.broadcast %135 : vector<8x1xf32> to vector<8x32xf32>
    %137 = arith.mulf %132, %136 : vector<8x32xf32>
    %c0_61 = arith.constant 0 : index
    %c0_62 = arith.constant 0 : index
    %138 = vector.load %arg9[%c0_61, %c0_62] : memref<1x32xf32, #tpu.memory_space<vmem>>, vector<1x32xf32>
    %139 = vector.broadcast %138 : vector<1x32xf32> to vector<8x32xf32>
    %140 = arith.mulf %137, %139 : vector<8x32xf32>
    %c0_63 = arith.constant 0 : index
    %c0_64 = arith.constant 0 : index
    %141 = vector.load %arg10[%c0_63, %c0_64] : memref<1x32xf32, #tpu.memory_space<vmem>>, vector<1x32xf32>
    %142 = vector.broadcast %141 : vector<1x32xf32> to vector<8x32xf32>
    %143 = arith.addf %140, %142 : vector<8x32xf32>
    %c0_65 = arith.constant 0 : index
    %c0_66 = arith.constant 0 : index
    %c0_67 = arith.constant 0 : index
    %144 = vector.load %arg11[%c0_65, %c0_66, %c0_67] : memref<1x8x32xf32, #tpu.memory_space<vmem>>, vector<1x8x32xf32>
    %145 = vector.shape_cast %144 : vector<1x8x32xf32> to vector<8x32xf32>
    %146 = vector.shape_cast %143 : vector<8x32xf32> to vector<1x8x32xf32>
    tpu.vector_store %arg11[%c0_65, %c0_66, %c0_67], %146 {strides = array<i32>} : memref<1x8x32xf32, #tpu.memory_space<vmem>>, vector<1x8x32xf32>,
    return
  }
  func.func @transform_0(%arg0: i32) -> (i32, i32, i32) {
    %c0_i32 = arith.constant 0 : i32
    %c0_i32_0 = arith.constant 0 : i32
    %c0_i32_1 = arith.constant 0 : i32
    return %arg0, %c0_i32, %c0_i32_0 : i32, i32, i32
  }
  func.func @transform_1(%arg0: i32) -> (i32, i32, i32) {
    %c0_i32 = arith.constant 0 : i32
    %c0_i32_0 = arith.constant 0 : i32
    %c0_i32_1 = arith.constant 0 : i32
    return %arg0, %c0_i32, %c0_i32_0 : i32, i32, i32
  }
  func.func @transform_2(%arg0: i32) -> (i32, i32) {
    %c0_i32 = arith.constant 0 : i32
    %c0_i32_0 = arith.constant 0 : i32
    %c0_i32_1 = arith.constant 0 : i32
    return %c0_i32, %c0_i32_0 : i32, i32
  }
  func.func @transform_3(%arg0: i32) -> (i32, i32) {
    %c0_i32 = arith.constant 0 : i32
    %c0_i32_0 = arith.constant 0 : i32
    %c0_i32_1 = arith.constant 0 : i32
    return %c0_i32, %c0_i32_0 : i32, i32
  }
  func.func @transform_4(%arg0: i32) -> (i32, i32) {
    %c0_i32 = arith.constant 0 : i32
    %c0_i32_0 = arith.constant 0 : i32
    %c0_i32_1 = arith.constant 0 : i32
    return %c0_i32, %c0_i32_0 : i32, i32
  }
  func.func @transform_5(%arg0: i32) -> (i32, i32) {
    %c0_i32 = arith.constant 0 : i32
    %c0_i32_0 = arith.constant 0 : i32
    %c0_i32_1 = arith.constant 0 : i32
    return %c0_i32, %c0_i32_0 : i32, i32
  }
  func.func @transform_6(%arg0: i32) -> (i32, i32) {
    %c0_i32 = arith.constant 0 : i32
    %c0_i32_0 = arith.constant 0 : i32
    %c0_i32_1 = arith.constant 0 : i32
    return %c0_i32, %c0_i32_0 : i32, i32
  }
  func.func @transform_7(%arg0: i32) -> (i32, i32) {
    %c0_i32 = arith.constant 0 : i32
    %c0_i32_0 = arith.constant 0 : i32
    %c0_i32_1 = arith.constant 0 : i32
    return %c0_i32, %c0_i32_0 : i32, i32
  }
  func.func @transform_8(%arg0: i32) -> (i32, i32) {
    %c0_i32 = arith.constant 0 : i32
    %c0_i32_0 = arith.constant 0 : i32
    %c0_i32_1 = arith.constant 0 : i32
    return %c0_i32, %c0_i32_0 : i32, i32
  }
  func.func @transform_9(%arg0: i32) -> (i32, i32) {
    %c0_i32 = arith.constant 0 : i32
    %c0_i32_0 = arith.constant 0 : i32
    %c0_i32_1 = arith.constant 0 : i32
    return %c0_i32, %c0_i32_0 : i32, i32
  }
  func.func @transform_10(%arg0: i32) -> (i32, i32, i32) {
    %c0_i32 = arith.constant 0 : i32
    %c0_i32_0 = arith.constant 0 : i32
    %c0_i32_1 = arith.constant 0 : i32
    return %arg0, %c0_i32, %c0_i32_0 : i32, i32, i32
  }
  func.func @transform_11(%arg0: i32) -> (i32, i32, i32, i32) {
    %c0_i32 = arith.constant 0 : i32
    %c0_i32_0 = arith.constant 0 : i32
    %c0_i32_1 = arith.constant 0 : i32
    %c0_i32_2 = arith.constant 0 : i32
    return %arg0, %c0_i32, %c0_i32_0, %c0_i32_1 : i32, i32, i32, i32
  }
}

module attributes {stable_mosaic.version = 11 : i64} {
  func.func @_layernorm_kernel(%arg0: i32, %arg1: memref<1x8x32xf32, #tpu.memory_space<vmem>>, %arg2: memref<1x32xf32, #tpu.memory_space<vmem>>, %arg3: memref<1x32xf32, #tpu.memory_space<vmem>>, %arg4: memref<1x8x32xf32, #tpu.memory_space<vmem>>) attributes {dimension_semantics = [#tpu.dimension_semantics<parallel>], iteration_bounds = array<i64: 2>, scalar_prefetch = 0 : i64, scratch_operands = 0 : i64, tpu.core_type = #tpu.core_type<tc>, window_params = [{transform_indices = @transform_0, window_bounds = array<i64: 1, 8, 32>}, {pipeline_mode = #tpu.pipeline_mode<synchronous>, transform_indices = @transform_1, window_bounds = array<i64: 1, 32>}, {pipeline_mode = #tpu.pipeline_mode<synchronous>, transform_indices = @transform_2, window_bounds = array<i64: 1, 32>}, {transform_indices = @transform_3, window_bounds = array<i64: 1, 8, 32>}]} {
    %c0 = arith.constant 0 : index
    %c0_0 = arith.constant 0 : index
    %c0_1 = arith.constant 0 : index
    %0 = vector.load %arg1[%c0, %c0_0, %c0_1] : memref<1x8x32xf32, #tpu.memory_space<vmem>>, vector<1x8x32xf32>
    %1 = vector.shape_cast %0 : vector<1x8x32xf32> to vector<8x32xf32>
    %cst = arith.constant dense<0.000000e+00> : vector<8xf32>
    %2 = vector.multi_reduction <add>, %1, %cst [1] : vector<8x32xf32> to vector<8xf32>
    %3 = vector.shape_cast %2 : vector<8xf32> to vector<8x1xf32>
    %cst_2 = arith.constant 3.200000e+01 : f32
    %4 = vector.broadcast %cst_2 : f32 to vector<8x1xf32>
    %5 = arith.divf %3, %4 : vector<8x1xf32>
    %6 = vector.broadcast %5 : vector<8x1xf32> to vector<8x32xf32>
    %7 = arith.subf %1, %6 : vector<8x32xf32>
    %8 = arith.mulf %7, %7 : vector<8x32xf32>
    %cst_3 = arith.constant dense<0.000000e+00> : vector<8xf32>
    %9 = vector.multi_reduction <add>, %8, %cst_3 [1] : vector<8x32xf32> to vector<8xf32>
    %10 = vector.shape_cast %9 : vector<8xf32> to vector<8x1xf32>
    %cst_4 = arith.constant 3.200000e+01 : f32
    %11 = vector.broadcast %cst_4 : f32 to vector<8x1xf32>
    %12 = arith.divf %10, %11 : vector<8x1xf32>
    %13 = vector.broadcast %5 : vector<8x1xf32> to vector<8x32xf32>
    %14 = arith.subf %1, %13 : vector<8x32xf32>
    %cst_5 = arith.constant 9.99999974E-6 : f32
    %15 = vector.broadcast %cst_5 : f32 to vector<8x1xf32>
    %16 = arith.addf %12, %15 : vector<8x1xf32>
    %17 = math.rsqrt %16 : vector<8x1xf32>
    %18 = vector.broadcast %17 : vector<8x1xf32> to vector<8x32xf32>
    %19 = arith.mulf %14, %18 : vector<8x32xf32>
    %c0_6 = arith.constant 0 : index
    %c0_7 = arith.constant 0 : index
    %20 = vector.load %arg2[%c0_6, %c0_7] : memref<1x32xf32, #tpu.memory_space<vmem>>, vector<1x32xf32>
    %21 = vector.broadcast %20 : vector<1x32xf32> to vector<8x32xf32>
    %22 = arith.mulf %19, %21 : vector<8x32xf32>
    %c0_8 = arith.constant 0 : index
    %c0_9 = arith.constant 0 : index
    %23 = vector.load %arg3[%c0_8, %c0_9] : memref<1x32xf32, #tpu.memory_space<vmem>>, vector<1x32xf32>
    %24 = vector.broadcast %23 : vector<1x32xf32> to vector<8x32xf32>
    %25 = arith.addf %22, %24 : vector<8x32xf32>
    %c0_10 = arith.constant 0 : index
    %c0_11 = arith.constant 0 : index
    %c0_12 = arith.constant 0 : index
    %26 = vector.load %arg4[%c0_10, %c0_11, %c0_12] : memref<1x8x32xf32, #tpu.memory_space<vmem>>, vector<1x8x32xf32>
    %27 = vector.shape_cast %26 : vector<1x8x32xf32> to vector<8x32xf32>
    %28 = vector.shape_cast %25 : vector<8x32xf32> to vector<1x8x32xf32>
    tpu.vector_store %arg4[%c0_10, %c0_11, %c0_12], %28 {strides = array<i32>} : memref<1x8x32xf32, #tpu.memory_space<vmem>>, vector<1x8x32xf32>,
    return
  }
  func.func @transform_0(%arg0: i32) -> (i32, i32, i32) {
    %c0_i32 = arith.constant 0 : i32
    %c0_i32_0 = arith.constant 0 : i32
    %c0_i32_1 = arith.constant 0 : i32
    return %arg0, %c0_i32, %c0_i32_0 : i32, i32, i32
  }
  func.func @transform_1(%arg0: i32) -> (i32, i32) {
    %c0_i32 = arith.constant 0 : i32
    %c0_i32_0 = arith.constant 0 : i32
    %c0_i32_1 = arith.constant 0 : i32
    return %c0_i32, %c0_i32_0 : i32, i32
  }
  func.func @transform_2(%arg0: i32) -> (i32, i32) {
    %c0_i32 = arith.constant 0 : i32
    %c0_i32_0 = arith.constant 0 : i32
    %c0_i32_1 = arith.constant 0 : i32
    return %c0_i32, %c0_i32_0 : i32, i32
  }
  func.func @transform_3(%arg0: i32) -> (i32, i32, i32) {
    %c0_i32 = arith.constant 0 : i32
    %c0_i32_0 = arith.constant 0 : i32
    %c0_i32_1 = arith.constant 0 : i32
    return %arg0, %c0_i32, %c0_i32_0 : i32, i32, i32
  }
}

</mosaic_0001>

<llo_original>
// kernel: fwd.9
$region0: #{fwd.9}
  #allocation0 [shape = 'u32[]', space=smem, size = 0x4, offset = 0x4, fixed_abs, tag = 'smem constant byte address 0x4 - core index']
  #allocation1 [shape = 'u32[144,128]{1,0:T(1,128)}', space=vmem, size = 0x12000, scoped, tag = 'internal scratch']
  %s0 = inlined_call_operand.vmem [shape: f32[2,8,32], index: 0, kind: input, shape index: {}]
  %s1 = inlined_call_operand.vmem [shape: bf16[32,64], index: 1, kind: input, shape index: {}]
  %s2 = inlined_call_operand.vmem [shape: f32[1,64], index: 2, kind: input, shape index: {}]
  %s3 = inlined_call_operand.vmem [shape: bf16[64,32], index: 3, kind: input, shape index: {}]
  %s4 = inlined_call_operand.vmem [shape: f32[1,32], index: 4, kind: input, shape index: {}]
  %s5 = inlined_call_operand.vmem [shape: f32[1,32], index: 5, kind: input, shape index: {}]
  %s6 = inlined_call_operand.vmem [shape: f32[1,32], index: 6, kind: input, shape index: {}]
  %s7 = inlined_call_operand.vmem [shape: f32[2,8,32], index: 7, kind: output, shape index: {}]
  %s8 = sld [smem:[#allocation0]]
  $region61: #{fwd.9} parent=0
    _
  %s10 = ssub.s32 1, %s8
  %s11 = scalar_select 0, %s10, %s8
  loop: start=0, step=1, limit=4
  $region2: #{fwd.9} parent=0 // loop_pre_header
    _
  $region3: #{fwd.9} parent=0 // loop_header
    %s13 = sphi 0, %s17
    %p14 = scmp.ge.s32.totalorder %s13, 4
    %s23 = sphi 0, %s25
    %s26 = sphi 0, %s23
    %s27 = sphi 0, %s26
    %s43 = sphi 0, %s27
    %s47 = sphi 0, %s47
    %s49 = sphi 0, %s47
    %s50 = sphi 0, %s49
    %s64 = sphi 0, %s50
    %s68 = sphi 0, %s68
    %s70 = sphi 0, %s68
    %s71 = sphi 0, %s70
    %s85 = sphi 0, %s71
    %s89 = sphi 0, %s89
    %s91 = sphi 0, %s89
    %s92 = sphi 0, %s91
    %s106 = sphi 0, %s92
    %s110 = sphi 0, %s110
    %s112 = sphi 0, %s110
    %s113 = sphi 0, %s112
    %s127 = sphi 0, %s113
    %s131 = sphi 0, %s131
    %s133 = sphi 0, %s131
    %s134 = sphi 0, %s133
    %s148 = sphi 0, %s134
    %s152 = sphi 0, %s152
    %s154 = sphi 0, %s152
    %s155 = sphi 0, %s154
    %s169 = sphi 0, %s155
    %s175 = sphi 0, %s177
    %s178 = sphi 0, %s175
    %s179 = sphi 0, %s178
    %s195 = sphi 0, %s179
  $region4: #{fwd.9} parent=0 // loop_header_branch
    %16 = sbr.rel (%p14) target = $region8
  $region5: #{fwd.9} parent=0 // loop_body
    %s18 = ssub.s32 %s13, 1
    %s19 = ssub.s32 %s13, 2
    %s20 = sadd.s32 %s13, 1
    %s21 = ssub.s32 %s13, %s20
    %p22 = scmp.eq.s32.totalorder %s21, 0
    %s24 = sadd.s32 %s23, 1
    %s25 = scalar_select %p22, %s23, %s24
    %p28 = pneg %p22
    %p29 = scmp.eq.s32.totalorder %s13, 1
    %p30 = por %p28, %p29
    %p31 = scmp.ne.s32.totalorder %s23, %s26
    %p32 = scmp.eq.s32.totalorder %s13, 0
    %p33 = por %p31, %p32
    %p34 = scmp.ne.s32.totalorder %s23, %s26
    %p35 = scmp.eq.s32.totalorder %s18, 1
    %p36 = por %p34, %p35
    %p37 = scmp.ne.s32.totalorder %s26, %s27
    %p38 = scmp.eq.s32.totalorder %s18, 0
    %p39 = por %p37, %p38
    %p40 = scmp.ne.s32.totalorder %s26, %s27
    %p41 = scmp.eq.s32.totalorder %s19, 1
    %p42 = por %p40, %p41
    %p44 = scmp.ne.s32.totalorder %s27, %s43
    %p45 = scmp.eq.s32.totalorder %s19, 0
    %p46 = por %p44, %p45
    %s48 = sadd.s32 %s47, 1
    %p51 = scmp.eq.s32.totalorder %s13, 1
    %p52 = scmp.ne.s32.totalorder %s47, %s49
    %p53 = scmp.eq.s32.totalorder %s13, 0
    %p54 = por %p52, %p53
    %p55 = scmp.ne.s32.totalorder %s47, %s49
    %p56 = scmp.eq.s32.totalorder %s18, 1
    %p57 = por %p55, %p56
    %p58 = scmp.ne.s32.totalorder %s49, %s50
    %p59 = scmp.eq.s32.totalorder %s18, 0
    %p60 = por %p58, %p59
    %p61 = scmp.ne.s32.totalorder %s49, %s50
    %p62 = scmp.eq.s32.totalorder %s19, 1
    %p63 = por %p61, %p62
    %p65 = scmp.ne.s32.totalorder %s50, %s64
    %p66 = scmp.eq.s32.totalorder %s19, 0
    %p67 = por %p65, %p66
    %s69 = sadd.s32 %s68, 1
    %p72 = scmp.eq.s32.totalorder %s13, 1
    %p73 = scmp.ne.s32.totalorder %s68, %s70
    %p74 = scmp.eq.s32.totalorder %s13, 0
    %p75 = por %p73, %p74
    %p76 = scmp.ne.s32.totalorder %s68, %s70
    %p77 = scmp.eq.s32.totalorder %s18, 1
    %p78 = por %p76, %p77
    %p79 = scmp.ne.s32.totalorder %s70, %s71
    %p80 = scmp.eq.s32.totalorder %s18, 0
    %p81 = por %p79, %p80
    %p82 = scmp.ne.s32.totalorder %s70, %s71
    %p83 = scmp.eq.s32.totalorder %s19, 1
    %p84 = por %p82, %p83
    %p86 = scmp.ne.s32.totalorder %s71, %s85
    %p87 = scmp.eq.s32.totalorder %s19, 0
    %p88 = por %p86, %p87
    %s90 = sadd.s32 %s89, 1
    %p93 = scmp.eq.s32.totalorder %s13, 1
    %p94 = scmp.ne.s32.totalorder %s89, %s91
    %p95 = scmp.eq.s32.totalorder %s13, 0
    %p96 = por %p94, %p95
    %p97 = scmp.ne.s32.totalorder %s89, %s91
    %p98 = scmp.eq.s32.totalorder %s18, 1
    %p99 = por %p97, %p98
    %p100 = scmp.ne.s32.totalorder %s91, %s92
    %p101 = scmp.eq.s32.totalorder %s18, 0
    %p102 = por %p100, %p101
    %p103 = scmp.ne.s32.totalorder %s91, %s92
    %p104 = scmp.eq.s32.totalorder %s19, 1
    %p105 = por %p103, %p104
    %p107 = scmp.ne.s32.totalorder %s92, %s106
    %p108 = scmp.eq.s32.totalorder %s19, 0
    %p109 = por %p107, %p108
    %s111 = sadd.s32 %s110, 1
    %p114 = scmp.eq.s32.totalorder %s13, 1
    %p115 = scmp.ne.s32.totalorder %s110, %s112
    %p116 = scmp.eq.s32.totalorder %s13, 0
    %p117 = por %p115, %p116
    %p118 = scmp.ne.s32.totalorder %s110, %s112
    %p119 = scmp.eq.s32.totalorder %s18, 1
    %p120 = por %p118, %p119
    %p121 = scmp.ne.s32.totalorder %s112, %s113
    %p122 = scmp.eq.s32.totalorder %s18, 0
    %p123 = por %p121, %p122
    %p124 = scmp.ne.s32.totalorder %s112, %s113
    %p125 = scmp.eq.s32.totalorder %s19, 1
    %p126 = por %p124, %p125
    %p128 = scmp.ne.s32.totalorder %s113, %s127
    %p129 = scmp.eq.s32.totalorder %s19, 0
    %p130 = por %p128, %p129
    %s132 = sadd.s32 %s131, 1
    %p135 = scmp.eq.s32.totalorder %s13, 1
    %p136 = scmp.ne.s32.totalorder %s131, %s133
    %p137 = scmp.eq.s32.totalorder %s13, 0
    %p138 = por %p136, %p137
    %p139 = scmp.ne.s32.totalorder %s131, %s133
    %p140 = scmp.eq.s32.totalorder %s18, 1
    %p141 = por %p139, %p140
    %p142 = scmp.ne.s32.totalorder %s133, %s134
    %p143 = scmp.eq.s32.totalorder %s18, 0
    %p144 = por %p142, %p143
    %p145 = scmp.ne.s32.totalorder %s133, %s134
    %p146 = scmp.eq.s32.totalorder %s19, 1
    %p147 = por %p145, %p146
    %p149 = scmp.ne.s32.totalorder %s134, %s148
    %p150 = scmp.eq.s32.totalorder %s19, 0
    %p151 = por %p149, %p150
    %s153 = sadd.s32 %s152, 1
    %p156 = scmp.eq.s32.totalorder %s13, 1
    %p157 = scmp.ne.s32.totalorder %s152, %s154
    %p158 = scmp.eq.s32.totalorder %s13, 0
    %p159 = por %p157, %p158
    %p160 = scmp.ne.s32.totalorder %s152, %s154
    %p161 = scmp.eq.s32.totalorder %s18, 1
    %p162 = por %p160, %p161
    %p163 = scmp.ne.s32.totalorder %s154, %s155
    %p164 = scmp.eq.s32.totalorder %s18, 0
    %p165 = por %p163, %p164
    %p166 = scmp.ne.s32.totalorder %s154, %s155
    %p167 = scmp.eq.s32.totalorder %s19, 1
    %p168 = por %p166, %p167
    %p170 = scmp.ne.s32.totalorder %s155, %s169
    %p171 = scmp.eq.s32.totalorder %s19, 0
    %p172 = por %p170, %p171
    %s173 = ssub.s32 %s13, %s20
    %p174 = scmp.eq.s32.totalorder %s173, 0
    %s176 = sadd.s32 %s175, 1
    %s177 = scalar_select %p174, %s175, %s176
    %p180 = pneg %p174
    %p181 = scmp.eq.s32.totalorder %s13, 1
    %p182 = por %p180, %p181
    %p183 = scmp.ne.s32.totalorder %s175, %s178
    %p184 = scmp.eq.s32.totalorder %s13, 0
    %p185 = por %p183, %p184
    %p186 = scmp.ne.s32.totalorder %s175, %s178
    %p187 = scmp.eq.s32.totalorder %s18, 1
    %p188 = por %p186, %p187
    %p189 = scmp.ne.s32.totalorder %s178, %s179
    %p190 = scmp.eq.s32.totalorder %s18, 0
    %p191 = por %p189, %p190
    %p192 = scmp.ne.s32.totalorder %s178, %s179
    %p193 = scmp.eq.s32.totalorder %s19, 1
    %p194 = por %p192, %p193
    %p196 = scmp.ne.s32.totalorder %s179, %s195
    %p197 = scmp.eq.s32.totalorder %s19, 0
    %p198 = por %p196, %p197
    %p199 = scmp.le.s32.totalorder 1, %s13
    %p200 = scmp.lt.s32.totalorder %s13, 3
    %p201 = pnand %p199, %p200
    %p202 = pneg %p201
    // Predicated region
    $region9: #{fwd.9} parent=5 // pred_check
      _
    $region10: #{fwd.9} parent=5 // pred_check_branch
      %204 = sbr.rel (%p201) target = $region12
    $region11: #{fwd.9} parent=5 // pred_region
      %s205 = ssub.s32 %s13, 1
      // Predicated region
      $region13: #{fwd.9} parent=11 // pred_check
        %p206 = pneg %p60
      $region14: #{fwd.9} parent=11 // pred_check_branch
        %208 = sbr.rel (%p206) target = $region16
      $region15: #{fwd.9} parent=11 // pred_region
        _
      $region16: #{fwd.9} parent=11 // pred_fallthru
        _
      // Predicated region
      $region17: #{fwd.9} parent=11 // pred_check
        %p209 = pneg %p81
      $region18: #{fwd.9} parent=11 // pred_check_branch
        %211 = sbr.rel (%p209) target = $region20
      $region19: #{fwd.9} parent=11 // pred_region
        _
      $region20: #{fwd.9} parent=11 // pred_fallthru
        _
      // Predicated region
      $region21: #{fwd.9} parent=11 // pred_check
        %p212 = pneg %p102
      $region22: #{fwd.9} parent=11 // pred_check_branch
        %214 = sbr.rel (%p212) target = $region24
      $region23: #{fwd.9} parent=11 // pred_region
        _
      $region24: #{fwd.9} parent=11 // pred_fallthru
        _
      // Predicated region
      $region25: #{fwd.9} parent=11 // pred_check
        %p215 = pneg %p123
      $region26: #{fwd.9} parent=11 // pred_check_branch
        %217 = sbr.rel (%p215) target = $region28
      $region27: #{fwd.9} parent=11 // pred_region
        _
      $region28: #{fwd.9} parent=11 // pred_fallthru
        _
      // Predicated region
      $region29: #{fwd.9} parent=11 // pred_check
        %p218 = pneg %p144
      $region30: #{fwd.9} parent=11 // pred_check_branch
        %220 = sbr.rel (%p218) target = $region32
      $region31: #{fwd.9} parent=11 // pred_region
        _
      $region32: #{fwd.9} parent=11 // pred_fallthru
        _
      // Predicated region
      $region33: #{fwd.9} parent=11 // pred_check
        %p221 = pneg %p165
      $region34: #{fwd.9} parent=11 // pred_check_branch
        %223 = sbr.rel (%p221) target = $region36
      $region35: #{fwd.9} parent=11 // pred_region
        _
      $region36: #{fwd.9} parent=11 // pred_fallthru
        _
    $region12: #{fwd.9} parent=5 // pred_fallthru
      _
    %p224 = scmp.lt.s32.totalorder %s13, 2
    // Predicated region
    $region37: #{fwd.9} parent=5 // pred_check
      %p225 = pneg %p224
    $region38: #{fwd.9} parent=5 // pred_check_branch
      %227 = sbr.rel (%p225) target = $region40
    $region39: #{fwd.9} parent=5 // pred_region
      // Predicated region
      $region41: #{fwd.9} parent=39 // pred_check
        %p228 = pneg %p33
      $region42: #{fwd.9} parent=39 // pred_check_branch
        %230 = sbr.rel (%p228) target = $region44
      $region43: #{fwd.9} parent=39 // pred_region
        %p231 = scmp.lt.s32.totalorder %s13, 1
        %s232 = scalar_select %p231, %s13, 1
        %s233 = smul.addr %s232, 8
        %s234 = scalar_lea.vmem %s0, %s233
      $region44: #{fwd.9} parent=39 // pred_fallthru
        _
    $region40: #{fwd.9} parent=5 // pred_fallthru
      _
    %p235 = scmp.le.s32.totalorder 1, %s13
    %p236 = scmp.lt.s32.totalorder %s13, 3
    %p237 = pnand %p235, %p236
    %p238 = pneg %p237
    // Predicated region
    $region45: #{fwd.9} parent=5 // pred_check
      _
    $region46: #{fwd.9} parent=5 // pred_check_branch
      %240 = sbr.rel (%p237) target = $region48
    $region47: #{fwd.9} parent=5 // pred_region
      %s241 = ssub.s32 %s13, 1
      %p242 = scmp.lt.s32.totalorder %s18, 1
      %s243 = scalar_select %p242, %s18, 1
      %s244 = smul.addr %s243, 8
      %s245 = scalar_lea.vmem %s0, %s244
      %p246 = pneg %p39
      %p247 = pneg %p36
      %p248 = pneg %p60
      %p249 = pneg %p57
      %p250 = pneg %p81
      %p251 = pneg %p78
      %p252 = pneg %p102
      %p253 = pneg %p99
      %p254 = pneg %p123
      %p255 = pneg %p120
      %p256 = pneg %p144
      %p257 = pneg %p141
      %p258 = pneg %p165
      %p259 = pneg %p162
      %p260 = pneg %p191
      %p261 = pneg %p188
      %p262 = scmp.lt.s32.totalorder %s18, 1
      %s263 = scalar_select %p262, %s18, 1
      %s264 = smul.addr %s263, 8
      %s265 = scalar_lea.vmem %s7, %s264
      %p266 = scmp.lt.s32.totalorder %s18, 1
      %s267 = scalar_select %p266, %s18, 1
      %s268 = smul.addr %s267, 8
      %s269 = scalar_lea.vmem %s0, %s268
      %p270 = scmp.lt.s32.totalorder %s18, 1
      %s271 = scalar_select %p270, %s18, 1
      %s272 = smul.addr %s271, 8
      %s273 = scalar_lea.vmem %s7, %s272
      %v275 = vld [vmem:[%s269] sm:$0xff]
      %v276 = vpack.c.bf16 %v275, %v275
      %v277 = vld [vmem:[%s1] sm:$0xf]
      %v278 = vld [vmem:[%s1 + $0x4] sm:$0xf]
      %v279 = vld [vmem:[%s1 + $0x8] sm:$0xf]
      %v280 = vld [vmem:[%s1 + $0xc] sm:$0xf]
      %v281 = vld [vmem:[%s2] sm:$0x1]
      %v283 = vlaneseq
      %v284 = vshrl.u32 %v283, 7
      %v285 = vsub.s32 0, %v284
      %v286 = vrot.slane %v281, %v285
      %v292 = vunpack.c.l.b16 %v277
      %v293 = vunpack.c.l.b16 %v278
      %v294 = vunpack.c.l.b16 %v279
      %v295 = vunpack.c.l.b16 %v280
      %v296 = vpack.c.b16 %v293, %v292
      %v297 = vpack.c.b16 %v295, %v294
      %vm300 = vcmask 261120
      %v302 = vsel %vm300, %v276, 0
      %304 = vmatprep.subr.bf16.mxu0 0
      %305 = vmatpush1.bf16.msra.mxu0 0
      %306 = vmatprep.subr.bf16.mxu0 0
      %307 = vmatpush1.bf16.msra.mxu0 0
      %308 = vmatprep.subr.bf16.mxu0 0
      %309 = vmatpush1.bf16.msra.mxu0 0
      %310 = vmatprep.subr.bf16.mxu0 0
      %311 = vmatpush1.bf16.msra.mxu0 0
      %312 = vmatprep.subr.bf16.mxu0 0
      %313 = vmatpush1.bf16.msra.mxu0 0
      %314 = vmatprep.subr.bf16.mxu0 0
      %315 = vmatpush1.bf16.msra.mxu0 0
      %316 = vmatprep.subr.bf16.mxu0 0
      %317 = vmatpush1.bf16.msra.mxu0 %v297
      %318 = vmatprep.subr.bf16.mxu0 0
      %319 = vmatpush1.bf16.msra.mxu0 %v296
      %320 = vmatprep.subr.bf16.mxu0 0
      %321 = vmatpush2.bf16.msra.mxu0 0
      %322 = vmatprep.subr.bf16.mxu0 0
      %323 = vmatpush2.bf16.msra.mxu0 0
      %324 = vmatprep.subr.bf16.mxu0 0
      %325 = vmatpush2.bf16.msra.mxu0 0
      %326 = vmatprep.subr.bf16.mxu0 0
      %327 = vmatpush2.bf16.msra.mxu0 0
      %328 = vmatprep.subr.bf16.mxu0 0
      %329 = vmatpush2.bf16.msra.mxu0 0
      %330 = vmatprep.subr.bf16.mxu0 0
      %331 = vmatpush2.bf16.msra.mxu0 0
      %332 = vmatprep.subr.bf16.mxu0 0
      %333 = vmatpush2.bf16.msra.mxu0 0
      %334 = vmatprep.subr.bf16.mxu0 0
      %335 = vmatpush2.bf16.msra.mxu0 0
      %336 = vmatprep.mubr.bf16.mxu0 0
      %337 = vmatmul.mubr.bf16.gmra.mxu0 %v302
      %v338 = vpop.f32.mrf.mxu0
      %v339 = vadd.f32 %v286, %v338
      %v340 = vpop.f32.mrf.mxu0
      %v341 = vpop.f32.mrf.mxu0
      %v342 = vpop.f32.mrf.mxu0
      %343 = vdwg.mxu0
      %v344 = vmax.f32 %v339, 0.0
      %v345 = vpack.c.bf16 %v344, %v344
      %v346 = vld [vmem:[%s3] sm:$0xf]
      %v347 = vld [vmem:[%s3 + $0x4] sm:$0xf]
      %v348 = vld [vmem:[%s3 + $0x8] sm:$0xf]
      %v349 = vld [vmem:[%s3 + $0xc] sm:$0xf]
      %v350 = vld [vmem:[%s3 + $0x10] sm:$0xf]
      %v351 = vld [vmem:[%s3 + $0x14] sm:$0xf]
      %v352 = vld [vmem:[%s3 + $0x18] sm:$0xf]
      %v353 = vld [vmem:[%s3 + $0x1c] sm:$0xf]
      %v354 = vld [vmem:[%s4] sm:$0x1]
      %v356 = vlaneseq
      %v357 = vshrl.u32 %v356, 7
      %v358 = vsub.s32 0, %v357
      %v359 = vrot.slane %v354, %v358
      %v369 = vunpack.c.l.b16 %v346
      %v370 = vunpack.c.l.b16 %v347
      %v371 = vunpack.c.l.b16 %v348
      %v372 = vunpack.c.l.b16 %v349
      %v373 = vunpack.c.l.b16 %v350
      %v374 = vunpack.c.l.b16 %v351
      %v375 = vunpack.c.l.b16 %v352
      %v376 = vunpack.c.l.b16 %v353
      %v377 = vpack.c.b16 %v370, %v369
      %v378 = vpack.c.b16 %v372, %v371
      %v379 = vpack.c.b16 %v374, %v373
      %v380 = vpack.c.b16 %v376, %v375
      %vm385 = vcmask 523264
      %v387 = vsel %vm385, %v345, 0
      %389 = vmatprep.subr.bf16.mxu0 0
      %390 = vmatpush1.bf16.msra.mxu0 0
      %391 = vmatprep.subr.bf16.mxu0 0
      %392 = vmatpush1.bf16.msra.mxu0 0
      %393 = vmatprep.subr.bf16.mxu0 0
      %394 = vmatpush1.bf16.msra.mxu0 0
      %395 = vmatprep.subr.bf16.mxu0 0
      %396 = vmatpush1.bf16.msra.mxu0 0
      %397 = vmatprep.subr.bf16.mxu0 0
      %398 = vmatpush1.bf16.msra.mxu0 %v380
      %399 = vmatprep.subr.bf16.mxu0 0
      %400 = vmatpush1.bf16.msra.mxu0 %v379
      %401 = vmatprep.subr.bf16.mxu0 0
      %402 = vmatpush1.bf16.msra.mxu0 %v378
      %403 = vmatprep.subr.bf16.mxu0 0
      %404 = vmatpush1.bf16.msra.mxu0 %v377
      %405 = vmatprep.subr.bf16.mxu0 0
      %406 = vmatpush2.bf16.msra.mxu0 0
      %407 = vmatprep.subr.bf16.mxu0 0
      %408 = vmatpush2.bf16.msra.mxu0 0
      %409 = vmatprep.subr.bf16.mxu0 0
      %410 = vmatpush2.bf16.msra.mxu0 0
      %411 = vmatprep.subr.bf16.mxu0 0
      %412 = vmatpush2.bf16.msra.mxu0 0
      %413 = vmatprep.subr.bf16.mxu0 0
      %414 = vmatpush2.bf16.msra.mxu0 0
      %415 = vmatprep.subr.bf16.mxu0 0
      %416 = vmatpush2.bf16.msra.mxu0 0
      %417 = vmatprep.subr.bf16.mxu0 0
      %418 = vmatpush2.bf16.msra.mxu0 0
      %419 = vmatprep.subr.bf16.mxu0 0
      %420 = vmatpush2.bf16.msra.mxu0 0
      %421 = vmatprep.mubr.bf16.mxu0 0
      %422 = vmatmul.mubr.bf16.gmra.mxu0 %v387
      %v423 = vpop.f32.mrf.mxu0
      %v424 = vadd.f32 %v359, %v423
      %v425 = vpop.f32.mrf.mxu0
      %v426 = vpop.f32.mrf.mxu0
      %v427 = vpop.f32.mrf.mxu0
      %428 = vdwg.mxu0
      %v429 = vadd.f32 %v275, %v424
      %v430 = vsel %vm300, %v429, 0.0
      %431 = vadd.xlane.f32.xlu0 %v430
      %v432 = vpop.xlane.xlu0 %431
      %v433 = vrcp.pop 32.0
      %v434 = vmul.f32 %v432, %v433
      %v435 = vsub.f32 %v429, %v434
      %v436 = vmul.f32 %v435, %v435
      %v437 = vsel %vm300, %v436, 0.0
      %438 = vadd.xlane.f32.xlu0 %v437
      %v439 = vpop.xlane.xlu0 %438
      %v440 = vmul.f32 %v439, %v433
      %v441 = vadd.f32 %v440, 1e-05
      %v442 = vrsqrt.pop %v441
      %v443 = vmul.f32 %v435, %v442
      %v444 = vld [vmem:[%s5] sm:$0x1]
      %v446 = vlaneseq
      %v447 = vshrl.u32 %v446, 7
      %v448 = vsub.s32 0, %v447
      %v449 = vrot.slane %v444, %v448
      %v451 = vmul.f32 %v443, %v449
      %v452 = vld [vmem:[%s6] sm:$0x1]
      %v454 = vlaneseq
      %v455 = vshrl.u32 %v454, 7
      %v456 = vsub.s32 0, %v455
      %v457 = vrot.slane %v452, %v456
      %v459 = vadd.f32 %v451, %v457
      %460 = vst.msk [vmem:[%s273] sm:$0xff] %vm300, %v459
      %p461 = scmp.lt.s32.totalorder %s18, 1
      %s462 = scalar_select %p461, %s18, 1
      %s463 = smul.addr %s462, 8
      %s464 = scalar_lea.vmem %s7, %s463
      // Predicated region
      $region49: #{fwd.9} parent=47 // pred_check
        %p465 = pneg %p188
      $region50: #{fwd.9} parent=47 // pred_check_branch
        %467 = sbr.rel (%p465) target = $region52
      $region51: #{fwd.9} parent=47 // pred_region
        _
      $region52: #{fwd.9} parent=47 // pred_fallthru
        _
    $region48: #{fwd.9} parent=5 // pred_fallthru
      _
    %p468 = scmp.le.s32.totalorder 2, %s13
    // Predicated region
    $region53: #{fwd.9} parent=5 // pred_check
      %p469 = pneg %p468
    $region54: #{fwd.9} parent=5 // pred_check_branch
      %471 = sbr.rel (%p469) target = $region56
    $region55: #{fwd.9} parent=5 // pred_region
      %s472 = ssub.s32 %s13, 2
      // Predicated region
      $region57: #{fwd.9} parent=55 // pred_check
        %p473 = pneg %p194
      $region58: #{fwd.9} parent=55 // pred_check_branch
        %475 = sbr.rel (%p473) target = $region60
      $region59: #{fwd.9} parent=55 // pred_region
        %p476 = scmp.lt.s32.totalorder %s19, 1
        %s477 = scalar_select %p476, %s19, 1
        %s478 = smul.addr %s477, 8
        %s479 = scalar_lea.vmem %s7, %s478
      $region60: #{fwd.9} parent=55 // pred_fallthru
        _
    $region56: #{fwd.9} parent=5 // pred_fallthru
      _
  $region6: #{fwd.9} parent=0 // loop_footer
    %s17 = sadd.s32 1, %s13
  $region7: #{fwd.9} parent=0 // loop_footer_branch
    %12 = sbr.rel target = $region3
  $region8: #{fwd.9} parent=0 // loop_exit
    _

// kernel: fwd.13
$region0: #{fwd.13}
  #allocation0 [shape = 'u32[]', space=smem, size = 0x4, offset = 0x4, fixed_abs, tag = 'smem constant byte address 0x4 - core index']
  #allocation1 [shape = 'u32[144,128]{1,0:T(1,128)}', space=vmem, size = 0x12000, scoped, tag = 'internal scratch']
  %s0 = inlined_call_operand.vmem [shape: f32[2,8,32], index: 0, kind: input, shape index: {}]
  %s1 = inlined_call_operand.vmem [shape: f32[1,32], index: 1, kind: input, shape index: {}]
  %s2 = inlined_call_operand.vmem [shape: f32[1,32], index: 2, kind: input, shape index: {}]
  %s3 = inlined_call_operand.hbm [shape: f32[2,8,32], index: 3, kind: output, shape index: {}]
  %s4 = sld [smem:[#allocation0]]
  $region45: #{fwd.13} parent=0
    _
  %s6 = ssub.s32 1, %s4
  %s7 = scalar_select 0, %s6, %s4
  $region1: #{fwd.13} parent=0
    #allocation2 [shape = 'u8[8192]{0}', space=vmem, size = 0x2000, scoped, tag = 'output window, operand 0']
    #allocation3 [shape = 's32[2]{0}', space=sflag, size = 0x8, scoped, tag = 'scoped memory for fwd.13']
    %8 = vsyncpa [#allocation3], 0
    %s9 = scalar_lea.sflag [#allocation3], 1
    %10 = vsyncpa %s9, 0
    loop: start=0, step=1, limit=4
    $region2: #{fwd.13} parent=1 // loop_pre_header
      _
    $region3: #{fwd.13} parent=1 // loop_header
      %s12 = sphi 0, %s16
      %p13 = scmp.ge.s32.totalorder %s12, 4
      %s22 = sphi 0, %s24
      %s25 = sphi 0, %s22
      %s26 = sphi 0, %s25
      %s42 = sphi 0, %s26
      %s46 = sphi 0, %s46
      %s48 = sphi 0, %s46
      %s49 = sphi 0, %s48
      %s63 = sphi 0, %s49
      %s67 = sphi 0, %s67
      %s69 = sphi 0, %s67
      %s70 = sphi 0, %s69
      %s84 = sphi 0, %s70
      %s90 = sphi 0, %s92
      %s93 = sphi 0, %s90
      %s94 = sphi 0, %s93
      %s110 = sphi 0, %s94
    $region4: #{fwd.13} parent=1 // loop_header_branch
      %15 = sbr.rel (%p13) target = $region8
    $region5: #{fwd.13} parent=1 // loop_body
      %s17 = ssub.s32 %s12, 1
      %s18 = ssub.s32 %s12, 2
      %s19 = sadd.s32 %s12, 1
      %s20 = ssub.s32 %s12, %s19
      %p21 = scmp.eq.s32.totalorder %s20, 0
      %s23 = sadd.s32 %s22, 1
      %s24 = scalar_select %p21, %s22, %s23
      %p27 = pneg %p21
      %p28 = scmp.eq.s32.totalorder %s12, 1
      %p29 = por %p27, %p28
      %p30 = scmp.ne.s32.totalorder %s22, %s25
      %p31 = scmp.eq.s32.totalorder %s12, 0
      %p32 = por %p30, %p31
      %p33 = scmp.ne.s32.totalorder %s22, %s25
      %p34 = scmp.eq.s32.totalorder %s17, 1
      %p35 = por %p33, %p34
      %p36 = scmp.ne.s32.totalorder %s25, %s26
      %p37 = scmp.eq.s32.totalorder %s17, 0
      %p38 = por %p36, %p37
      %p39 = scmp.ne.s32.totalorder %s25, %s26
      %p40 = scmp.eq.s32.totalorder %s18, 1
      %p41 = por %p39, %p40
      %p43 = scmp.ne.s32.totalorder %s26, %s42
      %p44 = scmp.eq.s32.totalorder %s18, 0
      %p45 = por %p43, %p44
      %s47 = sadd.s32 %s46, 1
      %p50 = scmp.eq.s32.totalorder %s12, 1
      %p51 = scmp.ne.s32.totalorder %s46, %s48
      %p52 = scmp.eq.s32.totalorder %s12, 0
      %p53 = por %p51, %p52
      %p54 = scmp.ne.s32.totalorder %s46, %s48
      %p55 = scmp.eq.s32.totalorder %s17, 1
      %p56 = por %p54, %p55
      %p57 = scmp.ne.s32.totalorder %s48, %s49
      %p58 = scmp.eq.s32.totalorder %s17, 0
      %p59 = por %p57, %p58
      %p60 = scmp.ne.s32.totalorder %s48, %s49
      %p61 = scmp.eq.s32.totalorder %s18, 1
      %p62 = por %p60, %p61
      %p64 = scmp.ne.s32.totalorder %s49, %s63
      %p65 = scmp.eq.s32.totalorder %s18, 0
      %p66 = por %p64, %p65
      %s68 = sadd.s32 %s67, 1
      %p71 = scmp.eq.s32.totalorder %s12, 1
      %p72 = scmp.ne.s32.totalorder %s67, %s69
      %p73 = scmp.eq.s32.totalorder %s12, 0
      %p74 = por %p72, %p73
      %p75 = scmp.ne.s32.totalorder %s67, %s69
      %p76 = scmp.eq.s32.totalorder %s17, 1
      %p77 = por %p75, %p76
      %p78 = scmp.ne.s32.totalorder %s69, %s70
      %p79 = scmp.eq.s32.totalorder %s17, 0
      %p80 = por %p78, %p79
      %p81 = scmp.ne.s32.totalorder %s69, %s70
      %p82 = scmp.eq.s32.totalorder %s18, 1
      %p83 = por %p81, %p82
      %p85 = scmp.ne.s32.totalorder %s70, %s84
      %p86 = scmp.eq.s32.totalorder %s18, 0
      %p87 = por %p85, %p86
      %s88 = ssub.s32 %s12, %s19
      %p89 = scmp.eq.s32.totalorder %s88, 0
      %s91 = sadd.s32 %s90, 1
      %s92 = scalar_select %p89, %s90, %s91
      %p95 = pneg %p89
      %p96 = scmp.eq.s32.totalorder %s12, 1
      %p97 = por %p95, %p96
      %p98 = scmp.ne.s32.totalorder %s90, %s93
      %p99 = scmp.eq.s32.totalorder %s12, 0
      %p100 = por %p98, %p99
      %p101 = scmp.ne.s32.totalorder %s90, %s93
      %p102 = scmp.eq.s32.totalorder %s17, 1
      %p103 = por %p101, %p102
      %p104 = scmp.ne.s32.totalorder %s93, %s94
      %p105 = scmp.eq.s32.totalorder %s17, 0
      %p106 = por %p104, %p105
      %p107 = scmp.ne.s32.totalorder %s93, %s94
      %p108 = scmp.eq.s32.totalorder %s18, 1
      %p109 = por %p107, %p108
      %p111 = scmp.ne.s32.totalorder %s94, %s110
      %p112 = scmp.eq.s32.totalorder %s18, 0
      %p113 = por %p111, %p112
      %p114 = scmp.le.s32.totalorder 1, %s12
      %p115 = scmp.lt.s32.totalorder %s12, 3
      %p116 = pnand %p114, %p115
      %p117 = pneg %p116
      // Predicated region
      $region9: #{fwd.13} parent=5 // pred_check
        _
      $region10: #{fwd.13} parent=5 // pred_check_branch
        %119 = sbr.rel (%p116) target = $region12
      $region11: #{fwd.13} parent=5 // pred_region
        %s120 = ssub.s32 %s12, 1
        // Predicated region
        $region13: #{fwd.13} parent=11 // pred_check
          %p121 = pneg %p59
        $region14: #{fwd.13} parent=11 // pred_check_branch
          %123 = sbr.rel (%p121) target = $region16
        $region15: #{fwd.13} parent=11 // pred_region
          _
        $region16: #{fwd.13} parent=11 // pred_fallthru
          _
        // Predicated region
        $region17: #{fwd.13} parent=11 // pred_check
          %p124 = pneg %p80
        $region18: #{fwd.13} parent=11 // pred_check_branch
          %126 = sbr.rel (%p124) target = $region20
        $region19: #{fwd.13} parent=11 // pred_region
          _
        $region20: #{fwd.13} parent=11 // pred_fallthru
          _
      $region12: #{fwd.13} parent=5 // pred_fallthru
        _
      %p127 = scmp.lt.s32.totalorder %s12, 2
      // Predicated region
      $region21: #{fwd.13} parent=5 // pred_check
        %p128 = pneg %p127
      $region22: #{fwd.13} parent=5 // pred_check_branch
        %130 = sbr.rel (%p128) target = $region24
      $region23: #{fwd.13} parent=5 // pred_region
        // Predicated region
        $region25: #{fwd.13} parent=23 // pred_check
          %p131 = pneg %p32
        $region26: #{fwd.13} parent=23 // pred_check_branch
          %133 = sbr.rel (%p131) target = $region28
        $region27: #{fwd.13} parent=23 // pred_region
          %p134 = scmp.lt.s32.totalorder %s12, 1
          %s135 = scalar_select %p134, %s12, 1
          %s136 = smul.addr %s135, 8
          %s137 = scalar_lea.vmem %s0, %s136
        $region28: #{fwd.13} parent=23 // pred_fallthru
          _
      $region24: #{fwd.13} parent=5 // pred_fallthru
        _
      %p138 = scmp.le.s32.totalorder 1, %s12
      %p139 = scmp.lt.s32.totalorder %s12, 3
      %p140 = pnand %p138, %p139
      %p141 = pneg %p140
      // Predicated region
      $region29: #{fwd.13} parent=5 // pred_check
        _
      $region30: #{fwd.13} parent=5 // pred_check_branch
        %143 = sbr.rel (%p140) target = $region32
      $region31: #{fwd.13} parent=5 // pred_region
        %s144 = ssub.s32 %s12, 1
        %p145 = scmp.lt.s32.totalorder %s17, 1
        %s146 = scalar_select %p145, %s17, 1
        %s147 = smul.addr %s146, 8
        %s148 = scalar_lea.vmem %s0, %s147
        %p149 = pneg %p38
        %p150 = pneg %p35
        %p151 = pneg %p59
        %p152 = pneg %p56
        %p153 = pneg %p80
        %p154 = pneg %p77
        %p155 = pneg %p106
        %p156 = pneg %p103
        %s157 = sand.u32 %s93, 1
        %s158 = scalar_lea.sflag [#allocation3], %s157
        %s159 = sand.u32 %s93, 1
        %s160 = smul.addr %s159, 8
        %s161 = scalar_lea.vmem [#allocation2], %s160
        %p162 = scmp.lt.s32.totalorder %s17, 1
        %s163 = scalar_select %p162, %s17, 1
        %s164 = smul.addr %s163, 8
        %s165 = scalar_lea.vmem %s0, %s164
        %v166 = vld [vmem:[%s165] sm:$0xff]
        %vm167 = vcmask 261120
        %v168 = vsel %vm167, %v166, 0.0
        %169 = vadd.xlane.f32.xlu0 %v168
        %v170 = vpop.xlane.xlu0 %169
        %v171 = vrcp.pop 32.0
        %v172 = vmul.f32 %v170, %v171
        %v173 = vsub.f32 %v166, %v172
        %v174 = vmul.f32 %v173, %v173
        %v175 = vsel %vm167, %v174, 0.0
        %176 = vadd.xlane.f32.xlu0 %v175
        %v177 = vpop.xlane.xlu0 %176
        %v178 = vmul.f32 %v177, %v171
        %v179 = vadd.f32 %v178, 1e-05
        %v180 = vrsqrt.pop %v179
        %v181 = vmul.f32 %v173, %v180
        %v182 = vld [vmem:[%s1] sm:$0x1]
        %v184 = vlaneseq
        %v185 = vshrl.u32 %v184, 7
        %v186 = vsub.s32 0, %v185
        %v187 = vrot.slane %v182, %v186
        %v189 = vmul.f32 %v181, %v187
        %v190 = vld [vmem:[%s2] sm:$0x1]
        %v192 = vlaneseq
        %v193 = vshrl.u32 %v192, 7
        %v194 = vsub.s32 0, %v193
        %v195 = vrot.slane %v190, %v194
        %v197 = vadd.f32 %v189, %v195
        %198 = vst.msk [vmem:[%s161] sm:$0xff] %vm167, %v197
        %s199 = sand.u32 %s93, 1
        %s200 = scalar_lea.sflag [#allocation3], %s199
        %s201 = sand.u32 %s93, 1
        %s202 = smul.addr %s201, 8
        %s203 = scalar_lea.vmem [#allocation2], %s202
        // Predicated region
        $region33: #{fwd.13} parent=31 // pred_check
          %p204 = pneg %p103
        $region34: #{fwd.13} parent=31 // pred_check_branch
          %206 = sbr.rel (%p204) target = $region36
        $region35: #{fwd.13} parent=31 // pred_region
          %s208 = ssub.s32 128, 128
          %209 = vsyncadd %s200, %s208
          %s210 = smul.addr %s17, 128
          %s211 = scalar_lea.hbm %s3, %s210
          %s213 = sshll.u32 %s203, 4
          %s214 = int_to_ptr.vmem [resolvable:$true] %s213
          %216 = dma.vmem_to_hbm [thread:$0]  %s214, 128, %s211, %s200
        $region36: #{fwd.13} parent=31 // pred_fallthru
          _
      $region32: #{fwd.13} parent=5 // pred_fallthru
        _
      %p217 = scmp.le.s32.totalorder 2, %s12
      // Predicated region
      $region37: #{fwd.13} parent=5 // pred_check
        %p218 = pneg %p217
      $region38: #{fwd.13} parent=5 // pred_check_branch
        %220 = sbr.rel (%p218) target = $region40
      $region39: #{fwd.13} parent=5 // pred_region
        %s221 = ssub.s32 %s12, 2
        // Predicated region
        $region41: #{fwd.13} parent=39 // pred_check
          %p222 = pneg %p109
        $region42: #{fwd.13} parent=39 // pred_check_branch
          %224 = sbr.rel (%p222) target = $region44
        $region43: #{fwd.13} parent=39 // pred_region
          %s225 = sand.u32 %s94, 1
          %s226 = scalar_lea.sflag [#allocation3], %s225
          %s227 = sand.u32 %s94, 1
          %s228 = smul.addr %s227, 8
          %s229 = scalar_lea.vmem [#allocation2], %s228
          %230 = dma.done %s226, 128
        $region44: #{fwd.13} parent=39 // pred_fallthru
          _
      $region40: #{fwd.13} parent=5 // pred_fallthru
        _
    $region6: #{fwd.13} parent=1 // loop_footer
      %s16 = sadd.s32 1, %s12
    $region7: #{fwd.13} parent=1 // loop_footer_branch
      %11 = sbr.rel target = $region3
    $region8: #{fwd.13} parent=1 // loop_exit
      _
    %231 = vsyncpa [#allocation3], 1
    %s232 = scalar_lea.sflag [#allocation3], 1
    %233 = vsyncpa %s232, 1

// kernel: fwd.8
$region0: #{fwd.8}
  #allocation0 [shape = 'u32[]', space=smem, size = 0x4, offset = 0x4, fixed_abs, tag = 'smem constant byte address 0x4 - core index']
  #allocation1 [shape = 'u32[144,128]{1,0:T(1,128)}', space=vmem, size = 0x12000, scoped, tag = 'internal scratch']
  #allocation2 [shape = 'f32[8,32]{1,0:T(8,128)}', space=vmem, size = 0x1000, scoped, tag = 'scratch operand']
  %s0 = inlined_call_operand.vmem [shape: f32[2,8,32], index: 0, kind: input, shape index: {}]
  %s1 = inlined_call_operand.vmem [shape: f32[2,8,32], index: 1, kind: input, shape index: {}]
  %s2 = inlined_call_operand.vmem [shape: bf16[32,32], index: 2, kind: input, shape index: {}]
  %s3 = inlined_call_operand.vmem [shape: f32[1,32], index: 3, kind: input, shape index: {}]
  %s4 = inlined_call_operand.vmem [shape: bf16[32,64], index: 4, kind: input, shape index: {}]
  %s5 = inlined_call_operand.vmem [shape: f32[1,64], index: 5, kind: input, shape index: {}]
  %s6 = inlined_call_operand.vmem [shape: bf16[32,32], index: 6, kind: input, shape index: {}]
  %s7 = inlined_call_operand.vmem [shape: f32[1,32], index: 7, kind: input, shape index: {}]
  %s8 = inlined_call_operand.vmem [shape: f32[1,32], index: 8, kind: input, shape index: {}]
  %s9 = inlined_call_operand.vmem [shape: f32[1,32], index: 9, kind: input, shape index: {}]
  %s10 = inlined_call_operand.vmem [shape: f32[2,8,32], index: 10, kind: output, shape index: {0}]
  %s11 = inlined_call_operand.hbm [shape: f32[2,4,8,8], index: 11, kind: output, shape index: {1}]
  %12 = xla_tuple %s10, %s11
  %s13 = sld [smem:[#allocation0]]
  $region81: #{fwd.8} parent=0
    _
  %s15 = ssub.s32 1, %s13
  %s16 = scalar_select 0, %s15, %s13
  $region1: #{fwd.8} parent=0
    #allocation3 [shape = 'u8[32768]{0}', space=vmem, size = 0x8000, scoped, tag = 'output window, operand 1']
    #allocation4 [shape = 's32[2]{0}', space=sflag, size = 0x8, scoped, tag = 'scoped memory for fwd.8']
    %17 = vsyncpa [#allocation4], 0
    %s18 = scalar_lea.sflag [#allocation4], 1
    %19 = vsyncpa %s18, 0
    loop: start=0, step=1, limit=4
    $region2: #{fwd.8} parent=1 // loop_pre_header
      _
    $region3: #{fwd.8} parent=1 // loop_header
      %s21 = sphi 0, %s25
      %p22 = scmp.ge.s32.totalorder %s21, 4
      %s31 = sphi 0, %s33
      %s34 = sphi 0, %s31
      %s35 = sphi 0, %s34
      %s51 = sphi 0, %s35
      %s57 = sphi 0, %s59
      %s60 = sphi 0, %s57
      %s61 = sphi 0, %s60
      %s77 = sphi 0, %s61
      %s81 = sphi 0, %s81
      %s83 = sphi 0, %s81
      %s84 = sphi 0, %s83
      %s98 = sphi 0, %s84
      %s102 = sphi 0, %s102
      %s104 = sphi 0, %s102
      %s105 = sphi 0, %s104
      %s119 = sphi 0, %s105
      %s123 = sphi 0, %s123
      %s125 = sphi 0, %s123
      %s126 = sphi 0, %s125
      %s140 = sphi 0, %s126
      %s144 = sphi 0, %s144
      %s146 = sphi 0, %s144
      %s147 = sphi 0, %s146
      %s161 = sphi 0, %s147
      %s165 = sphi 0, %s165
      %s167 = sphi 0, %s165
      %s168 = sphi 0, %s167
      %s182 = sphi 0, %s168
      %s186 = sphi 0, %s186
      %s188 = sphi 0, %s186
      %s189 = sphi 0, %s188
      %s203 = sphi 0, %s189
      %s207 = sphi 0, %s207
      %s209 = sphi 0, %s207
      %s210 = sphi 0, %s209
      %s224 = sphi 0, %s210
      %s228 = sphi 0, %s228
      %s230 = sphi 0, %s228
      %s231 = sphi 0, %s230
      %s245 = sphi 0, %s231
      %s251 = sphi 0, %s253
      %s254 = sphi 0, %s251
      %s255 = sphi 0, %s254
      %s271 = sphi 0, %s255
      %s277 = sphi 0, %s279
      %s280 = sphi 0, %s277
      %s281 = sphi 0, %s280
      %s297 = sphi 0, %s281
    $region4: #{fwd.8} parent=1 // loop_header_branch
      %24 = sbr.rel (%p22) target = $region8
    $region5: #{fwd.8} parent=1 // loop_body
      %s26 = ssub.s32 %s21, 1
      %s27 = ssub.s32 %s21, 2
      %s28 = sadd.s32 %s21, 1
      %s29 = ssub.s32 %s21, %s28
      %p30 = scmp.eq.s32.totalorder %s29, 0
      %s32 = sadd.s32 %s31, 1
      %s33 = scalar_select %p30, %s31, %s32
      %p36 = pneg %p30
      %p37 = scmp.eq.s32.totalorder %s21, 1
      %p38 = por %p36, %p37
      %p39 = scmp.ne.s32.totalorder %s31, %s34
      %p40 = scmp.eq.s32.totalorder %s21, 0
      %p41 = por %p39, %p40
      %p42 = scmp.ne.s32.totalorder %s31, %s34
      %p43 = scmp.eq.s32.totalorder %s26, 1
      %p44 = por %p42, %p43
      %p45 = scmp.ne.s32.totalorder %s34, %s35
      %p46 = scmp.eq.s32.totalorder %s26, 0
      %p47 = por %p45, %p46
      %p48 = scmp.ne.s32.totalorder %s34, %s35
      %p49 = scmp.eq.s32.totalorder %s27, 1
      %p50 = por %p48, %p49
      %p52 = scmp.ne.s32.totalorder %s35, %s51
      %p53 = scmp.eq.s32.totalorder %s27, 0
      %p54 = por %p52, %p53
      %s55 = ssub.s32 %s21, %s28
      %p56 = scmp.eq.s32.totalorder %s55, 0
      %s58 = sadd.s32 %s57, 1
      %s59 = scalar_select %p56, %s57, %s58
      %p62 = pneg %p56
      %p63 = scmp.eq.s32.totalorder %s21, 1
      %p64 = por %p62, %p63
      %p65 = scmp.ne.s32.totalorder %s57, %s60
      %p66 = scmp.eq.s32.totalorder %s21, 0
      %p67 = por %p65, %p66
      %p68 = scmp.ne.s32.totalorder %s57, %s60
      %p69 = scmp.eq.s32.totalorder %s26, 1
      %p70 = por %p68, %p69
      %p71 = scmp.ne.s32.totalorder %s60, %s61
      %p72 = scmp.eq.s32.totalorder %s26, 0
      %p73 = por %p71, %p72
      %p74 = scmp.ne.s32.totalorder %s60, %s61
      %p75 = scmp.eq.s32.totalorder %s27, 1
      %p76 = por %p74, %p75
      %p78 = scmp.ne.s32.totalorder %s61, %s77
      %p79 = scmp.eq.s32.totalorder %s27, 0
      %p80 = por %p78, %p79
      %s82 = sadd.s32 %s81, 1
      %p85 = scmp.eq.s32.totalorder %s21, 1
      %p86 = scmp.ne.s32.totalorder %s81, %s83
      %p87 = scmp.eq.s32.totalorder %s21, 0
      %p88 = por %p86, %p87
      %p89 = scmp.ne.s32.totalorder %s81, %s83
      %p90 = scmp.eq.s32.totalorder %s26, 1
      %p91 = por %p89, %p90
      %p92 = scmp.ne.s32.totalorder %s83, %s84
      %p93 = scmp.eq.s32.totalorder %s26, 0
      %p94 = por %p92, %p93
      %p95 = scmp.ne.s32.totalorder %s83, %s84
      %p96 = scmp.eq.s32.totalorder %s27, 1
      %p97 = por %p95, %p96
      %p99 = scmp.ne.s32.totalorder %s84, %s98
      %p100 = scmp.eq.s32.totalorder %s27, 0
      %p101 = por %p99, %p100
      %s103 = sadd.s32 %s102, 1
      %p106 = scmp.eq.s32.totalorder %s21, 1
      %p107 = scmp.ne.s32.totalorder %s102, %s104
      %p108 = scmp.eq.s32.totalorder %s21, 0
      %p109 = por %p107, %p108
      %p110 = scmp.ne.s32.totalorder %s102, %s104
      %p111 = scmp.eq.s32.totalorder %s26, 1
      %p112 = por %p110, %p111
      %p113 = scmp.ne.s32.totalorder %s104, %s105
      %p114 = scmp.eq.s32.totalorder %s26, 0
      %p115 = por %p113, %p114
      %p116 = scmp.ne.s32.totalorder %s104, %s105
      %p117 = scmp.eq.s32.totalorder %s27, 1
      %p118 = por %p116, %p117
      %p120 = scmp.ne.s32.totalorder %s105, %s119
      %p121 = scmp.eq.s32.totalorder %s27, 0
      %p122 = por %p120, %p121
      %s124 = sadd.s32 %s123, 1
      %p127 = scmp.eq.s32.totalorder %s21, 1
      %p128 = scmp.ne.s32.totalorder %s123, %s125
      %p129 = scmp.eq.s32.totalorder %s21, 0
      %p130 = por %p128, %p129
      %p131 = scmp.ne.s32.totalorder %s123, %s125
      %p132 = scmp.eq.s32.totalorder %s26, 1
      %p133 = por %p131, %p132
      %p134 = scmp.ne.s32.totalorder %s125, %s126
      %p135 = scmp.eq.s32.totalorder %s26, 0
      %p136 = por %p134, %p135
      %p137 = scmp.ne.s32.totalorder %s125, %s126
      %p138 = scmp.eq.s32.totalorder %s27, 1
      %p139 = por %p137, %p138
      %p141 = scmp.ne.s32.totalorder %s126, %s140
      %p142 = scmp.eq.s32.totalorder %s27, 0
      %p143 = por %p141, %p142
      %s145 = sadd.s32 %s144, 1
      %p148 = scmp.eq.s32.totalorder %s21, 1
      %p149 = scmp.ne.s32.totalorder %s144, %s146
      %p150 = scmp.eq.s32.totalorder %s21, 0
      %p151 = por %p149, %p150
      %p152 = scmp.ne.s32.totalorder %s144, %s146
      %p153 = scmp.eq.s32.totalorder %s26, 1
      %p154 = por %p152, %p153
      %p155 = scmp.ne.s32.totalorder %s146, %s147
      %p156 = scmp.eq.s32.totalorder %s26, 0
      %p157 = por %p155, %p156
      %p158 = scmp.ne.s32.totalorder %s146, %s147
      %p159 = scmp.eq.s32.totalorder %s27, 1
      %p160 = por %p158, %p159
      %p162 = scmp.ne.s32.totalorder %s147, %s161
      %p163 = scmp.eq.s32.totalorder %s27, 0
      %p164 = por %p162, %p163
      %s166 = sadd.s32 %s165, 1
      %p169 = scmp.eq.s32.totalorder %s21, 1
      %p170 = scmp.ne.s32.totalorder %s165, %s167
      %p171 = scmp.eq.s32.totalorder %s21, 0
      %p172 = por %p170, %p171
      %p173 = scmp.ne.s32.totalorder %s165, %s167
      %p174 = scmp.eq.s32.totalorder %s26, 1
      %p175 = por %p173, %p174
      %p176 = scmp.ne.s32.totalorder %s167, %s168
      %p177 = scmp.eq.s32.totalorder %s26, 0
      %p178 = por %p176, %p177
      %p179 = scmp.ne.s32.totalorder %s167, %s168
      %p180 = scmp.eq.s32.totalorder %s27, 1
      %p181 = por %p179, %p180
      %p183 = scmp.ne.s32.totalorder %s168, %s182
      %p184 = scmp.eq.s32.totalorder %s27, 0
      %p185 = por %p183, %p184
      %s187 = sadd.s32 %s186, 1
      %p190 = scmp.eq.s32.totalorder %s21, 1
      %p191 = scmp.ne.s32.totalorder %s186, %s188
      %p192 = scmp.eq.s32.totalorder %s21, 0
      %p193 = por %p191, %p192
      %p194 = scmp.ne.s32.totalorder %s186, %s188
      %p195 = scmp.eq.s32.totalorder %s26, 1
      %p196 = por %p194, %p195
      %p197 = scmp.ne.s32.totalorder %s188, %s189
      %p198 = scmp.eq.s32.totalorder %s26, 0
      %p199 = por %p197, %p198
      %p200 = scmp.ne.s32.totalorder %s188, %s189
      %p201 = scmp.eq.s32.totalorder %s27, 1
      %p202 = por %p200, %p201
      %p204 = scmp.ne.s32.totalorder %s189, %s203
      %p205 = scmp.eq.s32.totalorder %s27, 0
      %p206 = por %p204, %p205
      %s208 = sadd.s32 %s207, 1
      %p211 = scmp.eq.s32.totalorder %s21, 1
      %p212 = scmp.ne.s32.totalorder %s207, %s209
      %p213 = scmp.eq.s32.totalorder %s21, 0
      %p214 = por %p212, %p213
      %p215 = scmp.ne.s32.totalorder %s207, %s209
      %p216 = scmp.eq.s32.totalorder %s26, 1
      %p217 = por %p215, %p216
      %p218 = scmp.ne.s32.totalorder %s209, %s210
      %p219 = scmp.eq.s32.totalorder %s26, 0
      %p220 = por %p218, %p219
      %p221 = scmp.ne.s32.totalorder %s209, %s210
      %p222 = scmp.eq.s32.totalorder %s27, 1
      %p223 = por %p221, %p222
      %p225 = scmp.ne.s32.totalorder %s210, %s224
      %p226 = scmp.eq.s32.totalorder %s27, 0
      %p227 = por %p225, %p226
      %s229 = sadd.s32 %s228, 1
      %p232 = scmp.eq.s32.totalorder %s21, 1
      %p233 = scmp.ne.s32.totalorder %s228, %s230
      %p234 = scmp.eq.s32.totalorder %s21, 0
      %p235 = por %p233, %p234
      %p236 = scmp.ne.s32.totalorder %s228, %s230
      %p237 = scmp.eq.s32.totalorder %s26, 1
      %p238 = por %p236, %p237
      %p239 = scmp.ne.s32.totalorder %s230, %s231
      %p240 = scmp.eq.s32.totalorder %s26, 0
      %p241 = por %p239, %p240
      %p242 = scmp.ne.s32.totalorder %s230, %s231
      %p243 = scmp.eq.s32.totalorder %s27, 1
      %p244 = por %p242, %p243
      %p246 = scmp.ne.s32.totalorder %s231, %s245
      %p247 = scmp.eq.s32.totalorder %s27, 0
      %p248 = por %p246, %p247
      %s249 = ssub.s32 %s21, %s28
      %p250 = scmp.eq.s32.totalorder %s249, 0
      %s252 = sadd.s32 %s251, 1
      %s253 = scalar_select %p250, %s251, %s252
      %p256 = pneg %p250
      %p257 = scmp.eq.s32.totalorder %s21, 1
      %p258 = por %p256, %p257
      %p259 = scmp.ne.s32.totalorder %s251, %s254
      %p260 = scmp.eq.s32.totalorder %s21, 0
      %p261 = por %p259, %p260
      %p262 = scmp.ne.s32.totalorder %s251, %s254
      %p263 = scmp.eq.s32.totalorder %s26, 1
      %p264 = por %p262, %p263
      %p265 = scmp.ne.s32.totalorder %s254, %s255
      %p266 = scmp.eq.s32.totalorder %s26, 0
      %p267 = por %p265, %p266
      %p268 = scmp.ne.s32.totalorder %s254, %s255
      %p269 = scmp.eq.s32.totalorder %s27, 1
      %p270 = por %p268, %p269
      %p272 = scmp.ne.s32.totalorder %s255, %s271
      %p273 = scmp.eq.s32.totalorder %s27, 0
      %p274 = por %p272, %p273
      %s275 = ssub.s32 %s21, %s28
      %p276 = scmp.eq.s32.totalorder %s275, 0
      %s278 = sadd.s32 %s277, 1
      %s279 = scalar_select %p276, %s277, %s278
      %p282 = pneg %p276
      %p283 = scmp.eq.s32.totalorder %s21, 1
      %p284 = por %p282, %p283
      %p285 = scmp.ne.s32.totalorder %s277, %s280
      %p286 = scmp.eq.s32.totalorder %s21, 0
      %p287 = por %p285, %p286
      %p288 = scmp.ne.s32.totalorder %s277, %s280
      %p289 = scmp.eq.s32.totalorder %s26, 1
      %p290 = por %p288, %p289
      %p291 = scmp.ne.s32.totalorder %s280, %s281
      %p292 = scmp.eq.s32.totalorder %s26, 0
      %p293 = por %p291, %p292
      %p294 = scmp.ne.s32.totalorder %s280, %s281
      %p295 = scmp.eq.s32.totalorder %s27, 1
      %p296 = por %p294, %p295
      %p298 = scmp.ne.s32.totalorder %s281, %s297
      %p299 = scmp.eq.s32.totalorder %s27, 0
      %p300 = por %p298, %p299
      %p301 = scmp.le.s32.totalorder 1, %s21
      %p302 = scmp.lt.s32.totalorder %s21, 3
      %p303 = pnand %p301, %p302
      %p304 = pneg %p303
      // Predicated region
      $region9: #{fwd.8} parent=5 // pred_check
        _
      $region10: #{fwd.8} parent=5 // pred_check_branch
        %306 = sbr.rel (%p303) target = $region12
      $region11: #{fwd.8} parent=5 // pred_region
        %s307 = ssub.s32 %s21, 1
        // Predicated region
        $region13: #{fwd.8} parent=11 // pred_check
          %p308 = pneg %p94
        $region14: #{fwd.8} parent=11 // pred_check_branch
          %310 = sbr.rel (%p308) target = $region16
        $region15: #{fwd.8} parent=11 // pred_region
          _
        $region16: #{fwd.8} parent=11 // pred_fallthru
          _
        // Predicated region
        $region17: #{fwd.8} parent=11 // pred_check
          %p311 = pneg %p115
        $region18: #{fwd.8} parent=11 // pred_check_branch
          %313 = sbr.rel (%p311) target = $region20
        $region19: #{fwd.8} parent=11 // pred_region
          _
        $region20: #{fwd.8} parent=11 // pred_fallthru
          _
        // Predicated region
        $region21: #{fwd.8} parent=11 // pred_check
          %p314 = pneg %p136
        $region22: #{fwd.8} parent=11 // pred_check_branch
          %316 = sbr.rel (%p314) target = $region24
        $region23: #{fwd.8} parent=11 // pred_region
          _
        $region24: #{fwd.8} parent=11 // pred_fallthru
          _
        // Predicated region
        $region25: #{fwd.8} parent=11 // pred_check
          %p317 = pneg %p157
        $region26: #{fwd.8} parent=11 // pred_check_branch
          %319 = sbr.rel (%p317) target = $region28
        $region27: #{fwd.8} parent=11 // pred_region
          _
        $region28: #{fwd.8} parent=11 // pred_fallthru
          _
        // Predicated region
        $region29: #{fwd.8} parent=11 // pred_check
          %p320 = pneg %p178
        $region30: #{fwd.8} parent=11 // pred_check_branch
          %322 = sbr.rel (%p320) target = $region32
        $region31: #{fwd.8} parent=11 // pred_region
          _
        $region32: #{fwd.8} parent=11 // pred_fallthru
          _
        // Predicated region
        $region33: #{fwd.8} parent=11 // pred_check
          %p323 = pneg %p199
        $region34: #{fwd.8} parent=11 // pred_check_branch
          %325 = sbr.rel (%p323) target = $region36
        $region35: #{fwd.8} parent=11 // pred_region
          _
        $region36: #{fwd.8} parent=11 // pred_fallthru
          _
        // Predicated region
        $region37: #{fwd.8} parent=11 // pred_check
          %p326 = pneg %p220
        $region38: #{fwd.8} parent=11 // pred_check_branch
          %328 = sbr.rel (%p326) target = $region40
        $region39: #{fwd.8} parent=11 // pred_region
          _
        $region40: #{fwd.8} parent=11 // pred_fallthru
          _
        // Predicated region
        $region41: #{fwd.8} parent=11 // pred_check
          %p329 = pneg %p241
        $region42: #{fwd.8} parent=11 // pred_check_branch
          %331 = sbr.rel (%p329) target = $region44
        $region43: #{fwd.8} parent=11 // pred_region
          _
        $region44: #{fwd.8} parent=11 // pred_fallthru
          _
      $region12: #{fwd.8} parent=5 // pred_fallthru
        _
      %p332 = scmp.lt.s32.totalorder %s21, 2
      // Predicated region
      $region45: #{fwd.8} parent=5 // pred_check
        %p333 = pneg %p332
      $region46: #{fwd.8} parent=5 // pred_check_branch
        %335 = sbr.rel (%p333) target = $region48
      $region47: #{fwd.8} parent=5 // pred_region
        // Predicated region
        $region49: #{fwd.8} parent=47 // pred_check
          %p336 = pneg %p41
        $region50: #{fwd.8} parent=47 // pred_check_branch
          %338 = sbr.rel (%p336) target = $region52
        $region51: #{fwd.8} parent=47 // pred_region
          %p339 = scmp.lt.s32.totalorder %s21, 1
          %s340 = scalar_select %p339, %s21, 1
          %s341 = smul.addr %s340, 8
          %s342 = scalar_lea.vmem %s0, %s341
        $region52: #{fwd.8} parent=47 // pred_fallthru
          _
        // Predicated region
        $region53: #{fwd.8} parent=47 // pred_check
          %p343 = pneg %p67
        $region54: #{fwd.8} parent=47 // pred_check_branch
          %345 = sbr.rel (%p343) target = $region56
        $region55: #{fwd.8} parent=47 // pred_region
          %p346 = scmp.lt.s32.totalorder %s21, 1
          %s347 = scalar_select %p346, %s21, 1
          %s348 = smul.addr %s347, 8
          %s349 = scalar_lea.vmem %s1, %s348
        $region56: #{fwd.8} parent=47 // pred_fallthru
          _
      $region48: #{fwd.8} parent=5 // pred_fallthru
        _
      %p350 = scmp.le.s32.totalorder 1, %s21
      %p351 = scmp.lt.s32.totalorder %s21, 3
      %p352 = pnand %p350, %p351
      %p353 = pneg %p352
      // Predicated region
      $region57: #{fwd.8} parent=5 // pred_check
        _
      $region58: #{fwd.8} parent=5 // pred_check_branch
        %355 = sbr.rel (%p352) target = $region60
      $region59: #{fwd.8} parent=5 // pred_region
        %s356 = ssub.s32 %s21, 1
        %p357 = scmp.lt.s32.totalorder %s26, 1
        %s358 = scalar_select %p357, %s26, 1
        %s359 = smul.addr %s358, 8
        %s360 = scalar_lea.vmem %s0, %s359
        %p361 = pneg %p47
        %p362 = pneg %p44
        %p363 = scmp.lt.s32.totalorder %s26, 1
        %s364 = scalar_select %p363, %s26, 1
        %s365 = smul.addr %s364, 8
        %s366 = scalar_lea.vmem %s1, %s365
        %p367 = pneg %p73
        %p368 = pneg %p70
        %p369 = pneg %p94
        %p370 = pneg %p91
        %p371 = pneg %p115
        %p372 = pneg %p112
        %p373 = pneg %p136
        %p374 = pneg %p133
        %p375 = pneg %p157
        %p376 = pneg %p154
        %p377 = pneg %p178
        %p378 = pneg %p175
        %p379 = pneg %p199
        %p380 = pneg %p196
        %p381 = pneg %p220
        %p382 = pneg %p217
        %p383 = pneg %p241
        %p384 = pneg %p238
        %p385 = pneg %p267
        %p386 = pneg %p264
        %p387 = scmp.lt.s32.totalorder %s26, 1
        %s388 = scalar_select %p387, %s26, 1
        %s389 = smul.addr %s388, 8
        %s390 = scalar_lea.vmem %s10, %s389
        %p391 = pneg %p293
        %p392 = pneg %p290
        %s393 = sand.u32 %s280, 1
        %s394 = scalar_lea.sflag [#allocation4], %s393
        %s395 = sand.u32 %s280, 1
        %s396 = smul.addr %s395, 32
        %s397 = scalar_lea.vmem [#allocation3], %s396
        %p398 = scmp.lt.s32.totalorder %s26, 1
        %s399 = scalar_select %p398, %s26, 1
        %s400 = smul.addr %s399, 8
        %s401 = scalar_lea.vmem %s0, %s400
        %p402 = scmp.lt.s32.totalorder %s26, 1
        %s403 = scalar_select %p402, %s26, 1
        %s404 = smul.addr %s403, 8
        %s405 = scalar_lea.vmem %s1, %s404
        %p406 = scmp.lt.s32.totalorder %s26, 1
        %s407 = scalar_select %p406, %s26, 1
        %s408 = smul.addr %s407, 8
        %s409 = scalar_lea.vmem %s10, %s408
        %v411 = vld [vmem:[%s401] sm:$0xff]
        %v412 = vld [vmem:[%s405] sm:$0xff]
        %v413 = vpack.c.bf16 %v411, %v411
        %v414 = vld [vmem:[%s2] sm:$0xf]
        %v415 = vld [vmem:[%s2 + $0x4] sm:$0xf]
        %v416 = vld [vmem:[%s2 + $0x8] sm:$0xf]
        %v417 = vld [vmem:[%s2 + $0xc] sm:$0xf]
        %v418 = vld [vmem:[%s3] sm:$0x1]
        %v420 = vlaneseq
        %v421 = vshrl.u32 %v420, 7
        %v422 = vsub.s32 0, %v421
        %v423 = vrot.slane %v418, %v422
        %v429 = vunpack.c.l.b16 %v414
        %v430 = vunpack.c.l.b16 %v415
        %v431 = vunpack.c.l.b16 %v416
        %v432 = vunpack.c.l.b16 %v417
        %v433 = vpack.c.b16 %v430, %v429
        %v434 = vpack.c.b16 %v432, %v431
        %vm437 = vcmask 261120
        %v439 = vsel %vm437, %v413, 0
        %441 = vmatprep.subr.bf16.mxu0 0
        %442 = vmatpush1.bf16.msra.mxu0 0
        %443 = vmatprep.subr.bf16.mxu0 0
        %444 = vmatpush1.bf16.msra.mxu0 0
        %445 = vmatprep.subr.bf16.mxu0 0
        %446 = vmatpush1.bf16.msra.mxu0 0
        %447 = vmatprep.subr.bf16.mxu0 0
        %448 = vmatpush1.bf16.msra.mxu0 0
        %449 = vmatprep.subr.bf16.mxu0 0
        %450 = vmatpush1.bf16.msra.mxu0 0
        %451 = vmatprep.subr.bf16.mxu0 0
        %452 = vmatpush1.bf16.msra.mxu0 0
        %453 = vmatprep.subr.bf16.mxu0 0
        %454 = vmatpush1.bf16.msra.mxu0 %v434
        %455 = vmatprep.subr.bf16.mxu0 0
        %456 = vmatpush1.bf16.msra.mxu0 %v433
        %457 = vmatprep.subr.bf16.mxu0 0
        %458 = vmatpush2.bf16.msra.mxu0 0
        %459 = vmatprep.subr.bf16.mxu0 0
        %460 = vmatpush2.bf16.msra.mxu0 0
        %461 = vmatprep.subr.bf16.mxu0 0
        %462 = vmatpush2.bf16.msra.mxu0 0
        %463 = vmatprep.subr.bf16.mxu0 0
        %464 = vmatpush2.bf16.msra.mxu0 0
        %465 = vmatprep.subr.bf16.mxu0 0
        %466 = vmatpush2.bf16.msra.mxu0 0
        %467 = vmatprep.subr.bf16.mxu0 0
        %468 = vmatpush2.bf16.msra.mxu0 0
        %469 = vmatprep.subr.bf16.mxu0 0
        %470 = vmatpush2.bf16.msra.mxu0 0
        %471 = vmatprep.subr.bf16.mxu0 0
        %472 = vmatpush2.bf16.msra.mxu0 0
        %473 = vmatprep.mubr.bf16.mxu0 0
        %474 = vmatmul.mubr.bf16.gmra.mxu0 %v439
        %v475 = vpop.f32.mrf.mxu0
        %v476 = vadd.f32 %v423, %v475
        %v477 = vpop.f32.mrf.mxu0
        %v478 = vpop.f32.mrf.mxu0
        %v479 = vpop.f32.mrf.mxu0
        %480 = vdwg.mxu0
        %v481 = vmul.f32 %v476, 0.35355338
        %v482 = vpack.c.bf16 %v412, %v412
        %v483 = vld [vmem:[%s4] sm:$0xf]
        %v484 = vld [vmem:[%s4 + $0x4] sm:$0xf]
        %v485 = vld [vmem:[%s4 + $0x8] sm:$0xf]
        %v486 = vld [vmem:[%s4 + $0xc] sm:$0xf]
        %v487 = vld [vmem:[%s5] sm:$0x1]
        %v489 = vlaneseq
        %v490 = vshrl.u32 %v489, 7
        %v491 = vsub.s32 0, %v490
        %v492 = vrot.slane %v487, %v491
        %v498 = vunpack.c.l.b16 %v483
        %v499 = vunpack.c.l.b16 %v484
        %v500 = vunpack.c.l.b16 %v485
        %v501 = vunpack.c.l.b16 %v486
        %v502 = vpack.c.b16 %v499, %v498
        %v503 = vpack.c.b16 %v501, %v500
        %v507 = vsel %vm437, %v482, 0
        %509 = vmatprep.subr.bf16.mxu0 0
        %510 = vmatpush1.bf16.msra.mxu0 0
        %511 = vmatprep.subr.bf16.mxu0 0
        %512 = vmatpush1.bf16.msra.mxu0 0
        %513 = vmatprep.subr.bf16.mxu0 0
        %514 = vmatpush1.bf16.msra.mxu0 0
        %515 = vmatprep.subr.bf16.mxu0 0
        %516 = vmatpush1.bf16.msra.mxu0 0
        %517 = vmatprep.subr.bf16.mxu0 0
        %518 = vmatpush1.bf16.msra.mxu0 0
        %519 = vmatprep.subr.bf16.mxu0 0
        %520 = vmatpush1.bf16.msra.mxu0 0
        %521 = vmatprep.subr.bf16.mxu0 0
        %522 = vmatpush1.bf16.msra.mxu0 %v503
        %523 = vmatprep.subr.bf16.mxu0 0
        %524 = vmatpush1.bf16.msra.mxu0 %v502
        %525 = vmatprep.subr.bf16.mxu0 0
        %526 = vmatpush2.bf16.msra.mxu0 0
        %527 = vmatprep.subr.bf16.mxu0 0
        %528 = vmatpush2.bf16.msra.mxu0 0
        %529 = vmatprep.subr.bf16.mxu0 0
        %530 = vmatpush2.bf16.msra.mxu0 0
        %531 = vmatprep.subr.bf16.mxu0 0
        %532 = vmatpush2.bf16.msra.mxu0 0
        %533 = vmatprep.subr.bf16.mxu0 0
        %534 = vmatpush2.bf16.msra.mxu0 0
        %535 = vmatprep.subr.bf16.mxu0 0
        %536 = vmatpush2.bf16.msra.mxu0 0
        %537 = vmatprep.subr.bf16.mxu0 0
        %538 = vmatpush2.bf16.msra.mxu0 0
        %539 = vmatprep.subr.bf16.mxu0 0
        %540 = vmatpush2.bf16.msra.mxu0 0
        %541 = vmatprep.mubr.bf16.mxu0 0
        %542 = vmatmul.mubr.bf16.gmra.mxu0 %v507
        %v543 = vpop.f32.mrf.mxu0
        %v544 = vadd.f32 %v492, %v543
        %v545 = vpop.f32.mrf.mxu0
        %v546 = vpop.f32.mrf.mxu0
        %v547 = vpop.f32.mrf.mxu0
        %548 = vdwg.mxu0
        %v549 = vpack.c.bf16 %v481, %v481
        %v550 = vpack.c.bf16 %v544, %v544
        %vm551 = vcmask 64512
        %v553 = vsel %vm551, %v549, 0
        %v556 = vsel %vm551, %v550, 0
        %558 = vmatprep.subr.bf16.mxu0 0
        %559 = vmatpush1.bf16.xpose.msra.mxu0 0
        %560 = vmatprep.subr.bf16.mxu0 0
        %561 = vmatpush1.bf16.xpose.msra.mxu0 0
        %562 = vmatprep.subr.bf16.mxu0 0
        %563 = vmatpush1.bf16.xpose.msra.mxu0 0
        %564 = vmatprep.subr.bf16.mxu0 0
        %565 = vmatpush1.bf16.xpose.msra.mxu0 0
        %566 = vmatprep.subr.bf16.mxu0 0
        %567 = vmatpush1.bf16.xpose.msra.mxu0 0
        %568 = vmatprep.subr.bf16.mxu0 0
        %569 = vmatpush1.bf16.xpose.msra.mxu0 0
        %570 = vmatprep.subr.bf16.mxu0 0
        %571 = vmatpush1.bf16.xpose.msra.mxu0 0
        %572 = vmatprep.subr.bf16.mxu0 0
        %573 = vmatpush1.bf16.xpose.msra.mxu0 %v556
        %574 = vmatprep.subr.bf16.mxu0 0
        %575 = vmatpush2.bf16.xpose.msra.mxu0 0
        %576 = vmatprep.subr.bf16.mxu0 0
        %577 = vmatpush2.bf16.xpose.msra.mxu0 0
        %578 = vmatprep.subr.bf16.mxu0 0
        %579 = vmatpush2.bf16.xpose.msra.mxu0 0
        %580 = vmatprep.subr.bf16.mxu0 0
        %581 = vmatpush2.bf16.xpose.msra.mxu0 0
        %582 = vmatprep.subr.bf16.mxu0 0
        %583 = vmatpush2.bf16.xpose.msra.mxu0 0
        %584 = vmatprep.subr.bf16.mxu0 0
        %585 = vmatpush2.bf16.xpose.msra.mxu0 0
        %586 = vmatprep.subr.bf16.mxu0 0
        %587 = vmatpush2.bf16.xpose.msra.mxu0 0
        %588 = vmatprep.subr.bf16.mxu0 0
        %589 = vmatpush2.bf16.xpose.msra.mxu0 0
        %590 = vmatprep.mubr.bf16.mxu0 0
        %591 = vmatmul.mubr.bf16.gmra.mxu0 %v553
        %v592 = vpop.f32.mrf.mxu0
        %v593 = vadd.f32 0.0, %v592
        %v594 = vpop.f32.mrf.mxu0
        %v595 = vpop.f32.mrf.mxu0
        %v596 = vpop.f32.mrf.mxu0
        %597 = vdwg.mxu0
        %v598 = vsel %vm551, %v593, -inf
        %599 = vmax.xlane.f32.xlu0 %v598
        %v600 = vpop.xlane.xlu0 %599
        %v601 = vsub.f32 %v593, %v600
        %v602 = vmul.f32 %v601, 1.442695
        %v603 = vpow.pop %v602
        %v604 = vsel %vm551, %v603, 0.0
        %605 = vadd.xlane.f32.xlu0 %v604
        %v606 = vpop.xlane.xlu0 %605
        %v607 = vrcp.pop %v606
        %v608 = vmul.f32 %v603, %v607
        %609 = vst.msk [vmem:[%s397] sm:$0xff] %vm551, %v608
        %v610 = vpack.c.bf16 %v608, %v608
        %612 = vrot.lane.b32.xlu0 %v550, 96
        %v613 = vpop.permute.xlu0 %612
        %v615 = vsel %vm551, %v610, 0
        %vm617 = vcmask 1043456
        %v619 = vsel %vm617, %v613, 0
        %621 = vmatprep.subr.bf16.mxu0 0
        %622 = vmatpush1.bf16.msra.mxu0 0
        %623 = vmatprep.subr.bf16.mxu0 0
        %624 = vmatpush1.bf16.msra.mxu0 0
        %625 = vmatprep.subr.bf16.mxu0 0
        %626 = vmatpush1.bf16.msra.mxu0 0
        %627 = vmatprep.subr.bf16.mxu0 0
        %628 = vmatpush1.bf16.msra.mxu0 0
        %629 = vmatprep.subr.bf16.mxu0 0
        %630 = vmatpush1.bf16.msra.mxu0 0
        %631 = vmatprep.subr.bf16.mxu0 0
        %632 = vmatpush1.bf16.msra.mxu0 0
        %633 = vmatprep.subr.bf16.mxu0 0
        %634 = vmatpush1.bf16.msra.mxu0 0
        %635 = vmatprep.subr.bf16.mxu0 0
        %636 = vmatpush1.bf16.msra.mxu0 %v619
        %637 = vmatprep.subr.bf16.mxu0 0
        %638 = vmatpush2.bf16.msra.mxu0 0
        %639 = vmatprep.subr.bf16.mxu0 0
        %640 = vmatpush2.bf16.msra.mxu0 0
        %641 = vmatprep.subr.bf16.mxu0 0
        %642 = vmatpush2.bf16.msra.mxu0 0
        %643 = vmatprep.subr.bf16.mxu0 0
        %644 = vmatpush2.bf16.msra.mxu0 0
        %645 = vmatprep.subr.bf16.mxu0 0
        %646 = vmatpush2.bf16.msra.mxu0 0
        %647 = vmatprep.subr.bf16.mxu0 0
        %648 = vmatpush2.bf16.msra.mxu0 0
        %649 = vmatprep.subr.bf16.mxu0 0
        %650 = vmatpush2.bf16.msra.mxu0 0
        %651 = vmatprep.subr.bf16.mxu0 0
        %652 = vmatpush2.bf16.msra.mxu0 0
        %653 = vmatprep.mubr.bf16.mxu0 0
        %654 = vmatmul.mubr.bf16.gmra.mxu0 %v615
        %v655 = vpop.f32.mrf.mxu0
        %v656 = vadd.f32 0.0, %v655
        %v657 = vpop.f32.mrf.mxu0
        %v658 = vpop.f32.mrf.mxu0
        %v659 = vpop.f32.mrf.mxu0
        %660 = vdwg.mxu0
        %661 = vst.msk [vmem:[#allocation2] sm:$0xff] %vm551, %v656
        %663 = vrot.lane.b32.xlu0 %v549, 120
        %v664 = vpop.permute.xlu0 %663
        %665 = vrot.lane.b32.xlu0 %v550, 120
        %v666 = vpop.permute.xlu0 %665
        %v668 = vsel %vm551, %v664, 0
        %v671 = vsel %vm551, %v666, 0
        %673 = vmatprep.subr.bf16.mxu0 0
        %674 = vmatpush1.bf16.xpose.msra.mxu0 0
        %675 = vmatprep.subr.bf16.mxu0 0
        %676 = vmatpush1.bf16.xpose.msra.mxu0 0
        %677 = vmatprep.subr.bf16.mxu0 0
        %678 = vmatpush1.bf16.xpose.msra.mxu0 0
        %679 = vmatprep.subr.bf16.mxu0 0
        %680 = vmatpush1.bf16.xpose.msra.mxu0 0
        %681 = vmatprep.subr.bf16.mxu0 0
        %682 = vmatpush1.bf16.xpose.msra.mxu0 0
        %683 = vmatprep.subr.bf16.mxu0 0
        %684 = vmatpush1.bf16.xpose.msra.mxu0 0
        %685 = vmatprep.subr.bf16.mxu0 0
        %686 = vmatpush1.bf16.xpose.msra.mxu0 0
        %687 = vmatprep.subr.bf16.mxu0 0
        %688 = vmatpush1.bf16.xpose.msra.mxu0 %v671
        %689 = vmatprep.subr.bf16.mxu0 0
        %690 = vmatpush2.bf16.xpose.msra.mxu0 0
        %691 = vmatprep.subr.bf16.mxu0 0
        %692 = vmatpush2.bf16.xpose.msra.mxu0 0
        %693 = vmatprep.subr.bf16.mxu0 0
        %694 = vmatpush2.bf16.xpose.msra.mxu0 0
        %695 = vmatprep.subr.bf16.mxu0 0
        %696 = vmatpush2.bf16.xpose.msra.mxu0 0
        %697 = vmatprep.subr.bf16.mxu0 0
        %698 = vmatpush2.bf16.xpose.msra.mxu0 0
        %699 = vmatprep.subr.bf16.mxu0 0
        %700 = vmatpush2.bf16.xpose.msra.mxu0 0
        %701 = vmatprep.subr.bf16.mxu0 0
        %702 = vmatpush2.bf16.xpose.msra.mxu0 0
        %703 = vmatprep.subr.bf16.mxu0 0
        %704 = vmatpush2.bf16.xpose.msra.mxu0 0
        %705 = vmatprep.mubr.bf16.mxu0 0
        %706 = vmatmul.mubr.bf16.gmra.mxu0 %v668
        %v707 = vpop.f32.mrf.mxu0
        %v708 = vadd.f32 0.0, %v707
        %v709 = vpop.f32.mrf.mxu0
        %v710 = vpop.f32.mrf.mxu0
        %v711 = vpop.f32.mrf.mxu0
        %712 = vdwg.mxu0
        %v713 = vsel %vm551, %v708, -inf
        %714 = vmax.xlane.f32.xlu0 %v713
        %v715 = vpop.xlane.xlu0 %714
        %v716 = vsub.f32 %v708, %v715
        %v717 = vmul.f32 %v716, 1.442695
        %v718 = vpow.pop %v717
        %v719 = vsel %vm551, %v718, 0.0
        %720 = vadd.xlane.f32.xlu0 %v719
        %v721 = vpop.xlane.xlu0 %720
        %v722 = vrcp.pop %v721
        %v723 = vmul.f32 %v718, %v722
        %s724 = scalar_lea.vmem %s397, 8 [#allocation3]
        %725 = vst.msk [vmem:[%s724] sm:$0xff] %vm551, %v723
        %v726 = vpack.c.bf16 %v723, %v723
        %727 = vrot.lane.b32.xlu0 %v550, 88
        %v728 = vpop.permute.xlu0 %727
        %v730 = vsel %vm551, %v726, 0
        %v733 = vsel %vm617, %v728, 0
        %735 = vmatprep.subr.bf16.mxu0 0
        %736 = vmatpush1.bf16.msra.mxu0 0
        %737 = vmatprep.subr.bf16.mxu0 0
        %738 = vmatpush1.bf16.msra.mxu0 0
        %739 = vmatprep.subr.bf16.mxu0 0
        %740 = vmatpush1.bf16.msra.mxu0 0
        %741 = vmatprep.subr.bf16.mxu0 0
        %742 = vmatpush1.bf16.msra.mxu0 0
        %743 = vmatprep.subr.bf16.mxu0 0
        %744 = vmatpush1.bf16.msra.mxu0 0
        %745 = vmatprep.subr.bf16.mxu0 0
        %746 = vmatpush1.bf16.msra.mxu0 0
        %747 = vmatprep.subr.bf16.mxu0 0
        %748 = vmatpush1.bf16.msra.mxu0 0
        %749 = vmatprep.subr.bf16.mxu0 0
        %750 = vmatpush1.bf16.msra.mxu0 %v733
        %751 = vmatprep.subr.bf16.mxu0 0
        %752 = vmatpush2.bf16.msra.mxu0 0
        %753 = vmatprep.subr.bf16.mxu0 0
        %754 = vmatpush2.bf16.msra.mxu0 0
        %755 = vmatprep.subr.bf16.mxu0 0
        %756 = vmatpush2.bf16.msra.mxu0 0
        %757 = vmatprep.subr.bf16.mxu0 0
        %758 = vmatpush2.bf16.msra.mxu0 0
        %759 = vmatprep.subr.bf16.mxu0 0
        %760 = vmatpush2.bf16.msra.mxu0 0
        %761 = vmatprep.subr.bf16.mxu0 0
        %762 = vmatpush2.bf16.msra.mxu0 0
        %763 = vmatprep.subr.bf16.mxu0 0
        %764 = vmatpush2.bf16.msra.mxu0 0
        %765 = vmatprep.subr.bf16.mxu0 0
        %766 = vmatpush2.bf16.msra.mxu0 0
        %767 = vmatprep.mubr.bf16.mxu0 0
        %768 = vmatmul.mubr.bf16.gmra.mxu0 %v730
        %v769 = vpop.f32.mrf.mxu0
        %v770 = vadd.f32 0.0, %v769
        %v771 = vpop.f32.mrf.mxu0
        %v772 = vpop.f32.mrf.mxu0
        %v773 = vpop.f32.mrf.mxu0
        %774 = vdwg.mxu0
        %776 = vrot.lane.b32.xlu0 %v770, 8
        %v777 = vpop.permute.xlu0 %776
        %vm779 = vcmask 130112
        %780 = vst.msk [vmem:[#allocation2] sm:$0xff] %vm779, %v777
        %781 = vrot.lane.b32.xlu0 %v549, 112
        %v782 = vpop.permute.xlu0 %781
        %783 = vrot.lane.b32.xlu0 %v550, 112
        %v784 = vpop.permute.xlu0 %783
        %v786 = vsel %vm551, %v782, 0
        %v789 = vsel %vm551, %v784, 0
        %791 = vmatprep.subr.bf16.mxu0 0
        %792 = vmatpush1.bf16.xpose.msra.mxu0 0
        %793 = vmatprep.subr.bf16.mxu0 0
        %794 = vmatpush1.bf16.xpose.msra.mxu0 0
        %795 = vmatprep.subr.bf16.mxu0 0
        %796 = vmatpush1.bf16.xpose.msra.mxu0 0
        %797 = vmatprep.subr.bf16.mxu0 0
        %798 = vmatpush1.bf16.xpose.msra.mxu0 0
        %799 = vmatprep.subr.bf16.mxu0 0
        %800 = vmatpush1.bf16.xpose.msra.mxu0 0
        %801 = vmatprep.subr.bf16.mxu0 0
        %802 = vmatpush1.bf16.xpose.msra.mxu0 0
        %803 = vmatprep.subr.bf16.mxu0 0
        %804 = vmatpush1.bf16.xpose.msra.mxu0 0
        %805 = vmatprep.subr.bf16.mxu0 0
        %806 = vmatpush1.bf16.xpose.msra.mxu0 %v789
        %807 = vmatprep.subr.bf16.mxu0 0
        %808 = vmatpush2.bf16.xpose.msra.mxu0 0
        %809 = vmatprep.subr.bf16.mxu0 0
        %810 = vmatpush2.bf16.xpose.msra.mxu0 0
        %811 = vmatprep.subr.bf16.mxu0 0
        %812 = vmatpush2.bf16.xpose.msra.mxu0 0
        %813 = vmatprep.subr.bf16.mxu0 0
        %814 = vmatpush2.bf16.xpose.msra.mxu0 0
        %815 = vmatprep.subr.bf16.mxu0 0
        %816 = vmatpush2.bf16.xpose.msra.mxu0 0
        %817 = vmatprep.subr.bf16.mxu0 0
        %818 = vmatpush2.bf16.xpose.msra.mxu0 0
        %819 = vmatprep.subr.bf16.mxu0 0
        %820 = vmatpush2.bf16.xpose.msra.mxu0 0
        %821 = vmatprep.subr.bf16.mxu0 0
        %822 = vmatpush2.bf16.xpose.msra.mxu0 0
        %823 = vmatprep.mubr.bf16.mxu0 0
        %824 = vmatmul.mubr.bf16.gmra.mxu0 %v786
        %v825 = vpop.f32.mrf.mxu0
        %v826 = vadd.f32 0.0, %v825
        %v827 = vpop.f32.mrf.mxu0
        %v828 = vpop.f32.mrf.mxu0
        %v829 = vpop.f32.mrf.mxu0
        %830 = vdwg.mxu0
        %v831 = vsel %vm551, %v826, -inf
        %832 = vmax.xlane.f32.xlu0 %v831
        %v833 = vpop.xlane.xlu0 %832
        %v834 = vsub.f32 %v826, %v833
        %v835 = vmul.f32 %v834, 1.442695
        %v836 = vpow.pop %v835
        %v837 = vsel %vm551, %v836, 0.0
        %838 = vadd.xlane.f32.xlu0 %v837
        %v839 = vpop.xlane.xlu0 %838
        %v840 = vrcp.pop %v839
        %v841 = vmul.f32 %v836, %v840
        %s842 = scalar_lea.vmem %s397, 16 [#allocation3]
        %843 = vst.msk [vmem:[%s842] sm:$0xff] %vm551, %v841
        %v844 = vpack.c.bf16 %v841, %v841
        %845 = vrot.lane.b32.xlu0 %v550, 80
        %v846 = vpop.permute.xlu0 %845
        %v848 = vsel %vm551, %v844, 0
        %v851 = vsel %vm617, %v846, 0
        %853 = vmatprep.subr.bf16.mxu0 0
        %854 = vmatpush1.bf16.msra.mxu0 0
        %855 = vmatprep.subr.bf16.mxu0 0
        %856 = vmatpush1.bf16.msra.mxu0 0
        %857 = vmatprep.subr.bf16.mxu0 0
        %858 = vmatpush1.bf16.msra.mxu0 0
        %859 = vmatprep.subr.bf16.mxu0 0
        %860 = vmatpush1.bf16.msra.mxu0 0
        %861 = vmatprep.subr.bf16.mxu0 0
        %862 = vmatpush1.bf16.msra.mxu0 0
        %863 = vmatprep.subr.bf16.mxu0 0
        %864 = vmatpush1.bf16.msra.mxu0 0
        %865 = vmatprep.subr.bf16.mxu0 0
        %866 = vmatpush1.bf16.msra.mxu0 0
        %867 = vmatprep.subr.bf16.mxu0 0
        %868 = vmatpush1.bf16.msra.mxu0 %v851
        %869 = vmatprep.subr.bf16.mxu0 0
        %870 = vmatpush2.bf16.msra.mxu0 0
        %871 = vmatprep.subr.bf16.mxu0 0
        %872 = vmatpush2.bf16.msra.mxu0 0
        %873 = vmatprep.subr.bf16.mxu0 0
        %874 = vmatpush2.bf16.msra.mxu0 0
        %875 = vmatprep.subr.bf16.mxu0 0
        %876 = vmatpush2.bf16.msra.mxu0 0
        %877 = vmatprep.subr.bf16.mxu0 0
        %878 = vmatpush2.bf16.msra.mxu0 0
        %879 = vmatprep.subr.bf16.mxu0 0
        %880 = vmatpush2.bf16.msra.mxu0 0
        %881 = vmatprep.subr.bf16.mxu0 0
        %882 = vmatpush2.bf16.msra.mxu0 0
        %883 = vmatprep.subr.bf16.mxu0 0
        %884 = vmatpush2.bf16.msra.mxu0 0
        %885 = vmatprep.mubr.bf16.mxu0 0
        %886 = vmatmul.mubr.bf16.gmra.mxu0 %v848
        %v887 = vpop.f32.mrf.mxu0
        %v888 = vadd.f32 0.0, %v887
        %v889 = vpop.f32.mrf.mxu0
        %v890 = vpop.f32.mrf.mxu0
        %v891 = vpop.f32.mrf.mxu0
        %892 = vdwg.mxu0
        %894 = vrot.lane.b32.xlu0 %v888, 16
        %v895 = vpop.permute.xlu0 %894
        %vm897 = vcmask 195712
        %898 = vst.msk [vmem:[#allocation2] sm:$0xff] %vm897, %v895
        %899 = vrot.lane.b32.xlu0 %v549, 104
        %v900 = vpop.permute.xlu0 %899
        %901 = vrot.lane.b32.xlu0 %v550, 104
        %v902 = vpop.permute.xlu0 %901
        %v904 = vsel %vm551, %v900, 0
        %v907 = vsel %vm551, %v902, 0
        %909 = vmatprep.subr.bf16.mxu0 0
        %910 = vmatpush1.bf16.xpose.msra.mxu0 0
        %911 = vmatprep.subr.bf16.mxu0 0
        %912 = vmatpush1.bf16.xpose.msra.mxu0 0
        %913 = vmatprep.subr.bf16.mxu0 0
        %914 = vmatpush1.bf16.xpose.msra.mxu0 0
        %915 = vmatprep.subr.bf16.mxu0 0
        %916 = vmatpush1.bf16.xpose.msra.mxu0 0
        %917 = vmatprep.subr.bf16.mxu0 0
        %918 = vmatpush1.bf16.xpose.msra.mxu0 0
        %919 = vmatprep.subr.bf16.mxu0 0
        %920 = vmatpush1.bf16.xpose.msra.mxu0 0
        %921 = vmatprep.subr.bf16.mxu0 0
        %922 = vmatpush1.bf16.xpose.msra.mxu0 0
        %923 = vmatprep.subr.bf16.mxu0 0
        %924 = vmatpush1.bf16.xpose.msra.mxu0 %v907
        %925 = vmatprep.subr.bf16.mxu0 0
        %926 = vmatpush2.bf16.xpose.msra.mxu0 0
        %927 = vmatprep.subr.bf16.mxu0 0
        %928 = vmatpush2.bf16.xpose.msra.mxu0 0
        %929 = vmatprep.subr.bf16.mxu0 0
        %930 = vmatpush2.bf16.xpose.msra.mxu0 0
        %931 = vmatprep.subr.bf16.mxu0 0
        %932 = vmatpush2.bf16.xpose.msra.mxu0 0
        %933 = vmatprep.subr.bf16.mxu0 0
        %934 = vmatpush2.bf16.xpose.msra.mxu0 0
        %935 = vmatprep.subr.bf16.mxu0 0
        %936 = vmatpush2.bf16.xpose.msra.mxu0 0
        %937 = vmatprep.subr.bf16.mxu0 0
        %938 = vmatpush2.bf16.xpose.msra.mxu0 0
        %939 = vmatprep.subr.bf16.mxu0 0
        %940 = vmatpush2.bf16.xpose.msra.mxu0 0
        %941 = vmatprep.mubr.bf16.mxu0 0
        %942 = vmatmul.mubr.bf16.gmra.mxu0 %v904
        %v943 = vpop.f32.mrf.mxu0
        %v944 = vadd.f32 0.0, %v943
        %v945 = vpop.f32.mrf.mxu0
        %v946 = vpop.f32.mrf.mxu0
        %v947 = vpop.f32.mrf.mxu0
        %948 = vdwg.mxu0
        %v949 = vsel %vm551, %v944, -inf
        %950 = vmax.xlane.f32.xlu0 %v949
        %v951 = vpop.xlane.xlu0 %950
        %v952 = vsub.f32 %v944, %v951
        %v953 = vmul.f32 %v952, 1.442695
        %v954 = vpow.pop %v953
        %v955 = vsel %vm551, %v954, 0.0
        %956 = vadd.xlane.f32.xlu0 %v955
        %v957 = vpop.xlane.xlu0 %956
        %v958 = vrcp.pop %v957
        %v959 = vmul.f32 %v954, %v958
        %s960 = scalar_lea.vmem %s397, 24 [#allocation3]
        %961 = vst.msk [vmem:[%s960] sm:$0xff] %vm551, %v959
        %v962 = vpack.c.bf16 %v959, %v959
        %963 = vrot.lane.b32.xlu0 %v550, 72
        %v964 = vpop.permute.xlu0 %963
        %v966 = vsel %vm551, %v962, 0
        %v969 = vsel %vm617, %v964, 0
        %971 = vmatprep.subr.bf16.mxu0 0
        %972 = vmatpush1.bf16.msra.mxu0 0
        %973 = vmatprep.subr.bf16.mxu0 0
        %974 = vmatpush1.bf16.msra.mxu0 0
        %975 = vmatprep.subr.bf16.mxu0 0
        %976 = vmatpush1.bf16.msra.mxu0 0
        %977 = vmatprep.subr.bf16.mxu0 0
        %978 = vmatpush1.bf16.msra.mxu0 0
        %979 = vmatprep.subr.bf16.mxu0 0
        %980 = vmatpush1.bf16.msra.mxu0 0
        %981 = vmatprep.subr.bf16.mxu0 0
        %982 = vmatpush1.bf16.msra.mxu0 0
        %983 = vmatprep.subr.bf16.mxu0 0
        %984 = vmatpush1.bf16.msra.mxu0 0
        %985 = vmatprep.subr.bf16.mxu0 0
        %986 = vmatpush1.bf16.msra.mxu0 %v969
        %987 = vmatprep.subr.bf16.mxu0 0
        %988 = vmatpush2.bf16.msra.mxu0 0
        %989 = vmatprep.subr.bf16.mxu0 0
        %990 = vmatpush2.bf16.msra.mxu0 0
        %991 = vmatprep.subr.bf16.mxu0 0
        %992 = vmatpush2.bf16.msra.mxu0 0
        %993 = vmatprep.subr.bf16.mxu0 0
        %994 = vmatpush2.bf16.msra.mxu0 0
        %995 = vmatprep.subr.bf16.mxu0 0
        %996 = vmatpush2.bf16.msra.mxu0 0
        %997 = vmatprep.subr.bf16.mxu0 0
        %998 = vmatpush2.bf16.msra.mxu0 0
        %999 = vmatprep.subr.bf16.mxu0 0
        %1000 = vmatpush2.bf16.msra.mxu0 0
        %1001 = vmatprep.subr.bf16.mxu0 0
        %1002 = vmatpush2.bf16.msra.mxu0 0
        %1003 = vmatprep.mubr.bf16.mxu0 0
        %1004 = vmatmul.mubr.bf16.gmra.mxu0 %v966
        %v1005 = vpop.f32.mrf.mxu0
        %v1006 = vadd.f32 0.0, %v1005
        %v1007 = vpop.f32.mrf.mxu0
        %v1008 = vpop.f32.mrf.mxu0
        %v1009 = vpop.f32.mrf.mxu0
        %1010 = vdwg.mxu0
        %1012 = vrot.lane.b32.xlu0 %v1006, 24
        %v1013 = vpop.permute.xlu0 %1012
        %vm1015 = vcmask 261312
        %1016 = vst.msk [vmem:[#allocation2] sm:$0xff] %vm1015, %v1013
        %v1017 = vld [vmem:[#allocation2] sm:$0xff]
        %v1018 = vpack.c.bf16 %v1017, %v1017
        %v1019 = vld [vmem:[%s6] sm:$0xf]
        %v1020 = vld [vmem:[%s6 + $0x4] sm:$0xf]
        %v1021 = vld [vmem:[%s6 + $0x8] sm:$0xf]
        %v1022 = vld [vmem:[%s6 + $0xc] sm:$0xf]
        %v1023 = vld [vmem:[%s7] sm:$0x1]
        %v1025 = vlaneseq
        %v1026 = vshrl.u32 %v1025, 7
        %v1027 = vsub.s32 0, %v1026
        %v1028 = vrot.slane %v1023, %v1027
        %v1034 = vunpack.c.l.b16 %v1019
        %v1035 = vunpack.c.l.b16 %v1020
        %v1036 = vunpack.c.l.b16 %v1021
        %v1037 = vunpack.c.l.b16 %v1022
        %v1038 = vpack.c.b16 %v1035, %v1034
        %v1039 = vpack.c.b16 %v1037, %v1036
        %v1043 = vsel %vm437, %v1018, 0
        %1045 = vmatprep.subr.bf16.mxu0 0
        %1046 = vmatpush1.bf16.msra.mxu0 0
        %1047 = vmatprep.subr.bf16.mxu0 0
        %1048 = vmatpush1.bf16.msra.mxu0 0
        %1049 = vmatprep.subr.bf16.mxu0 0
        %1050 = vmatpush1.bf16.msra.mxu0 0
        %1051 = vmatprep.subr.bf16.mxu0 0
        %1052 = vmatpush1.bf16.msra.mxu0 0
        %1053 = vmatprep.subr.bf16.mxu0 0
        %1054 = vmatpush1.bf16.msra.mxu0 0
        %1055 = vmatprep.subr.bf16.mxu0 0
        %1056 = vmatpush1.bf16.msra.mxu0 0
        %1057 = vmatprep.subr.bf16.mxu0 0
        %1058 = vmatpush1.bf16.msra.mxu0 %v1039
        %1059 = vmatprep.subr.bf16.mxu0 0
        %1060 = vmatpush1.bf16.msra.mxu0 %v1038
        %1061 = vmatprep.subr.bf16.mxu0 0
        %1062 = vmatpush2.bf16.msra.mxu0 0
        %1063 = vmatprep.subr.bf16.mxu0 0
        %1064 = vmatpush2.bf16.msra.mxu0 0
        %1065 = vmatprep.subr.bf16.mxu0 0
        %1066 = vmatpush2.bf16.msra.mxu0 0
        %1067 = vmatprep.subr.bf16.mxu0 0
        %1068 = vmatpush2.bf16.msra.mxu0 0
        %1069 = vmatprep.subr.bf16.mxu0 0
        %1070 = vmatpush2.bf16.msra.mxu0 0
        %1071 = vmatprep.subr.bf16.mxu0 0
        %1072 = vmatpush2.bf16.msra.mxu0 0
        %1073 = vmatprep.subr.bf16.mxu0 0
        %1074 = vmatpush2.bf16.msra.mxu0 0
        %1075 = vmatprep.subr.bf16.mxu0 0
        %1076 = vmatpush2.bf16.msra.mxu0 0
        %1077 = vmatprep.mubr.bf16.mxu0 0
        %1078 = vmatmul.mubr.bf16.gmra.mxu0 %v1043
        %v1079 = vpop.f32.mrf.mxu0
        %v1080 = vadd.f32 %v1028, %v1079
        %v1081 = vpop.f32.mrf.mxu0
        %v1082 = vpop.f32.mrf.mxu0
        %v1083 = vpop.f32.mrf.mxu0
        %1084 = vdwg.mxu0
        %v1085 = vadd.f32 %v411, %v1080
        %v1086 = vsel %vm437, %v1085, 0.0
        %1087 = vadd.xlane.f32.xlu0 %v1086
        %v1088 = vpop.xlane.xlu0 %1087
        %v1089 = vrcp.pop 32.0
        %v1090 = vmul.f32 %v1088, %v1089
        %v1091 = vsub.f32 %v1085, %v1090
        %v1092 = vmul.f32 %v1091, %v1091
        %v1093 = vsel %vm437, %v1092, 0.0
        %1094 = vadd.xlane.f32.xlu0 %v1093
        %v1095 = vpop.xlane.xlu0 %1094
        %v1096 = vmul.f32 %v1095, %v1089
        %v1097 = vadd.f32 %v1096, 1e-05
        %v1098 = vrsqrt.pop %v1097
        %v1099 = vmul.f32 %v1091, %v1098
        %v1100 = vld [vmem:[%s8] sm:$0x1]
        %v1102 = vlaneseq
        %v1103 = vshrl.u32 %v1102, 7
        %v1104 = vsub.s32 0, %v1103
        %v1105 = vrot.slane %v1100, %v1104
        %v1107 = vmul.f32 %v1099, %v1105
        %v1108 = vld [vmem:[%s9] sm:$0x1]
        %v1110 = vlaneseq
        %v1111 = vshrl.u32 %v1110, 7
        %v1112 = vsub.s32 0, %v1111
        %v1113 = vrot.slane %v1108, %v1112
        %v1115 = vadd.f32 %v1107, %v1113
        %1116 = vst.msk [vmem:[%s409] sm:$0xff] %vm437, %v1115
        %p1117 = scmp.lt.s32.totalorder %s26, 1
        %s1118 = scalar_select %p1117, %s26, 1
        %s1119 = smul.addr %s1118, 8
        %s1120 = scalar_lea.vmem %s10, %s1119
        %s1121 = sand.u32 %s280, 1
        %s1122 = scalar_lea.sflag [#allocation4], %s1121
        %s1123 = sand.u32 %s280, 1
        %s1124 = smul.addr %s1123, 32
        %s1125 = scalar_lea.vmem [#allocation3], %s1124
        // Predicated region
        $region61: #{fwd.8} parent=59 // pred_check
          %p1126 = pneg %p264
        $region62: #{fwd.8} parent=59 // pred_check_branch
          %1128 = sbr.rel (%p1126) target = $region64
        $region63: #{fwd.8} parent=59 // pred_region
          _
        $region64: #{fwd.8} parent=59 // pred_fallthru
          _
        // Predicated region
        $region65: #{fwd.8} parent=59 // pred_check
          %p1129 = pneg %p290
        $region66: #{fwd.8} parent=59 // pred_check_branch
          %1131 = sbr.rel (%p1129) target = $region68
        $region67: #{fwd.8} parent=59 // pred_region
          %s1133 = ssub.s32 512, 512
          %1134 = vsyncadd %s1122, %s1133
          %s1135 = smul.addr %s26, 4
          %s1136 = smul.addr %s1135, 128
          %s1137 = scalar_lea.hbm %s11, %s1136
          %s1138 = sshll.u32 %s1125, 4
          %s1139 = int_to_ptr.vmem [resolvable:$true] %s1138
          %1144 = dma.vmem_to_hbm [thread:$0]  %s1139, 512, %s1137, %s1122, 128, 128, 8
        $region68: #{fwd.8} parent=59 // pred_fallthru
          _
      $region60: #{fwd.8} parent=5 // pred_fallthru
        _
      %p1145 = scmp.le.s32.totalorder 2, %s21
      // Predicated region
      $region69: #{fwd.8} parent=5 // pred_check
        %p1146 = pneg %p1145
      $region70: #{fwd.8} parent=5 // pred_check_branch
        %1148 = sbr.rel (%p1146) target = $region72
      $region71: #{fwd.8} parent=5 // pred_region
        %s1149 = ssub.s32 %s21, 2
        // Predicated region
        $region73: #{fwd.8} parent=71 // pred_check
          %p1150 = pneg %p270
        $region74: #{fwd.8} parent=71 // pred_check_branch
          %1152 = sbr.rel (%p1150) target = $region76
        $region75: #{fwd.8} parent=71 // pred_region
          %p1153 = scmp.lt.s32.totalorder %s27, 1
          %s1154 = scalar_select %p1153, %s27, 1
          %s1155 = smul.addr %s1154, 8
          %s1156 = scalar_lea.vmem %s10, %s1155
        $region76: #{fwd.8} parent=71 // pred_fallthru
          _
        // Predicated region
        $region77: #{fwd.8} parent=71 // pred_check
          %p1157 = pneg %p296
        $region78: #{fwd.8} parent=71 // pred_check_branch
          %1159 = sbr.rel (%p1157) target = $region80
        $region79: #{fwd.8} parent=71 // pred_region
          %s1160 = sand.u32 %s281, 1
          %s1161 = scalar_lea.sflag [#allocation4], %s1160
          %s1162 = sand.u32 %s281, 1
          %s1163 = smul.addr %s1162, 32
          %s1164 = scalar_lea.vmem [#allocation3], %s1163
          %1165 = dma.done %s1161, 512
        $region80: #{fwd.8} parent=71 // pred_fallthru
          _
      $region72: #{fwd.8} parent=5 // pred_fallthru
        _
    $region6: #{fwd.8} parent=1 // loop_footer
      %s25 = sadd.s32 1, %s21
    $region7: #{fwd.8} parent=1 // loop_footer_branch
      %20 = sbr.rel target = $region3
    $region8: #{fwd.8} parent=1 // loop_exit
      _
    %1166 = vsyncpa [#allocation4], 1
    %s1167 = scalar_lea.sflag [#allocation4], 1
    %1168 = vsyncpa %s1167, 1

// kernel: fwd.7
$region0: #{fwd.7}
  #allocation0 [shape = 'u32[]', space=smem, size = 0x4, offset = 0x4, fixed_abs, tag = 'smem constant byte address 0x4 - core index']
  #allocation1 [shape = 'u32[144,128]{1,0:T(1,128)}', space=vmem, size = 0x12000, scoped, tag = 'internal scratch']
  #allocation2 [shape = 'f32[8,32]{1,0:T(8,128)}', space=vmem, size = 0x1000, scoped, tag = 'scratch operand']
  %s0 = inlined_call_operand.vmem [shape: f32[2,8,32], index: 0, kind: input, shape index: {}, may-alias: {0,1}]
  %s1 = inlined_call_operand.vmem [shape: f32[2,8,32], index: 1, kind: input, shape index: {}, may-alias: {0,1}]
  %s2 = inlined_call_operand.vmem [shape: bf16[32,32], index: 2, kind: input, shape index: {}]
  %s3 = inlined_call_operand.vmem [shape: f32[1,32], index: 3, kind: input, shape index: {}]
  %s4 = inlined_call_operand.vmem [shape: bf16[32,64], index: 4, kind: input, shape index: {}]
  %s5 = inlined_call_operand.vmem [shape: f32[1,64], index: 5, kind: input, shape index: {}]
  %s6 = inlined_call_operand.vmem [shape: bf16[32,32], index: 6, kind: input, shape index: {}]
  %s7 = inlined_call_operand.vmem [shape: f32[1,32], index: 7, kind: input, shape index: {}]
  %s8 = inlined_call_operand.vmem [shape: f32[1,32], index: 8, kind: input, shape index: {}]
  %s9 = inlined_call_operand.vmem [shape: f32[1,32], index: 9, kind: input, shape index: {}]
  %s10 = inlined_call_operand.vmem [shape: f32[2,8,32], index: 10, kind: output, shape index: {0}]
  %s11 = inlined_call_operand.hbm [shape: f32[2,4,8,8], index: 11, kind: output, shape index: {1}]
  %12 = xla_tuple %s10, %s11
  %s13 = sld [smem:[#allocation0]]
  $region81: #{fwd.7} parent=0
    _
  %s15 = ssub.s32 1, %s13
  %s16 = scalar_select 0, %s15, %s13
  $region1: #{fwd.7} parent=0
    #allocation3 [shape = 'u8[32768]{0}', space=vmem, size = 0x8000, scoped, tag = 'output window, operand 1']
    #allocation4 [shape = 's32[2]{0}', space=sflag, size = 0x8, scoped, tag = 'scoped memory for fwd.7']
    %17 = vsyncpa [#allocation4], 0
    %s18 = scalar_lea.sflag [#allocation4], 1
    %19 = vsyncpa %s18, 0
    loop: start=0, step=1, limit=4
    $region2: #{fwd.7} parent=1 // loop_pre_header
      _
    $region3: #{fwd.7} parent=1 // loop_header
      %s21 = sphi 0, %s25
      %p22 = scmp.ge.s32.totalorder %s21, 4
      %s31 = sphi 0, %s33
      %s34 = sphi 0, %s31
      %s35 = sphi 0, %s34
      %s51 = sphi 0, %s35
      %s57 = sphi 0, %s59
      %s60 = sphi 0, %s57
      %s61 = sphi 0, %s60
      %s77 = sphi 0, %s61
      %s81 = sphi 0, %s81
      %s83 = sphi 0, %s81
      %s84 = sphi 0, %s83
      %s98 = sphi 0, %s84
      %s102 = sphi 0, %s102
      %s104 = sphi 0, %s102
      %s105 = sphi 0, %s104
      %s119 = sphi 0, %s105
      %s123 = sphi 0, %s123
      %s125 = sphi 0, %s123
      %s126 = sphi 0, %s125
      %s140 = sphi 0, %s126
      %s144 = sphi 0, %s144
      %s146 = sphi 0, %s144
      %s147 = sphi 0, %s146
      %s161 = sphi 0, %s147
      %s165 = sphi 0, %s165
      %s167 = sphi 0, %s165
      %s168 = sphi 0, %s167
      %s182 = sphi 0, %s168
      %s186 = sphi 0, %s186
      %s188 = sphi 0, %s186
      %s189 = sphi 0, %s188
      %s203 = sphi 0, %s189
      %s207 = sphi 0, %s207
      %s209 = sphi 0, %s207
      %s210 = sphi 0, %s209
      %s224 = sphi 0, %s210
      %s228 = sphi 0, %s228
      %s230 = sphi 0, %s228
      %s231 = sphi 0, %s230
      %s245 = sphi 0, %s231
      %s251 = sphi 0, %s253
      %s254 = sphi 0, %s251
      %s255 = sphi 0, %s254
      %s271 = sphi 0, %s255
      %s277 = sphi 0, %s279
      %s280 = sphi 0, %s277
      %s281 = sphi 0, %s280
      %s297 = sphi 0, %s281
    $region4: #{fwd.7} parent=1 // loop_header_branch
      %24 = sbr.rel (%p22) target = $region8
    $region5: #{fwd.7} parent=1 // loop_body
      %s26 = ssub.s32 %s21, 1
      %s27 = ssub.s32 %s21, 2
      %s28 = sadd.s32 %s21, 1
      %s29 = ssub.s32 %s21, %s28
      %p30 = scmp.eq.s32.totalorder %s29, 0
      %s32 = sadd.s32 %s31, 1
      %s33 = scalar_select %p30, %s31, %s32
      %p36 = pneg %p30
      %p37 = scmp.eq.s32.totalorder %s21, 1
      %p38 = por %p36, %p37
      %p39 = scmp.ne.s32.totalorder %s31, %s34
      %p40 = scmp.eq.s32.totalorder %s21, 0
      %p41 = por %p39, %p40
      %p42 = scmp.ne.s32.totalorder %s31, %s34
      %p43 = scmp.eq.s32.totalorder %s26, 1
      %p44 = por %p42, %p43
      %p45 = scmp.ne.s32.totalorder %s34, %s35
      %p46 = scmp.eq.s32.totalorder %s26, 0
      %p47 = por %p45, %p46
      %p48 = scmp.ne.s32.totalorder %s34, %s35
      %p49 = scmp.eq.s32.totalorder %s27, 1
      %p50 = por %p48, %p49
      %p52 = scmp.ne.s32.totalorder %s35, %s51
      %p53 = scmp.eq.s32.totalorder %s27, 0
      %p54 = por %p52, %p53
      %s55 = ssub.s32 %s21, %s28
      %p56 = scmp.eq.s32.totalorder %s55, 0
      %s58 = sadd.s32 %s57, 1
      %s59 = scalar_select %p56, %s57, %s58
      %p62 = pneg %p56
      %p63 = scmp.eq.s32.totalorder %s21, 1
      %p64 = por %p62, %p63
      %p65 = scmp.ne.s32.totalorder %s57, %s60
      %p66 = scmp.eq.s32.totalorder %s21, 0
      %p67 = por %p65, %p66
      %p68 = scmp.ne.s32.totalorder %s57, %s60
      %p69 = scmp.eq.s32.totalorder %s26, 1
      %p70 = por %p68, %p69
      %p71 = scmp.ne.s32.totalorder %s60, %s61
      %p72 = scmp.eq.s32.totalorder %s26, 0
      %p73 = por %p71, %p72
      %p74 = scmp.ne.s32.totalorder %s60, %s61
      %p75 = scmp.eq.s32.totalorder %s27, 1
      %p76 = por %p74, %p75
      %p78 = scmp.ne.s32.totalorder %s61, %s77
      %p79 = scmp.eq.s32.totalorder %s27, 0
      %p80 = por %p78, %p79
      %s82 = sadd.s32 %s81, 1
      %p85 = scmp.eq.s32.totalorder %s21, 1
      %p86 = scmp.ne.s32.totalorder %s81, %s83
      %p87 = scmp.eq.s32.totalorder %s21, 0
      %p88 = por %p86, %p87
      %p89 = scmp.ne.s32.totalorder %s81, %s83
      %p90 = scmp.eq.s32.totalorder %s26, 1
      %p91 = por %p89, %p90
      %p92 = scmp.ne.s32.totalorder %s83, %s84
      %p93 = scmp.eq.s32.totalorder %s26, 0
      %p94 = por %p92, %p93
      %p95 = scmp.ne.s32.totalorder %s83, %s84
      %p96 = scmp.eq.s32.totalorder %s27, 1
      %p97 = por %p95, %p96
      %p99 = scmp.ne.s32.totalorder %s84, %s98
      %p100 = scmp.eq.s32.totalorder %s27, 0
      %p101 = por %p99, %p100
      %s103 = sadd.s32 %s102, 1
      %p106 = scmp.eq.s32.totalorder %s21, 1
      %p107 = scmp.ne.s32.totalorder %s102, %s104
      %p108 = scmp.eq.s32.totalorder %s21, 0
      %p109 = por %p107, %p108
      %p110 = scmp.ne.s32.totalorder %s102, %s104
      %p111 = scmp.eq.s32.totalorder %s26, 1
      %p112 = por %p110, %p111
      %p113 = scmp.ne.s32.totalorder %s104, %s105
      %p114 = scmp.eq.s32.totalorder %s26, 0
      %p115 = por %p113, %p114
      %p116 = scmp.ne.s32.totalorder %s104, %s105
      %p117 = scmp.eq.s32.totalorder %s27, 1
      %p118 = por %p116, %p117
      %p120 = scmp.ne.s32.totalorder %s105, %s119
      %p121 = scmp.eq.s32.totalorder %s27, 0
      %p122 = por %p120, %p121
      %s124 = sadd.s32 %s123, 1
      %p127 = scmp.eq.s32.totalorder %s21, 1
      %p128 = scmp.ne.s32.totalorder %s123, %s125
      %p129 = scmp.eq.s32.totalorder %s21, 0
      %p130 = por %p128, %p129
      %p131 = scmp.ne.s32.totalorder %s123, %s125
      %p132 = scmp.eq.s32.totalorder %s26, 1
      %p133 = por %p131, %p132
      %p134 = scmp.ne.s32.totalorder %s125, %s126
      %p135 = scmp.eq.s32.totalorder %s26, 0
      %p136 = por %p134, %p135
      %p137 = scmp.ne.s32.totalorder %s125, %s126
      %p138 = scmp.eq.s32.totalorder %s27, 1
      %p139 = por %p137, %p138
      %p141 = scmp.ne.s32.totalorder %s126, %s140
      %p142 = scmp.eq.s32.totalorder %s27, 0
      %p143 = por %p141, %p142
      %s145 = sadd.s32 %s144, 1
      %p148 = scmp.eq.s32.totalorder %s21, 1
      %p149 = scmp.ne.s32.totalorder %s144, %s146
      %p150 = scmp.eq.s32.totalorder %s21, 0
      %p151 = por %p149, %p150
      %p152 = scmp.ne.s32.totalorder %s144, %s146
      %p153 = scmp.eq.s32.totalorder %s26, 1
      %p154 = por %p152, %p153
      %p155 = scmp.ne.s32.totalorder %s146, %s147
      %p156 = scmp.eq.s32.totalorder %s26, 0
      %p157 = por %p155, %p156
      %p158 = scmp.ne.s32.totalorder %s146, %s147
      %p159 = scmp.eq.s32.totalorder %s27, 1
      %p160 = por %p158, %p159
      %p162 = scmp.ne.s32.totalorder %s147, %s161
      %p163 = scmp.eq.s32.totalorder %s27, 0
      %p164 = por %p162, %p163
      %s166 = sadd.s32 %s165, 1
      %p169 = scmp.eq.s32.totalorder %s21, 1
      %p170 = scmp.ne.s32.totalorder %s165, %s167
      %p171 = scmp.eq.s32.totalorder %s21, 0
      %p172 = por %p170, %p171
      %p173 = scmp.ne.s32.totalorder %s165, %s167
      %p174 = scmp.eq.s32.totalorder %s26, 1
      %p175 = por %p173, %p174
      %p176 = scmp.ne.s32.totalorder %s167, %s168
      %p177 = scmp.eq.s32.totalorder %s26, 0
      %p178 = por %p176, %p177
      %p179 = scmp.ne.s32.totalorder %s167, %s168
      %p180 = scmp.eq.s32.totalorder %s27, 1
      %p181 = por %p179, %p180
      %p183 = scmp.ne.s32.totalorder %s168, %s182
      %p184 = scmp.eq.s32.totalorder %s27, 0
      %p185 = por %p183, %p184
      %s187 = sadd.s32 %s186, 1
      %p190 = scmp.eq.s32.totalorder %s21, 1
      %p191 = scmp.ne.s32.totalorder %s186, %s188
      %p192 = scmp.eq.s32.totalorder %s21, 0
      %p193 = por %p191, %p192
      %p194 = scmp.ne.s32.totalorder %s186, %s188
      %p195 = scmp.eq.s32.totalorder %s26, 1
      %p196 = por %p194, %p195
      %p197 = scmp.ne.s32.totalorder %s188, %s189
      %p198 = scmp.eq.s32.totalorder %s26, 0
      %p199 = por %p197, %p198
      %p200 = scmp.ne.s32.totalorder %s188, %s189
      %p201 = scmp.eq.s32.totalorder %s27, 1
      %p202 = por %p200, %p201
      %p204 = scmp.ne.s32.totalorder %s189, %s203
      %p205 = scmp.eq.s32.totalorder %s27, 0
      %p206 = por %p204, %p205
      %s208 = sadd.s32 %s207, 1
      %p211 = scmp.eq.s32.totalorder %s21, 1
      %p212 = scmp.ne.s32.totalorder %s207, %s209
      %p213 = scmp.eq.s32.totalorder %s21, 0
      %p214 = por %p212, %p213
      %p215 = scmp.ne.s32.totalorder %s207, %s209
      %p216 = scmp.eq.s32.totalorder %s26, 1
      %p217 = por %p215, %p216
      %p218 = scmp.ne.s32.totalorder %s209, %s210
      %p219 = scmp.eq.s32.totalorder %s26, 0
      %p220 = por %p218, %p219
      %p221 = scmp.ne.s32.totalorder %s209, %s210
      %p222 = scmp.eq.s32.totalorder %s27, 1
      %p223 = por %p221, %p222
      %p225 = scmp.ne.s32.totalorder %s210, %s224
      %p226 = scmp.eq.s32.totalorder %s27, 0
      %p227 = por %p225, %p226
      %s229 = sadd.s32 %s228, 1
      %p232 = scmp.eq.s32.totalorder %s21, 1
      %p233 = scmp.ne.s32.totalorder %s228, %s230
      %p234 = scmp.eq.s32.totalorder %s21, 0
      %p235 = por %p233, %p234
      %p236 = scmp.ne.s32.totalorder %s228, %s230
      %p237 = scmp.eq.s32.totalorder %s26, 1
      %p238 = por %p236, %p237
      %p239 = scmp.ne.s32.totalorder %s230, %s231
      %p240 = scmp.eq.s32.totalorder %s26, 0
      %p241 = por %p239, %p240
      %p242 = scmp.ne.s32.totalorder %s230, %s231
      %p243 = scmp.eq.s32.totalorder %s27, 1
      %p244 = por %p242, %p243
      %p246 = scmp.ne.s32.totalorder %s231, %s245
      %p247 = scmp.eq.s32.totalorder %s27, 0
      %p248 = por %p246, %p247
      %s249 = ssub.s32 %s21, %s28
      %p250 = scmp.eq.s32.totalorder %s249, 0
      %s252 = sadd.s32 %s251, 1
      %s253 = scalar_select %p250, %s251, %s252
      %p256 = pneg %p250
      %p257 = scmp.eq.s32.totalorder %s21, 1
      %p258 = por %p256, %p257
      %p259 = scmp.ne.s32.totalorder %s251, %s254
      %p260 = scmp.eq.s32.totalorder %s21, 0
      %p261 = por %p259, %p260
      %p262 = scmp.ne.s32.totalorder %s251, %s254
      %p263 = scmp.eq.s32.totalorder %s26, 1
      %p264 = por %p262, %p263
      %p265 = scmp.ne.s32.totalorder %s254, %s255
      %p266 = scmp.eq.s32.totalorder %s26, 0
      %p267 = por %p265, %p266
      %p268 = scmp.ne.s32.totalorder %s254, %s255
      %p269 = scmp.eq.s32.totalorder %s27, 1
      %p270 = por %p268, %p269
      %p272 = scmp.ne.s32.totalorder %s255, %s271
      %p273 = scmp.eq.s32.totalorder %s27, 0
      %p274 = por %p272, %p273
      %s275 = ssub.s32 %s21, %s28
      %p276 = scmp.eq.s32.totalorder %s275, 0
      %s278 = sadd.s32 %s277, 1
      %s279 = scalar_select %p276, %s277, %s278
      %p282 = pneg %p276
      %p283 = scmp.eq.s32.totalorder %s21, 1
      %p284 = por %p282, %p283
      %p285 = scmp.ne.s32.totalorder %s277, %s280
      %p286 = scmp.eq.s32.totalorder %s21, 0
      %p287 = por %p285, %p286
      %p288 = scmp.ne.s32.totalorder %s277, %s280
      %p289 = scmp.eq.s32.totalorder %s26, 1
      %p290 = por %p288, %p289
      %p291 = scmp.ne.s32.totalorder %s280, %s281
      %p292 = scmp.eq.s32.totalorder %s26, 0
      %p293 = por %p291, %p292
      %p294 = scmp.ne.s32.totalorder %s280, %s281
      %p295 = scmp.eq.s32.totalorder %s27, 1
      %p296 = por %p294, %p295
      %p298 = scmp.ne.s32.totalorder %s281, %s297
      %p299 = scmp.eq.s32.totalorder %s27, 0
      %p300 = por %p298, %p299
      %p301 = scmp.le.s32.totalorder 1, %s21
      %p302 = scmp.lt.s32.totalorder %s21, 3
      %p303 = pnand %p301, %p302
      %p304 = pneg %p303
      // Predicated region
      $region9: #{fwd.7} parent=5 // pred_check
        _
      $region10: #{fwd.7} parent=5 // pred_check_branch
        %306 = sbr.rel (%p303) target = $region12
      $region11: #{fwd.7} parent=5 // pred_region
        %s307 = ssub.s32 %s21, 1
        // Predicated region
        $region13: #{fwd.7} parent=11 // pred_check
          %p308 = pneg %p94
        $region14: #{fwd.7} parent=11 // pred_check_branch
          %310 = sbr.rel (%p308) target = $region16
        $region15: #{fwd.7} parent=11 // pred_region
          _
        $region16: #{fwd.7} parent=11 // pred_fallthru
          _
        // Predicated region
        $region17: #{fwd.7} parent=11 // pred_check
          %p311 = pneg %p115
        $region18: #{fwd.7} parent=11 // pred_check_branch
          %313 = sbr.rel (%p311) target = $region20
        $region19: #{fwd.7} parent=11 // pred_region
          _
        $region20: #{fwd.7} parent=11 // pred_fallthru
          _
        // Predicated region
        $region21: #{fwd.7} parent=11 // pred_check
          %p314 = pneg %p136
        $region22: #{fwd.7} parent=11 // pred_check_branch
          %316 = sbr.rel (%p314) target = $region24
        $region23: #{fwd.7} parent=11 // pred_region
          _
        $region24: #{fwd.7} parent=11 // pred_fallthru
          _
        // Predicated region
        $region25: #{fwd.7} parent=11 // pred_check
          %p317 = pneg %p157
        $region26: #{fwd.7} parent=11 // pred_check_branch
          %319 = sbr.rel (%p317) target = $region28
        $region27: #{fwd.7} parent=11 // pred_region
          _
        $region28: #{fwd.7} parent=11 // pred_fallthru
          _
        // Predicated region
        $region29: #{fwd.7} parent=11 // pred_check
          %p320 = pneg %p178
        $region30: #{fwd.7} parent=11 // pred_check_branch
          %322 = sbr.rel (%p320) target = $region32
        $region31: #{fwd.7} parent=11 // pred_region
          _
        $region32: #{fwd.7} parent=11 // pred_fallthru
          _
        // Predicated region
        $region33: #{fwd.7} parent=11 // pred_check
          %p323 = pneg %p199
        $region34: #{fwd.7} parent=11 // pred_check_branch
          %325 = sbr.rel (%p323) target = $region36
        $region35: #{fwd.7} parent=11 // pred_region
          _
        $region36: #{fwd.7} parent=11 // pred_fallthru
          _
        // Predicated region
        $region37: #{fwd.7} parent=11 // pred_check
          %p326 = pneg %p220
        $region38: #{fwd.7} parent=11 // pred_check_branch
          %328 = sbr.rel (%p326) target = $region40
        $region39: #{fwd.7} parent=11 // pred_region
          _
        $region40: #{fwd.7} parent=11 // pred_fallthru
          _
        // Predicated region
        $region41: #{fwd.7} parent=11 // pred_check
          %p329 = pneg %p241
        $region42: #{fwd.7} parent=11 // pred_check_branch
          %331 = sbr.rel (%p329) target = $region44
        $region43: #{fwd.7} parent=11 // pred_region
          _
        $region44: #{fwd.7} parent=11 // pred_fallthru
          _
      $region12: #{fwd.7} parent=5 // pred_fallthru
        _
      %p332 = scmp.lt.s32.totalorder %s21, 2
      // Predicated region
      $region45: #{fwd.7} parent=5 // pred_check
        %p333 = pneg %p332
      $region46: #{fwd.7} parent=5 // pred_check_branch
        %335 = sbr.rel (%p333) target = $region48
      $region47: #{fwd.7} parent=5 // pred_region
        // Predicated region
        $region49: #{fwd.7} parent=47 // pred_check
          %p336 = pneg %p41
        $region50: #{fwd.7} parent=47 // pred_check_branch
          %338 = sbr.rel (%p336) target = $region52
        $region51: #{fwd.7} parent=47 // pred_region
          %p339 = scmp.lt.s32.totalorder %s21, 1
          %s340 = scalar_select %p339, %s21, 1
          %s341 = smul.addr %s340, 8
          %s342 = scalar_lea.vmem %s0, %s341
        $region52: #{fwd.7} parent=47 // pred_fallthru
          _
        // Predicated region
        $region53: #{fwd.7} parent=47 // pred_check
          %p343 = pneg %p67
        $region54: #{fwd.7} parent=47 // pred_check_branch
          %345 = sbr.rel (%p343) target = $region56
        $region55: #{fwd.7} parent=47 // pred_region
          %p346 = scmp.lt.s32.totalorder %s21, 1
          %s347 = scalar_select %p346, %s21, 1
          %s348 = smul.addr %s347, 8
          %s349 = scalar_lea.vmem %s1, %s348
        $region56: #{fwd.7} parent=47 // pred_fallthru
          _
      $region48: #{fwd.7} parent=5 // pred_fallthru
        _
      %p350 = scmp.le.s32.totalorder 1, %s21
      %p351 = scmp.lt.s32.totalorder %s21, 3
      %p352 = pnand %p350, %p351
      %p353 = pneg %p352
      // Predicated region
      $region57: #{fwd.7} parent=5 // pred_check
        _
      $region58: #{fwd.7} parent=5 // pred_check_branch
        %355 = sbr.rel (%p352) target = $region60
      $region59: #{fwd.7} parent=5 // pred_region
        %s356 = ssub.s32 %s21, 1
        %p357 = scmp.lt.s32.totalorder %s26, 1
        %s358 = scalar_select %p357, %s26, 1
        %s359 = smul.addr %s358, 8
        %s360 = scalar_lea.vmem %s0, %s359
        %p361 = pneg %p47
        %p362 = pneg %p44
        %p363 = scmp.lt.s32.totalorder %s26, 1
        %s364 = scalar_select %p363, %s26, 1
        %s365 = smul.addr %s364, 8
        %s366 = scalar_lea.vmem %s1, %s365
        %p367 = pneg %p73
        %p368 = pneg %p70
        %p369 = pneg %p94
        %p370 = pneg %p91
        %p371 = pneg %p115
        %p372 = pneg %p112
        %p373 = pneg %p136
        %p374 = pneg %p133
        %p375 = pneg %p157
        %p376 = pneg %p154
        %p377 = pneg %p178
        %p378 = pneg %p175
        %p379 = pneg %p199
        %p380 = pneg %p196
        %p381 = pneg %p220
        %p382 = pneg %p217
        %p383 = pneg %p241
        %p384 = pneg %p238
        %p385 = pneg %p267
        %p386 = pneg %p264
        %p387 = scmp.lt.s32.totalorder %s26, 1
        %s388 = scalar_select %p387, %s26, 1
        %s389 = smul.addr %s388, 8
        %s390 = scalar_lea.vmem %s10, %s389
        %p391 = pneg %p293
        %p392 = pneg %p290
        %s393 = sand.u32 %s280, 1
        %s394 = scalar_lea.sflag [#allocation4], %s393
        %s395 = sand.u32 %s280, 1
        %s396 = smul.addr %s395, 32
        %s397 = scalar_lea.vmem [#allocation3], %s396
        %p398 = scmp.lt.s32.totalorder %s26, 1
        %s399 = scalar_select %p398, %s26, 1
        %s400 = smul.addr %s399, 8
        %s401 = scalar_lea.vmem %s0, %s400
        %p402 = scmp.lt.s32.totalorder %s26, 1
        %s403 = scalar_select %p402, %s26, 1
        %s404 = smul.addr %s403, 8
        %s405 = scalar_lea.vmem %s1, %s404
        %p406 = scmp.lt.s32.totalorder %s26, 1
        %s407 = scalar_select %p406, %s26, 1
        %s408 = smul.addr %s407, 8
        %s409 = scalar_lea.vmem %s10, %s408
        %v411 = vld [vmem:[%s401] sm:$0xff]
        %v412 = vld [vmem:[%s405] sm:$0xff]
        %v413 = vpack.c.bf16 %v411, %v411
        %v414 = vld [vmem:[%s2] sm:$0xf]
        %v415 = vld [vmem:[%s2 + $0x4] sm:$0xf]
        %v416 = vld [vmem:[%s2 + $0x8] sm:$0xf]
        %v417 = vld [vmem:[%s2 + $0xc] sm:$0xf]
        %v418 = vld [vmem:[%s3] sm:$0x1]
        %v420 = vlaneseq
        %v421 = vshrl.u32 %v420, 7
        %v422 = vsub.s32 0, %v421
        %v423 = vrot.slane %v418, %v422
        %v429 = vunpack.c.l.b16 %v414
        %v430 = vunpack.c.l.b16 %v415
        %v431 = vunpack.c.l.b16 %v416
        %v432 = vunpack.c.l.b16 %v417
        %v433 = vpack.c.b16 %v430, %v429
        %v434 = vpack.c.b16 %v432, %v431
        %vm437 = vcmask 261120
        %v439 = vsel %vm437, %v413, 0
        %441 = vmatprep.subr.bf16.mxu0 0
        %442 = vmatpush1.bf16.msra.mxu0 0
        %443 = vmatprep.subr.bf16.mxu0 0
        %444 = vmatpush1.bf16.msra.mxu0 0
        %445 = vmatprep.subr.bf16.mxu0 0
        %446 = vmatpush1.bf16.msra.mxu0 0
        %447 = vmatprep.subr.bf16.mxu0 0
        %448 = vmatpush1.bf16.msra.mxu0 0
        %449 = vmatprep.subr.bf16.mxu0 0
        %450 = vmatpush1.bf16.msra.mxu0 0
        %451 = vmatprep.subr.bf16.mxu0 0
        %452 = vmatpush1.bf16.msra.mxu0 0
        %453 = vmatprep.subr.bf16.mxu0 0
        %454 = vmatpush1.bf16.msra.mxu0 %v434
        %455 = vmatprep.subr.bf16.mxu0 0
        %456 = vmatpush1.bf16.msra.mxu0 %v433
        %457 = vmatprep.subr.bf16.mxu0 0
        %458 = vmatpush2.bf16.msra.mxu0 0
        %459 = vmatprep.subr.bf16.mxu0 0
        %460 = vmatpush2.bf16.msra.mxu0 0
        %461 = vmatprep.subr.bf16.mxu0 0
        %462 = vmatpush2.bf16.msra.mxu0 0
        %463 = vmatprep.subr.bf16.mxu0 0
        %464 = vmatpush2.bf16.msra.mxu0 0
        %465 = vmatprep.subr.bf16.mxu0 0
        %466 = vmatpush2.bf16.msra.mxu0 0
        %467 = vmatprep.subr.bf16.mxu0 0
        %468 = vmatpush2.bf16.msra.mxu0 0
        %469 = vmatprep.subr.bf16.mxu0 0
        %470 = vmatpush2.bf16.msra.mxu0 0
        %471 = vmatprep.subr.bf16.mxu0 0
        %472 = vmatpush2.bf16.msra.mxu0 0
        %473 = vmatprep.mubr.bf16.mxu0 0
        %474 = vmatmul.mubr.bf16.gmra.mxu0 %v439
        %v475 = vpop.f32.mrf.mxu0
        %v476 = vadd.f32 %v423, %v475
        %v477 = vpop.f32.mrf.mxu0
        %v478 = vpop.f32.mrf.mxu0
        %v479 = vpop.f32.mrf.mxu0
        %480 = vdwg.mxu0
        %v481 = vmul.f32 %v476, 0.35355338
        %v482 = vpack.c.bf16 %v412, %v412
        %v483 = vld [vmem:[%s4] sm:$0xf]
        %v484 = vld [vmem:[%s4 + $0x4] sm:$0xf]
        %v485 = vld [vmem:[%s4 + $0x8] sm:$0xf]
        %v486 = vld [vmem:[%s4 + $0xc] sm:$0xf]
        %v487 = vld [vmem:[%s5] sm:$0x1]
        %v489 = vlaneseq
        %v490 = vshrl.u32 %v489, 7
        %v491 = vsub.s32 0, %v490
        %v492 = vrot.slane %v487, %v491
        %v498 = vunpack.c.l.b16 %v483
        %v499 = vunpack.c.l.b16 %v484
        %v500 = vunpack.c.l.b16 %v485
        %v501 = vunpack.c.l.b16 %v486
        %v502 = vpack.c.b16 %v499, %v498
        %v503 = vpack.c.b16 %v501, %v500
        %v507 = vsel %vm437, %v482, 0
        %509 = vmatprep.subr.bf16.mxu0 0
        %510 = vmatpush1.bf16.msra.mxu0 0
        %511 = vmatprep.subr.bf16.mxu0 0
        %512 = vmatpush1.bf16.msra.mxu0 0
        %513 = vmatprep.subr.bf16.mxu0 0
        %514 = vmatpush1.bf16.msra.mxu0 0
        %515 = vmatprep.subr.bf16.mxu0 0
        %516 = vmatpush1.bf16.msra.mxu0 0
        %517 = vmatprep.subr.bf16.mxu0 0
        %518 = vmatpush1.bf16.msra.mxu0 0
        %519 = vmatprep.subr.bf16.mxu0 0
        %520 = vmatpush1.bf16.msra.mxu0 0
        %521 = vmatprep.subr.bf16.mxu0 0
        %522 = vmatpush1.bf16.msra.mxu0 %v503
        %523 = vmatprep.subr.bf16.mxu0 0
        %524 = vmatpush1.bf16.msra.mxu0 %v502
        %525 = vmatprep.subr.bf16.mxu0 0
        %526 = vmatpush2.bf16.msra.mxu0 0
        %527 = vmatprep.subr.bf16.mxu0 0
        %528 = vmatpush2.bf16.msra.mxu0 0
        %529 = vmatprep.subr.bf16.mxu0 0
        %530 = vmatpush2.bf16.msra.mxu0 0
        %531 = vmatprep.subr.bf16.mxu0 0
        %532 = vmatpush2.bf16.msra.mxu0 0
        %533 = vmatprep.subr.bf16.mxu0 0
        %534 = vmatpush2.bf16.msra.mxu0 0
        %535 = vmatprep.subr.bf16.mxu0 0
        %536 = vmatpush2.bf16.msra.mxu0 0
        %537 = vmatprep.subr.bf16.mxu0 0
        %538 = vmatpush2.bf16.msra.mxu0 0
        %539 = vmatprep.subr.bf16.mxu0 0
        %540 = vmatpush2.bf16.msra.mxu0 0
        %541 = vmatprep.mubr.bf16.mxu0 0
        %542 = vmatmul.mubr.bf16.gmra.mxu0 %v507
        %v543 = vpop.f32.mrf.mxu0
        %v544 = vadd.f32 %v492, %v543
        %v545 = vpop.f32.mrf.mxu0
        %v546 = vpop.f32.mrf.mxu0
        %v547 = vpop.f32.mrf.mxu0
        %548 = vdwg.mxu0
        %v549 = vlaneseq
        %v550 = vshrl.u32 %v549, 7
        %v551 = vlaneseq
        %v552 = vand.u32 %v551, 127
        %vm553 = vcmp.ge.s32.totalorder %v550, %v552
        %v554 = vpack.c.bf16 %v481, %v481
        %v555 = vpack.c.bf16 %v544, %v544
        %vm556 = vcmask 64512
        %v558 = vsel %vm556, %v554, 0
        %v561 = vsel %vm556, %v555, 0
        %563 = vmatprep.subr.bf16.mxu0 0
        %564 = vmatpush1.bf16.xpose.msra.mxu0 0
        %565 = vmatprep.subr.bf16.mxu0 0
        %566 = vmatpush1.bf16.xpose.msra.mxu0 0
        %567 = vmatprep.subr.bf16.mxu0 0
        %568 = vmatpush1.bf16.xpose.msra.mxu0 0
        %569 = vmatprep.subr.bf16.mxu0 0
        %570 = vmatpush1.bf16.xpose.msra.mxu0 0
        %571 = vmatprep.subr.bf16.mxu0 0
        %572 = vmatpush1.bf16.xpose.msra.mxu0 0
        %573 = vmatprep.subr.bf16.mxu0 0
        %574 = vmatpush1.bf16.xpose.msra.mxu0 0
        %575 = vmatprep.subr.bf16.mxu0 0
        %576 = vmatpush1.bf16.xpose.msra.mxu0 0
        %577 = vmatprep.subr.bf16.mxu0 0
        %578 = vmatpush1.bf16.xpose.msra.mxu0 %v561
        %579 = vmatprep.subr.bf16.mxu0 0
        %580 = vmatpush2.bf16.xpose.msra.mxu0 0
        %581 = vmatprep.subr.bf16.mxu0 0
        %582 = vmatpush2.bf16.xpose.msra.mxu0 0
        %583 = vmatprep.subr.bf16.mxu0 0
        %584 = vmatpush2.bf16.xpose.msra.mxu0 0
        %585 = vmatprep.subr.bf16.mxu0 0
        %586 = vmatpush2.bf16.xpose.msra.mxu0 0
        %587 = vmatprep.subr.bf16.mxu0 0
        %588 = vmatpush2.bf16.xpose.msra.mxu0 0
        %589 = vmatprep.subr.bf16.mxu0 0
        %590 = vmatpush2.bf16.xpose.msra.mxu0 0
        %591 = vmatprep.subr.bf16.mxu0 0
        %592 = vmatpush2.bf16.xpose.msra.mxu0 0
        %593 = vmatprep.subr.bf16.mxu0 0
        %594 = vmatpush2.bf16.xpose.msra.mxu0 0
        %595 = vmatprep.mubr.bf16.mxu0 0
        %596 = vmatmul.mubr.bf16.gmra.mxu0 %v558
        %v597 = vpop.f32.mrf.mxu0
        %v598 = vadd.f32 0.0, %v597
        %v599 = vpop.f32.mrf.mxu0
        %v600 = vpop.f32.mrf.mxu0
        %v601 = vpop.f32.mrf.mxu0
        %602 = vdwg.mxu0
        %v603 = vsel %vm553, %v598, -1e+09
        %v604 = vsel %vm556, %v603, -inf
        %605 = vmax.xlane.f32.xlu0 %v604
        %v606 = vpop.xlane.xlu0 %605
        %v607 = vsub.f32 %v603, %v606
        %v608 = vmul.f32 %v607, 1.442695
        %v609 = vpow.pop %v608
        %v610 = vsel %vm556, %v609, 0.0
        %611 = vadd.xlane.f32.xlu0 %v610
        %v612 = vpop.xlane.xlu0 %611
        %v613 = vrcp.pop %v612
        %v614 = vmul.f32 %v609, %v613
        %615 = vst.msk [vmem:[%s397] sm:$0xff] %vm556, %v614
        %v616 = vpack.c.bf16 %v614, %v614
        %618 = vrot.lane.b32.xlu0 %v555, 96
        %v619 = vpop.permute.xlu0 %618
        %v621 = vsel %vm556, %v616, 0
        %vm623 = vcmask 1043456
        %v625 = vsel %vm623, %v619, 0
        %627 = vmatprep.subr.bf16.mxu0 0
        %628 = vmatpush1.bf16.msra.mxu0 0
        %629 = vmatprep.subr.bf16.mxu0 0
        %630 = vmatpush1.bf16.msra.mxu0 0
        %631 = vmatprep.subr.bf16.mxu0 0
        %632 = vmatpush1.bf16.msra.mxu0 0
        %633 = vmatprep.subr.bf16.mxu0 0
        %634 = vmatpush1.bf16.msra.mxu0 0
        %635 = vmatprep.subr.bf16.mxu0 0
        %636 = vmatpush1.bf16.msra.mxu0 0
        %637 = vmatprep.subr.bf16.mxu0 0
        %638 = vmatpush1.bf16.msra.mxu0 0
        %639 = vmatprep.subr.bf16.mxu0 0
        %640 = vmatpush1.bf16.msra.mxu0 0
        %641 = vmatprep.subr.bf16.mxu0 0
        %642 = vmatpush1.bf16.msra.mxu0 %v625
        %643 = vmatprep.subr.bf16.mxu0 0
        %644 = vmatpush2.bf16.msra.mxu0 0
        %645 = vmatprep.subr.bf16.mxu0 0
        %646 = vmatpush2.bf16.msra.mxu0 0
        %647 = vmatprep.subr.bf16.mxu0 0
        %648 = vmatpush2.bf16.msra.mxu0 0
        %649 = vmatprep.subr.bf16.mxu0 0
        %650 = vmatpush2.bf16.msra.mxu0 0
        %651 = vmatprep.subr.bf16.mxu0 0
        %652 = vmatpush2.bf16.msra.mxu0 0
        %653 = vmatprep.subr.bf16.mxu0 0
        %654 = vmatpush2.bf16.msra.mxu0 0
        %655 = vmatprep.subr.bf16.mxu0 0
        %656 = vmatpush2.bf16.msra.mxu0 0
        %657 = vmatprep.subr.bf16.mxu0 0
        %658 = vmatpush2.bf16.msra.mxu0 0
        %659 = vmatprep.mubr.bf16.mxu0 0
        %660 = vmatmul.mubr.bf16.gmra.mxu0 %v621
        %v661 = vpop.f32.mrf.mxu0
        %v662 = vadd.f32 0.0, %v661
        %v663 = vpop.f32.mrf.mxu0
        %v664 = vpop.f32.mrf.mxu0
        %v665 = vpop.f32.mrf.mxu0
        %666 = vdwg.mxu0
        %667 = vst.msk [vmem:[#allocation2] sm:$0xff] %vm556, %v662
        %669 = vrot.lane.b32.xlu0 %v554, 120
        %v670 = vpop.permute.xlu0 %669
        %671 = vrot.lane.b32.xlu0 %v555, 120
        %v672 = vpop.permute.xlu0 %671
        %v674 = vsel %vm556, %v670, 0
        %v677 = vsel %vm556, %v672, 0
        %679 = vmatprep.subr.bf16.mxu0 0
        %680 = vmatpush1.bf16.xpose.msra.mxu0 0
        %681 = vmatprep.subr.bf16.mxu0 0
        %682 = vmatpush1.bf16.xpose.msra.mxu0 0
        %683 = vmatprep.subr.bf16.mxu0 0
        %684 = vmatpush1.bf16.xpose.msra.mxu0 0
        %685 = vmatprep.subr.bf16.mxu0 0
        %686 = vmatpush1.bf16.xpose.msra.mxu0 0
        %687 = vmatprep.subr.bf16.mxu0 0
        %688 = vmatpush1.bf16.xpose.msra.mxu0 0
        %689 = vmatprep.subr.bf16.mxu0 0
        %690 = vmatpush1.bf16.xpose.msra.mxu0 0
        %691 = vmatprep.subr.bf16.mxu0 0
        %692 = vmatpush1.bf16.xpose.msra.mxu0 0
        %693 = vmatprep.subr.bf16.mxu0 0
        %694 = vmatpush1.bf16.xpose.msra.mxu0 %v677
        %695 = vmatprep.subr.bf16.mxu0 0
        %696 = vmatpush2.bf16.xpose.msra.mxu0 0
        %697 = vmatprep.subr.bf16.mxu0 0
        %698 = vmatpush2.bf16.xpose.msra.mxu0 0
        %699 = vmatprep.subr.bf16.mxu0 0
        %700 = vmatpush2.bf16.xpose.msra.mxu0 0
        %701 = vmatprep.subr.bf16.mxu0 0
        %702 = vmatpush2.bf16.xpose.msra.mxu0 0
        %703 = vmatprep.subr.bf16.mxu0 0
        %704 = vmatpush2.bf16.xpose.msra.mxu0 0
        %705 = vmatprep.subr.bf16.mxu0 0
        %706 = vmatpush2.bf16.xpose.msra.mxu0 0
        %707 = vmatprep.subr.bf16.mxu0 0
        %708 = vmatpush2.bf16.xpose.msra.mxu0 0
        %709 = vmatprep.subr.bf16.mxu0 0
        %710 = vmatpush2.bf16.xpose.msra.mxu0 0
        %711 = vmatprep.mubr.bf16.mxu0 0
        %712 = vmatmul.mubr.bf16.gmra.mxu0 %v674
        %v713 = vpop.f32.mrf.mxu0
        %v714 = vadd.f32 0.0, %v713
        %v715 = vpop.f32.mrf.mxu0
        %v716 = vpop.f32.mrf.mxu0
        %v717 = vpop.f32.mrf.mxu0
        %718 = vdwg.mxu0
        %v719 = vsel %vm553, %v714, -1e+09
        %v720 = vsel %vm556, %v719, -inf
        %721 = vmax.xlane.f32.xlu0 %v720
        %v722 = vpop.xlane.xlu0 %721
        %v723 = vsub.f32 %v719, %v722
        %v724 = vmul.f32 %v723, 1.442695
        %v725 = vpow.pop %v724
        %v726 = vsel %vm556, %v725, 0.0
        %727 = vadd.xlane.f32.xlu0 %v726
        %v728 = vpop.xlane.xlu0 %727
        %v729 = vrcp.pop %v728
        %v730 = vmul.f32 %v725, %v729
        %s731 = scalar_lea.vmem %s397, 8 [#allocation3]
        %732 = vst.msk [vmem:[%s731] sm:$0xff] %vm556, %v730
        %v733 = vpack.c.bf16 %v730, %v730
        %734 = vrot.lane.b32.xlu0 %v555, 88
        %v735 = vpop.permute.xlu0 %734
        %v737 = vsel %vm556, %v733, 0
        %v740 = vsel %vm623, %v735, 0
        %742 = vmatprep.subr.bf16.mxu0 0
        %743 = vmatpush1.bf16.msra.mxu0 0
        %744 = vmatprep.subr.bf16.mxu0 0
        %745 = vmatpush1.bf16.msra.mxu0 0
        %746 = vmatprep.subr.bf16.mxu0 0
        %747 = vmatpush1.bf16.msra.mxu0 0
        %748 = vmatprep.subr.bf16.mxu0 0
        %749 = vmatpush1.bf16.msra.mxu0 0
        %750 = vmatprep.subr.bf16.mxu0 0
        %751 = vmatpush1.bf16.msra.mxu0 0
        %752 = vmatprep.subr.bf16.mxu0 0
        %753 = vmatpush1.bf16.msra.mxu0 0
        %754 = vmatprep.subr.bf16.mxu0 0
        %755 = vmatpush1.bf16.msra.mxu0 0
        %756 = vmatprep.subr.bf16.mxu0 0
        %757 = vmatpush1.bf16.msra.mxu0 %v740
        %758 = vmatprep.subr.bf16.mxu0 0
        %759 = vmatpush2.bf16.msra.mxu0 0
        %760 = vmatprep.subr.bf16.mxu0 0
        %761 = vmatpush2.bf16.msra.mxu0 0
        %762 = vmatprep.subr.bf16.mxu0 0
        %763 = vmatpush2.bf16.msra.mxu0 0
        %764 = vmatprep.subr.bf16.mxu0 0
        %765 = vmatpush2.bf16.msra.mxu0 0
        %766 = vmatprep.subr.bf16.mxu0 0
        %767 = vmatpush2.bf16.msra.mxu0 0
        %768 = vmatprep.subr.bf16.mxu0 0
        %769 = vmatpush2.bf16.msra.mxu0 0
        %770 = vmatprep.subr.bf16.mxu0 0
        %771 = vmatpush2.bf16.msra.mxu0 0
        %772 = vmatprep.subr.bf16.mxu0 0
        %773 = vmatpush2.bf16.msra.mxu0 0
        %774 = vmatprep.mubr.bf16.mxu0 0
        %775 = vmatmul.mubr.bf16.gmra.mxu0 %v737
        %v776 = vpop.f32.mrf.mxu0
        %v777 = vadd.f32 0.0, %v776
        %v778 = vpop.f32.mrf.mxu0
        %v779 = vpop.f32.mrf.mxu0
        %v780 = vpop.f32.mrf.mxu0
        %781 = vdwg.mxu0
        %783 = vrot.lane.b32.xlu0 %v777, 8
        %v784 = vpop.permute.xlu0 %783
        %vm786 = vcmask 130112
        %787 = vst.msk [vmem:[#allocation2] sm:$0xff] %vm786, %v784
        %788 = vrot.lane.b32.xlu0 %v554, 112
        %v789 = vpop.permute.xlu0 %788
        %790 = vrot.lane.b32.xlu0 %v555, 112
        %v791 = vpop.permute.xlu0 %790
        %v793 = vsel %vm556, %v789, 0
        %v796 = vsel %vm556, %v791, 0
        %798 = vmatprep.subr.bf16.mxu0 0
        %799 = vmatpush1.bf16.xpose.msra.mxu0 0
        %800 = vmatprep.subr.bf16.mxu0 0
        %801 = vmatpush1.bf16.xpose.msra.mxu0 0
        %802 = vmatprep.subr.bf16.mxu0 0
        %803 = vmatpush1.bf16.xpose.msra.mxu0 0
        %804 = vmatprep.subr.bf16.mxu0 0
        %805 = vmatpush1.bf16.xpose.msra.mxu0 0
        %806 = vmatprep.subr.bf16.mxu0 0
        %807 = vmatpush1.bf16.xpose.msra.mxu0 0
        %808 = vmatprep.subr.bf16.mxu0 0
        %809 = vmatpush1.bf16.xpose.msra.mxu0 0
        %810 = vmatprep.subr.bf16.mxu0 0
        %811 = vmatpush1.bf16.xpose.msra.mxu0 0
        %812 = vmatprep.subr.bf16.mxu0 0
        %813 = vmatpush1.bf16.xpose.msra.mxu0 %v796
        %814 = vmatprep.subr.bf16.mxu0 0
        %815 = vmatpush2.bf16.xpose.msra.mxu0 0
        %816 = vmatprep.subr.bf16.mxu0 0
        %817 = vmatpush2.bf16.xpose.msra.mxu0 0
        %818 = vmatprep.subr.bf16.mxu0 0
        %819 = vmatpush2.bf16.xpose.msra.mxu0 0
        %820 = vmatprep.subr.bf16.mxu0 0
        %821 = vmatpush2.bf16.xpose.msra.mxu0 0
        %822 = vmatprep.subr.bf16.mxu0 0
        %823 = vmatpush2.bf16.xpose.msra.mxu0 0
        %824 = vmatprep.subr.bf16.mxu0 0
        %825 = vmatpush2.bf16.xpose.msra.mxu0 0
        %826 = vmatprep.subr.bf16.mxu0 0
        %827 = vmatpush2.bf16.xpose.msra.mxu0 0
        %828 = vmatprep.subr.bf16.mxu0 0
        %829 = vmatpush2.bf16.xpose.msra.mxu0 0
        %830 = vmatprep.mubr.bf16.mxu0 0
        %831 = vmatmul.mubr.bf16.gmra.mxu0 %v793
        %v832 = vpop.f32.mrf.mxu0
        %v833 = vadd.f32 0.0, %v832
        %v834 = vpop.f32.mrf.mxu0
        %v835 = vpop.f32.mrf.mxu0
        %v836 = vpop.f32.mrf.mxu0
        %837 = vdwg.mxu0
        %v838 = vsel %vm553, %v833, -1e+09
        %v839 = vsel %vm556, %v838, -inf
        %840 = vmax.xlane.f32.xlu0 %v839
        %v841 = vpop.xlane.xlu0 %840
        %v842 = vsub.f32 %v838, %v841
        %v843 = vmul.f32 %v842, 1.442695
        %v844 = vpow.pop %v843
        %v845 = vsel %vm556, %v844, 0.0
        %846 = vadd.xlane.f32.xlu0 %v845
        %v847 = vpop.xlane.xlu0 %846
        %v848 = vrcp.pop %v847
        %v849 = vmul.f32 %v844, %v848
        %s850 = scalar_lea.vmem %s397, 16 [#allocation3]
        %851 = vst.msk [vmem:[%s850] sm:$0xff] %vm556, %v849
        %v852 = vpack.c.bf16 %v849, %v849
        %853 = vrot.lane.b32.xlu0 %v555, 80
        %v854 = vpop.permute.xlu0 %853
        %v856 = vsel %vm556, %v852, 0
        %v859 = vsel %vm623, %v854, 0
        %861 = vmatprep.subr.bf16.mxu0 0
        %862 = vmatpush1.bf16.msra.mxu0 0
        %863 = vmatprep.subr.bf16.mxu0 0
        %864 = vmatpush1.bf16.msra.mxu0 0
        %865 = vmatprep.subr.bf16.mxu0 0
        %866 = vmatpush1.bf16.msra.mxu0 0
        %867 = vmatprep.subr.bf16.mxu0 0
        %868 = vmatpush1.bf16.msra.mxu0 0
        %869 = vmatprep.subr.bf16.mxu0 0
        %870 = vmatpush1.bf16.msra.mxu0 0
        %871 = vmatprep.subr.bf16.mxu0 0
        %872 = vmatpush1.bf16.msra.mxu0 0
        %873 = vmatprep.subr.bf16.mxu0 0
        %874 = vmatpush1.bf16.msra.mxu0 0
        %875 = vmatprep.subr.bf16.mxu0 0
        %876 = vmatpush1.bf16.msra.mxu0 %v859
        %877 = vmatprep.subr.bf16.mxu0 0
        %878 = vmatpush2.bf16.msra.mxu0 0
        %879 = vmatprep.subr.bf16.mxu0 0
        %880 = vmatpush2.bf16.msra.mxu0 0
        %881 = vmatprep.subr.bf16.mxu0 0
        %882 = vmatpush2.bf16.msra.mxu0 0
        %883 = vmatprep.subr.bf16.mxu0 0
        %884 = vmatpush2.bf16.msra.mxu0 0
        %885 = vmatprep.subr.bf16.mxu0 0
        %886 = vmatpush2.bf16.msra.mxu0 0
        %887 = vmatprep.subr.bf16.mxu0 0
        %888 = vmatpush2.bf16.msra.mxu0 0
        %889 = vmatprep.subr.bf16.mxu0 0
        %890 = vmatpush2.bf16.msra.mxu0 0
        %891 = vmatprep.subr.bf16.mxu0 0
        %892 = vmatpush2.bf16.msra.mxu0 0
        %893 = vmatprep.mubr.bf16.mxu0 0
        %894 = vmatmul.mubr.bf16.gmra.mxu0 %v856
        %v895 = vpop.f32.mrf.mxu0
        %v896 = vadd.f32 0.0, %v895
        %v897 = vpop.f32.mrf.mxu0
        %v898 = vpop.f32.mrf.mxu0
        %v899 = vpop.f32.mrf.mxu0
        %900 = vdwg.mxu0
        %902 = vrot.lane.b32.xlu0 %v896, 16
        %v903 = vpop.permute.xlu0 %902
        %vm905 = vcmask 195712
        %906 = vst.msk [vmem:[#allocation2] sm:$0xff] %vm905, %v903
        %907 = vrot.lane.b32.xlu0 %v554, 104
        %v908 = vpop.permute.xlu0 %907
        %909 = vrot.lane.b32.xlu0 %v555, 104
        %v910 = vpop.permute.xlu0 %909
        %v912 = vsel %vm556, %v908, 0
        %v915 = vsel %vm556, %v910, 0
        %917 = vmatprep.subr.bf16.mxu0 0
        %918 = vmatpush1.bf16.xpose.msra.mxu0 0
        %919 = vmatprep.subr.bf16.mxu0 0
        %920 = vmatpush1.bf16.xpose.msra.mxu0 0
        %921 = vmatprep.subr.bf16.mxu0 0
        %922 = vmatpush1.bf16.xpose.msra.mxu0 0
        %923 = vmatprep.subr.bf16.mxu0 0
        %924 = vmatpush1.bf16.xpose.msra.mxu0 0
        %925 = vmatprep.subr.bf16.mxu0 0
        %926 = vmatpush1.bf16.xpose.msra.mxu0 0
        %927 = vmatprep.subr.bf16.mxu0 0
        %928 = vmatpush1.bf16.xpose.msra.mxu0 0
        %929 = vmatprep.subr.bf16.mxu0 0
        %930 = vmatpush1.bf16.xpose.msra.mxu0 0
        %931 = vmatprep.subr.bf16.mxu0 0
        %932 = vmatpush1.bf16.xpose.msra.mxu0 %v915
        %933 = vmatprep.subr.bf16.mxu0 0
        %934 = vmatpush2.bf16.xpose.msra.mxu0 0
        %935 = vmatprep.subr.bf16.mxu0 0
        %936 = vmatpush2.bf16.xpose.msra.mxu0 0
        %937 = vmatprep.subr.bf16.mxu0 0
        %938 = vmatpush2.bf16.xpose.msra.mxu0 0
        %939 = vmatprep.subr.bf16.mxu0 0
        %940 = vmatpush2.bf16.xpose.msra.mxu0 0
        %941 = vmatprep.subr.bf16.mxu0 0
        %942 = vmatpush2.bf16.xpose.msra.mxu0 0
        %943 = vmatprep.subr.bf16.mxu0 0
        %944 = vmatpush2.bf16.xpose.msra.mxu0 0
        %945 = vmatprep.subr.bf16.mxu0 0
        %946 = vmatpush2.bf16.xpose.msra.mxu0 0
        %947 = vmatprep.subr.bf16.mxu0 0
        %948 = vmatpush2.bf16.xpose.msra.mxu0 0
        %949 = vmatprep.mubr.bf16.mxu0 0
        %950 = vmatmul.mubr.bf16.gmra.mxu0 %v912
        %v951 = vpop.f32.mrf.mxu0
        %v952 = vadd.f32 0.0, %v951
        %v953 = vpop.f32.mrf.mxu0
        %v954 = vpop.f32.mrf.mxu0
        %v955 = vpop.f32.mrf.mxu0
        %956 = vdwg.mxu0
        %v957 = vsel %vm553, %v952, -1e+09
        %v958 = vsel %vm556, %v957, -inf
        %959 = vmax.xlane.f32.xlu0 %v958
        %v960 = vpop.xlane.xlu0 %959
        %v961 = vsub.f32 %v957, %v960
        %v962 = vmul.f32 %v961, 1.442695
        %v963 = vpow.pop %v962
        %v964 = vsel %vm556, %v963, 0.0
        %965 = vadd.xlane.f32.xlu0 %v964
        %v966 = vpop.xlane.xlu0 %965
        %v967 = vrcp.pop %v966
        %v968 = vmul.f32 %v963, %v967
        %s969 = scalar_lea.vmem %s397, 24 [#allocation3]
        %970 = vst.msk [vmem:[%s969] sm:$0xff] %vm556, %v968
        %v971 = vpack.c.bf16 %v968, %v968
        %972 = vrot.lane.b32.xlu0 %v555, 72
        %v973 = vpop.permute.xlu0 %972
        %v975 = vsel %vm556, %v971, 0
        %v978 = vsel %vm623, %v973, 0
        %980 = vmatprep.subr.bf16.mxu0 0
        %981 = vmatpush1.bf16.msra.mxu0 0
        %982 = vmatprep.subr.bf16.mxu0 0
        %983 = vmatpush1.bf16.msra.mxu0 0
        %984 = vmatprep.subr.bf16.mxu0 0
        %985 = vmatpush1.bf16.msra.mxu0 0
        %986 = vmatprep.subr.bf16.mxu0 0
        %987 = vmatpush1.bf16.msra.mxu0 0
        %988 = vmatprep.subr.bf16.mxu0 0
        %989 = vmatpush1.bf16.msra.mxu0 0
        %990 = vmatprep.subr.bf16.mxu0 0
        %991 = vmatpush1.bf16.msra.mxu0 0
        %992 = vmatprep.subr.bf16.mxu0 0
        %993 = vmatpush1.bf16.msra.mxu0 0
        %994 = vmatprep.subr.bf16.mxu0 0
        %995 = vmatpush1.bf16.msra.mxu0 %v978
        %996 = vmatprep.subr.bf16.mxu0 0
        %997 = vmatpush2.bf16.msra.mxu0 0
        %998 = vmatprep.subr.bf16.mxu0 0
        %999 = vmatpush2.bf16.msra.mxu0 0
        %1000 = vmatprep.subr.bf16.mxu0 0
        %1001 = vmatpush2.bf16.msra.mxu0 0
        %1002 = vmatprep.subr.bf16.mxu0 0
        %1003 = vmatpush2.bf16.msra.mxu0 0
        %1004 = vmatprep.subr.bf16.mxu0 0
        %1005 = vmatpush2.bf16.msra.mxu0 0
        %1006 = vmatprep.subr.bf16.mxu0 0
        %1007 = vmatpush2.bf16.msra.mxu0 0
        %1008 = vmatprep.subr.bf16.mxu0 0
        %1009 = vmatpush2.bf16.msra.mxu0 0
        %1010 = vmatprep.subr.bf16.mxu0 0
        %1011 = vmatpush2.bf16.msra.mxu0 0
        %1012 = vmatprep.mubr.bf16.mxu0 0
        %1013 = vmatmul.mubr.bf16.gmra.mxu0 %v975
        %v1014 = vpop.f32.mrf.mxu0
        %v1015 = vadd.f32 0.0, %v1014
        %v1016 = vpop.f32.mrf.mxu0
        %v1017 = vpop.f32.mrf.mxu0
        %v1018 = vpop.f32.mrf.mxu0
        %1019 = vdwg.mxu0
        %1021 = vrot.lane.b32.xlu0 %v1015, 24
        %v1022 = vpop.permute.xlu0 %1021
        %vm1024 = vcmask 261312
        %1025 = vst.msk [vmem:[#allocation2] sm:$0xff] %vm1024, %v1022
        %v1026 = vld [vmem:[#allocation2] sm:$0xff]
        %v1027 = vpack.c.bf16 %v1026, %v1026
        %v1028 = vld [vmem:[%s6] sm:$0xf]
        %v1029 = vld [vmem:[%s6 + $0x4] sm:$0xf]
        %v1030 = vld [vmem:[%s6 + $0x8] sm:$0xf]
        %v1031 = vld [vmem:[%s6 + $0xc] sm:$0xf]
        %v1032 = vld [vmem:[%s7] sm:$0x1]
        %v1034 = vlaneseq
        %v1035 = vshrl.u32 %v1034, 7
        %v1036 = vsub.s32 0, %v1035
        %v1037 = vrot.slane %v1032, %v1036
        %v1043 = vunpack.c.l.b16 %v1028
        %v1044 = vunpack.c.l.b16 %v1029
        %v1045 = vunpack.c.l.b16 %v1030
        %v1046 = vunpack.c.l.b16 %v1031
        %v1047 = vpack.c.b16 %v1044, %v1043
        %v1048 = vpack.c.b16 %v1046, %v1045
        %v1052 = vsel %vm437, %v1027, 0
        %1054 = vmatprep.subr.bf16.mxu0 0
        %1055 = vmatpush1.bf16.msra.mxu0 0
        %1056 = vmatprep.subr.bf16.mxu0 0
        %1057 = vmatpush1.bf16.msra.mxu0 0
        %1058 = vmatprep.subr.bf16.mxu0 0
        %1059 = vmatpush1.bf16.msra.mxu0 0
        %1060 = vmatprep.subr.bf16.mxu0 0
        %1061 = vmatpush1.bf16.msra.mxu0 0
        %1062 = vmatprep.subr.bf16.mxu0 0
        %1063 = vmatpush1.bf16.msra.mxu0 0
        %1064 = vmatprep.subr.bf16.mxu0 0
        %1065 = vmatpush1.bf16.msra.mxu0 0
        %1066 = vmatprep.subr.bf16.mxu0 0
        %1067 = vmatpush1.bf16.msra.mxu0 %v1048
        %1068 = vmatprep.subr.bf16.mxu0 0
        %1069 = vmatpush1.bf16.msra.mxu0 %v1047
        %1070 = vmatprep.subr.bf16.mxu0 0
        %1071 = vmatpush2.bf16.msra.mxu0 0
        %1072 = vmatprep.subr.bf16.mxu0 0
        %1073 = vmatpush2.bf16.msra.mxu0 0
        %1074 = vmatprep.subr.bf16.mxu0 0
        %1075 = vmatpush2.bf16.msra.mxu0 0
        %1076 = vmatprep.subr.bf16.mxu0 0
        %1077 = vmatpush2.bf16.msra.mxu0 0
        %1078 = vmatprep.subr.bf16.mxu0 0
        %1079 = vmatpush2.bf16.msra.mxu0 0
        %1080 = vmatprep.subr.bf16.mxu0 0
        %1081 = vmatpush2.bf16.msra.mxu0 0
        %1082 = vmatprep.subr.bf16.mxu0 0
        %1083 = vmatpush2.bf16.msra.mxu0 0
        %1084 = vmatprep.subr.bf16.mxu0 0
        %1085 = vmatpush2.bf16.msra.mxu0 0
        %1086 = vmatprep.mubr.bf16.mxu0 0
        %1087 = vmatmul.mubr.bf16.gmra.mxu0 %v1052
        %v1088 = vpop.f32.mrf.mxu0
        %v1089 = vadd.f32 %v1037, %v1088
        %v1090 = vpop.f32.mrf.mxu0
        %v1091 = vpop.f32.mrf.mxu0
        %v1092 = vpop.f32.mrf.mxu0
        %1093 = vdwg.mxu0
        %v1094 = vadd.f32 %v411, %v1089
        %v1095 = vsel %vm437, %v1094, 0.0
        %1096 = vadd.xlane.f32.xlu0 %v1095
        %v1097 = vpop.xlane.xlu0 %1096
        %v1098 = vrcp.pop 32.0
        %v1099 = vmul.f32 %v1097, %v1098
        %v1100 = vsub.f32 %v1094, %v1099
        %v1101 = vmul.f32 %v1100, %v1100
        %v1102 = vsel %vm437, %v1101, 0.0
        %1103 = vadd.xlane.f32.xlu0 %v1102
        %v1104 = vpop.xlane.xlu0 %1103
        %v1105 = vmul.f32 %v1104, %v1098
        %v1106 = vadd.f32 %v1105, 1e-05
        %v1107 = vrsqrt.pop %v1106
        %v1108 = vmul.f32 %v1100, %v1107
        %v1109 = vld [vmem:[%s8] sm:$0x1]
        %v1111 = vlaneseq
        %v1112 = vshrl.u32 %v1111, 7
        %v1113 = vsub.s32 0, %v1112
        %v1114 = vrot.slane %v1109, %v1113
        %v1116 = vmul.f32 %v1108, %v1114
        %v1117 = vld [vmem:[%s9] sm:$0x1]
        %v1119 = vlaneseq
        %v1120 = vshrl.u32 %v1119, 7
        %v1121 = vsub.s32 0, %v1120
        %v1122 = vrot.slane %v1117, %v1121
        %v1124 = vadd.f32 %v1116, %v1122
        %1125 = vst.msk [vmem:[%s409] sm:$0xff] %vm437, %v1124
        %p1126 = scmp.lt.s32.totalorder %s26, 1
        %s1127 = scalar_select %p1126, %s26, 1
        %s1128 = smul.addr %s1127, 8
        %s1129 = scalar_lea.vmem %s10, %s1128
        %s1130 = sand.u32 %s280, 1
        %s1131 = scalar_lea.sflag [#allocation4], %s1130
        %s1132 = sand.u32 %s280, 1
        %s1133 = smul.addr %s1132, 32
        %s1134 = scalar_lea.vmem [#allocation3], %s1133
        // Predicated region
        $region61: #{fwd.7} parent=59 // pred_check
          %p1135 = pneg %p264
        $region62: #{fwd.7} parent=59 // pred_check_branch
          %1137 = sbr.rel (%p1135) target = $region64
        $region63: #{fwd.7} parent=59 // pred_region
          _
        $region64: #{fwd.7} parent=59 // pred_fallthru
          _
        // Predicated region
        $region65: #{fwd.7} parent=59 // pred_check
          %p1138 = pneg %p290
        $region66: #{fwd.7} parent=59 // pred_check_branch
          %1140 = sbr.rel (%p1138) target = $region68
        $region67: #{fwd.7} parent=59 // pred_region
          %s1142 = ssub.s32 512, 512
          %1143 = vsyncadd %s1131, %s1142
          %s1144 = smul.addr %s26, 4
          %s1145 = smul.addr %s1144, 128
          %s1146 = scalar_lea.hbm %s11, %s1145
          %s1147 = sshll.u32 %s1134, 4
          %s1148 = int_to_ptr.vmem [resolvable:$true] %s1147
          %1153 = dma.vmem_to_hbm [thread:$0]  %s1148, 512, %s1146, %s1131, 128, 128, 8
        $region68: #{fwd.7} parent=59 // pred_fallthru
          _
      $region60: #{fwd.7} parent=5 // pred_fallthru
        _
      %p1154 = scmp.le.s32.totalorder 2, %s21
      // Predicated region
      $region69: #{fwd.7} parent=5 // pred_check
        %p1155 = pneg %p1154
      $region70: #{fwd.7} parent=5 // pred_check_branch
        %1157 = sbr.rel (%p1155) target = $region72
      $region71: #{fwd.7} parent=5 // pred_region
        %s1158 = ssub.s32 %s21, 2
        // Predicated region
        $region73: #{fwd.7} parent=71 // pred_check
          %p1159 = pneg %p270
        $region74: #{fwd.7} parent=71 // pred_check_branch
          %1161 = sbr.rel (%p1159) target = $region76
        $region75: #{fwd.7} parent=71 // pred_region
          %p1162 = scmp.lt.s32.totalorder %s27, 1
          %s1163 = scalar_select %p1162, %s27, 1
          %s1164 = smul.addr %s1163, 8
          %s1165 = scalar_lea.vmem %s10, %s1164
        $region76: #{fwd.7} parent=71 // pred_fallthru
          _
        // Predicated region
        $region77: #{fwd.7} parent=71 // pred_check
          %p1166 = pneg %p296
        $region78: #{fwd.7} parent=71 // pred_check_branch
          %1168 = sbr.rel (%p1166) target = $region80
        $region79: #{fwd.7} parent=71 // pred_region
          %s1169 = sand.u32 %s281, 1
          %s1170 = scalar_lea.sflag [#allocation4], %s1169
          %s1171 = sand.u32 %s281, 1
          %s1172 = smul.addr %s1171, 32
          %s1173 = scalar_lea.vmem [#allocation3], %s1172
          %1174 = dma.done %s1170, 512
        $region80: #{fwd.7} parent=71 // pred_fallthru
          _
      $region72: #{fwd.7} parent=5 // pred_fallthru
        _
    $region6: #{fwd.7} parent=1 // loop_footer
      %s25 = sadd.s32 1, %s21
    $region7: #{fwd.7} parent=1 // loop_footer_branch
      %20 = sbr.rel target = $region3
    $region8: #{fwd.7} parent=1 // loop_exit
      _
    %1175 = vsyncpa [#allocation4], 1
    %s1176 = scalar_lea.sflag [#allocation4], 1
    %1177 = vsyncpa %s1176, 1

</llo_original>
